<compile_context>
chip_gen: v6e
topology: v6e:2x2x1
jax: 0.10.0
libtpu: 0.0.40
codegen_flags: <defaults>
</compile_context>

<pallas_src>
import functools

import jax
import jax.numpy as jnp
from jax.experimental import pallas as pl
from jax.experimental.pallas import tpu as pltpu

_LANES = 128
_K = 9


def _snc_kernel(x_ref, w_ref, b_ref, o_ref, *, af):
    # x_ref: VMEM (tile_r, 1152) f32   lane-dense input tile
    # w_ref: VMEM (1152, 128)  f32     block-diagonal weight (grid-invariant)
    # b_ref: SMEM (1,) f32             bias scalar
    # o_ref: VMEM (tile_r, 128)        lane-dense output tile
    acc = jnp.dot(
        x_ref[...],
        w_ref[...],
        preferred_element_type=jnp.float32,
        precision=jax.lax.Precision.HIGHEST,   # full-f32 MXU passes
    )
    acc = acc + b_ref[0]
    if af == "sigmoid":
        # exp goes to the EUP; exact reciprocal keeps f32-level accuracy.
        acc = pl.reciprocal(1.0 + jnp.exp(-acc), approx=False)
    elif af == "relu":
        acc = jnp.maximum(acc, 0.0)
    o_ref[...] = acc.astype(o_ref.dtype)


@functools.partial(jax.jit, static_argnames=("af", "max_tile_rows"))
def snc_forward(x, weight, bias, af="sigmoid", max_tile_rows=1024):
    """x: (B, 9); weight: (1, 9) (PyTorch Linear layout); bias: (1,)."""
    B, K = x.shape
    assert K == _K
    out_dtype = x.dtype
    x = x.astype(jnp.float32)

    # Pad the batch to a multiple of 128 only when needed (128-multiple
    # batches take the zero-copy path); tiny batches pad to 1024 rows so the
    # reshaped row-block count is always >= 8 (dense sublanes, standard MXU M).
    b_pad = max(8 * _LANES, ((B + _LANES - 1) // _LANES) * _LANES)
    if b_pad != B:
        x = jnp.pad(x, ((0, b_pad - B), (0, 0)))
    r = b_pad // _LANES                      # row-blocks of 128 samples, >= 8
    x_flat = x.reshape(r, _LANES * _K)       # free: row-major bitcast

    # Block-diagonal weight W_bd[9*j + k, j] = w[k]  (576 KiB, VMEM-resident).
    w = weight.reshape(_K).astype(jnp.float32)
    row = jnp.arange(_LANES * _K)
    col = jnp.arange(_LANES)
    w_bd = jnp.where(row[:, None] // _K == col[None, :],
                     w[row % _K][:, None], jnp.float32(0.0))
    b_sc = bias.reshape(1).astype(jnp.float32)

    # Tile the row-block axis: >= ~8 grid steps for large batches (keeps both
    # v7x TCs fed), each tile >= 128 rows (~590 KiB) so DMA covers the ~0.35us
    # per-step overhead, and <= max_tile_rows (~4.5 MiB) for VMEM.
    tile_r = max(128, pl.cdiv(r, 8))
    tile_r = min(tile_r, max_tile_rows, r)
    tile_r = max(8, (tile_r // 8) * 8)       # multiple of 8 sublanes
    num_tiles = pl.cdiv(r, tile_r)           # ragged tail: OOB writes dropped

    kernel = functools.partial(_snc_kernel, af=af)
    out = pl.pallas_call(
        kernel,
        out_shape=jax.ShapeDtypeStruct((r, _LANES), jnp.float32),
        grid=(num_tiles,),
        in_specs=[
            pl.BlockSpec((tile_r, _LANES * _K), lambda i: (i, 0)),   # x tile
            pl.BlockSpec((_LANES * _K, _LANES), lambda i: (0, 0)),   # W_bd
            pl.BlockSpec(memory_space=pltpu.MemorySpace.SMEM),       # bias
        ],
        out_specs=pl.BlockSpec((tile_r, _LANES), lambda i: (i, 0)),  # lane-dense
        compiler_params=pltpu.CompilerParams(
            dimension_semantics=("parallel",),                       # megacore/v7x
        ),
    )(x_flat, w_bd, b_sc)

    # Free reshape back to sample order; drop pad rows.
    return out.reshape(b_pad, 1)[:B].astype(out_dtype)


def _ref_forward(x, weight, bias, af):
    y = jnp.dot(x, weight.T, precision=jax.lax.Precision.HIGHEST) + bias
    if af == "sigmoid":
        y = jax.nn.sigmoid(y)
    elif af == "relu":
        y = jnp.maximum(y, 0.0)
    return y


if __name__ == "__main__":
    key = jax.random.PRNGKey(0)
    k_x, k_w, k_b = jax.random.split(key, 3)

    # PyTorch Linear default init: uniform(-1/sqrt(in_features), +...).
    bound = 1.0 / jnp.sqrt(9.0)
    weight = jax.random.uniform(k_w, (1, 9), jnp.float32, -bound, bound)
    bias = jax.random.uniform(k_b, (1,), jnp.float32, -bound, bound)

    # batch=8: tiny / pad path; 300: ragged, single tile; 2176 with
    # max_tile_rows=8: multi-tile grid with a partial last block.
    for batch, tile_rows in ((8, 1024), (300, 1024), (2176, 8)):
        x = jax.random.normal(jax.random.fold_in(k_x, batch),
                              (batch, 9), jnp.float32)
        for af in ("sigmoid", "relu"):
            out = jax.block_until_ready(
                snc_forward(x, weight, bias, af=af, max_tile_rows=tile_rows))
            ref = _ref_forward(x, weight, bias, af)
            assert out.shape == (batch, 1)
            assert jnp.allclose(out, ref, atol=2e-5, rtol=2e-5), (batch, af)

    print("KERNEL_OK")
</pallas_src>

<mosaic_0001>
module attributes {stable_mosaic.version = 11 : i64} {
  func.func @_snc_kernel(%arg0: i32, %arg1: memref<8x1152xf32, #tpu.memory_space<vmem>>, %arg2: memref<1152x128xf32, #tpu.memory_space<vmem>>, %arg3: memref<1xf32, #tpu.memory_space<smem>>, %arg4: memref<8x128xf32, #tpu.memory_space<vmem>>) attributes {dimension_semantics = [#tpu.dimension_semantics<parallel>], iteration_bounds = array<i64: 1>, scalar_prefetch = 0 : i64, scratch_operands = 0 : i64, tpu.core_type = #tpu.core_type<tc>, window_params = [{transform_indices = @transform_0, window_bounds = array<i64: 8, 1152>}, {pipeline_mode = #tpu.pipeline_mode<synchronous>, transform_indices = @transform_1, window_bounds = array<i64: 1152, 128>}, {transform_indices = @transform_2, window_bounds = array<i64: 1>}, {transform_indices = @transform_3, window_bounds = array<i64: 8, 128>}]} {
    %c0 = arith.constant 0 : index
    %c0_0 = arith.constant 0 : index
    %0 = vector.load %arg1[%c0, %c0_0] : memref<8x1152xf32, #tpu.memory_space<vmem>>, vector<8x1152xf32>
    %c0_1 = arith.constant 0 : index
    %c0_2 = arith.constant 0 : index
    %1 = vector.load %arg2[%c0_1, %c0_2] : memref<1152x128xf32, #tpu.memory_space<vmem>>, vector<1152x128xf32>
    %cst = arith.constant dense<0.000000e+00> : vector<8x128xf32>
    %2 = tpu.matmul %0, %1, %cst {dimension_numbers = #tpu.dot_dimension_numbers<[1], [0], [0], [1], [0, 0, 1, 1], [], []>, precision = #tpu.contract_precision<fp32>} : vector<8x1152xf32>, vector<1152x128xf32>, vector<8x128xf32> -> vector<8x128xf32>
    %c0_3 = arith.constant 0 : index
    %3 = memref.load %arg3[%c0_3] : memref<1xf32, #tpu.memory_space<smem>>
    %4 = vector.broadcast %3 : f32 to vector<8x128xf32>
    %5 = arith.addf %2, %4 : vector<8x128xf32>
    %cst_4 = arith.constant 0.000000e+00 : f32
    %6 = vector.broadcast %cst_4 : f32 to vector<8x128xf32>
    %7 = arith.subf %6, %5 : vector<8x128xf32>
    %8 = math.exp %7 : vector<8x128xf32>
    %cst_5 = arith.constant 1.000000e+00 : f32
    %9 = vector.broadcast %cst_5 : f32 to vector<8x128xf32>
    %10 = arith.addf %9, %8 : vector<8x128xf32>
    %11 = tpu.reciprocal %10 : vector<8x128xf32> -> vector<8x128xf32>
    %c0_6 = arith.constant 0 : index
    %c0_7 = arith.constant 0 : index
    %12 = vector.load %arg4[%c0_6, %c0_7] : memref<8x128xf32, #tpu.memory_space<vmem>>, vector<8x128xf32>
    tpu.vector_store %arg4[%c0_6, %c0_7], %11 {strides = array<i32>} : memref<8x128xf32, #tpu.memory_space<vmem>>, vector<8x128xf32>,
    return
  }
  func.func @transform_0(%arg0: i32) -> (i32, i32) {
    %c0_i32 = arith.constant 0 : i32
    %c0_i32_0 = arith.constant 0 : i32
    return %arg0, %c0_i32 : i32, i32
  }
  func.func @transform_1(%arg0: i32) -> (i32, i32) {
    %c0_i32 = arith.constant 0 : i32
    %c0_i32_0 = arith.constant 0 : i32
    %c0_i32_1 = arith.constant 0 : i32
    return %c0_i32, %c0_i32_0 : i32, i32
  }
  func.func @transform_2(%arg0: i32) -> i32 {
    %c0_i32 = arith.constant 0 : i32
    %c0_i32_0 = arith.constant 0 : i32
    return %c0_i32 : i32
  }
  func.func @transform_3(%arg0: i32) -> (i32, i32) {
    %c0_i32 = arith.constant 0 : i32
    %c0_i32_0 = arith.constant 0 : i32
    return %arg0, %c0_i32 : i32, i32
  }
}

</mosaic_0001>

<llo_original>
// kernel: snc_forward.1
$region0: #{snc_forward.1}
  #allocation0 [shape = 'u32[]', space=smem, size = 0x4, offset = 0x4, fixed_abs, tag = 'smem constant byte address 0x4 - core index']
  #allocation1 [shape = 'u32[144,128]{1,0:T(1,128)}', space=vmem, size = 0x12000, scoped, tag = 'internal scratch']
  #allocation2 [shape = 'f32[1]{0:T(128)S(6)}', space=smem, size = 0x200, scoped, tag = 'scoped memory for snc_forward.1']
  %s0 = inlined_call_operand.vmem [shape: f32[8,1152], index: 0, kind: input, shape index: {}]
  %s1 = inlined_call_operand.vmem [shape: f32[1152,128], index: 1, kind: input, shape index: {}]
  %s2 = inlined_call_operand.<no memory space> [shape: f32[1], index: 2, kind: input, shape index: {}]
  %s3 = inlined_call_operand.vmem [shape: f32[8,128], index: 3, kind: output, shape index: {}]
  %s4 = sld [smem:[#allocation0]]
  $region22: #{snc_forward.1} parent=0
    _
  %s6 = ssub.s32 1, %s4
  %s7 = scalar_select 0, %s6, %s4
  %8 = sst [smem:[#allocation2]] %s2
  // Predicated region
  $region2: #{snc_forward.1} parent=0 // pred_check
    _
  $region3: #{snc_forward.1} parent=0 // pred_check_branch
    %10 = sbr.rel (0) target = $region5
  $region4: #{snc_forward.1} parent=0 // pred_region
    _
  $region5: #{snc_forward.1} parent=0 // pred_fallthru
    _
  // Predicated region
  $region6: #{snc_forward.1} parent=0 // pred_check
    _
  $region7: #{snc_forward.1} parent=0 // pred_check_branch
    %12 = sbr.rel (0) target = $region9
  $region8: #{snc_forward.1} parent=0 // pred_region
    _
  $region9: #{snc_forward.1} parent=0 // pred_fallthru
    _
  // Predicated region
  $region10: #{snc_forward.1} parent=0 // pred_check
    _
  $region11: #{snc_forward.1} parent=0 // pred_check_branch
    %14 = sbr.rel (0) target = $region13
  $region12: #{snc_forward.1} parent=0 // pred_region
    _
  $region13: #{snc_forward.1} parent=0 // pred_fallthru
    _
  %v15 = vld [vmem:[%s0] sm:$0xff]
  %v16 = vld [vmem:[%s0 + $0x8] sm:$0xff]
  %v17 = vld [vmem:[%s0 + $0x10] sm:$0xff]
  %v18 = vld [vmem:[%s0 + $0x18] sm:$0xff]
  %v19 = vld [vmem:[%s0 + $0x20] sm:$0xff]
  %v20 = vld [vmem:[%s0 + $0x28] sm:$0xff]
  %v21 = vld [vmem:[%s0 + $0x30] sm:$0xff]
  %v22 = vld [vmem:[%s0 + $0x38] sm:$0xff]
  %v23 = vld [vmem:[%s0 + $0x40] sm:$0xff]
  %v24 = vld [vmem:[%s1] sm:$0xff]
  %v25 = vld [vmem:[%s1 + $0x8] sm:$0xff]
  %v26 = vld [vmem:[%s1 + $0x10] sm:$0xff]
  %v27 = vld [vmem:[%s1 + $0x18] sm:$0xff]
  %v28 = vld [vmem:[%s1 + $0x20] sm:$0xff]
  %v29 = vld [vmem:[%s1 + $0x28] sm:$0xff]
  %v30 = vld [vmem:[%s1 + $0x30] sm:$0xff]
  %v31 = vld [vmem:[%s1 + $0x38] sm:$0xff]
  %v32 = vld [vmem:[%s1 + $0x40] sm:$0xff]
  %v33 = vld [vmem:[%s1 + $0x48] sm:$0xff]
  %v34 = vld [vmem:[%s1 + $0x50] sm:$0xff]
  %v35 = vld [vmem:[%s1 + $0x58] sm:$0xff]
  %v36 = vld [vmem:[%s1 + $0x60] sm:$0xff]
  %v37 = vld [vmem:[%s1 + $0x68] sm:$0xff]
  %v38 = vld [vmem:[%s1 + $0x70] sm:$0xff]
  %v39 = vld [vmem:[%s1 + $0x78] sm:$0xff]
  %v40 = vld [vmem:[%s1 + $0x80] sm:$0xff]
  %v41 = vld [vmem:[%s1 + $0x88] sm:$0xff]
  %v42 = vld [vmem:[%s1 + $0x90] sm:$0xff]
  %v43 = vld [vmem:[%s1 + $0x98] sm:$0xff]
  %v44 = vld [vmem:[%s1 + $0xa0] sm:$0xff]
  %v45 = vld [vmem:[%s1 + $0xa8] sm:$0xff]
  %v46 = vld [vmem:[%s1 + $0xb0] sm:$0xff]
  %v47 = vld [vmem:[%s1 + $0xb8] sm:$0xff]
  %v48 = vld [vmem:[%s1 + $0xc0] sm:$0xff]
  %v49 = vld [vmem:[%s1 + $0xc8] sm:$0xff]
  %v50 = vld [vmem:[%s1 + $0xd0] sm:$0xff]
  %v51 = vld [vmem:[%s1 + $0xd8] sm:$0xff]
  %v52 = vld [vmem:[%s1 + $0xe0] sm:$0xff]
  %v53 = vld [vmem:[%s1 + $0xe8] sm:$0xff]
  %v54 = vld [vmem:[%s1 + $0xf0] sm:$0xff]
  %v55 = vld [vmem:[%s1 + $0xf8] sm:$0xff]
  %v56 = vld [vmem:[%s1 + $0x100] sm:$0xff]
  %v57 = vld [vmem:[%s1 + $0x108] sm:$0xff]
  %v58 = vld [vmem:[%s1 + $0x110] sm:$0xff]
  %v59 = vld [vmem:[%s1 + $0x118] sm:$0xff]
  %v60 = vld [vmem:[%s1 + $0x120] sm:$0xff]
  %v61 = vld [vmem:[%s1 + $0x128] sm:$0xff]
  %v62 = vld [vmem:[%s1 + $0x130] sm:$0xff]
  %v63 = vld [vmem:[%s1 + $0x138] sm:$0xff]
  %v64 = vld [vmem:[%s1 + $0x140] sm:$0xff]
  %v65 = vld [vmem:[%s1 + $0x148] sm:$0xff]
  %v66 = vld [vmem:[%s1 + $0x150] sm:$0xff]
  %v67 = vld [vmem:[%s1 + $0x158] sm:$0xff]
  %v68 = vld [vmem:[%s1 + $0x160] sm:$0xff]
  %v69 = vld [vmem:[%s1 + $0x168] sm:$0xff]
  %v70 = vld [vmem:[%s1 + $0x170] sm:$0xff]
  %v71 = vld [vmem:[%s1 + $0x178] sm:$0xff]
  %v72 = vld [vmem:[%s1 + $0x180] sm:$0xff]
  %v73 = vld [vmem:[%s1 + $0x188] sm:$0xff]
  %v74 = vld [vmem:[%s1 + $0x190] sm:$0xff]
  %v75 = vld [vmem:[%s1 + $0x198] sm:$0xff]
  %v76 = vld [vmem:[%s1 + $0x1a0] sm:$0xff]
  %v77 = vld [vmem:[%s1 + $0x1a8] sm:$0xff]
  %v78 = vld [vmem:[%s1 + $0x1b0] sm:$0xff]
  %v79 = vld [vmem:[%s1 + $0x1b8] sm:$0xff]
  %v80 = vld [vmem:[%s1 + $0x1c0] sm:$0xff]
  %v81 = vld [vmem:[%s1 + $0x1c8] sm:$0xff]
  %v82 = vld [vmem:[%s1 + $0x1d0] sm:$0xff]
  %v83 = vld [vmem:[%s1 + $0x1d8] sm:$0xff]
  %v84 = vld [vmem:[%s1 + $0x1e0] sm:$0xff]
  %v85 = vld [vmem:[%s1 + $0x1e8] sm:$0xff]
  %v86 = vld [vmem:[%s1 + $0x1f0] sm:$0xff]
  %v87 = vld [vmem:[%s1 + $0x1f8] sm:$0xff]
  %v88 = vld [vmem:[%s1 + $0x200] sm:$0xff]
  %v89 = vld [vmem:[%s1 + $0x208] sm:$0xff]
  %v90 = vld [vmem:[%s1 + $0x210] sm:$0xff]
  %v91 = vld [vmem:[%s1 + $0x218] sm:$0xff]
  %v92 = vld [vmem:[%s1 + $0x220] sm:$0xff]
  %v93 = vld [vmem:[%s1 + $0x228] sm:$0xff]
  %v94 = vld [vmem:[%s1 + $0x230] sm:$0xff]
  %v95 = vld [vmem:[%s1 + $0x238] sm:$0xff]
  %v96 = vld [vmem:[%s1 + $0x240] sm:$0xff]
  %v97 = vld [vmem:[%s1 + $0x248] sm:$0xff]
  %v98 = vld [vmem:[%s1 + $0x250] sm:$0xff]
  %v99 = vld [vmem:[%s1 + $0x258] sm:$0xff]
  %v100 = vld [vmem:[%s1 + $0x260] sm:$0xff]
  %v101 = vld [vmem:[%s1 + $0x268] sm:$0xff]
  %v102 = vld [vmem:[%s1 + $0x270] sm:$0xff]
  %v103 = vld [vmem:[%s1 + $0x278] sm:$0xff]
  %v104 = vld [vmem:[%s1 + $0x280] sm:$0xff]
  %v105 = vld [vmem:[%s1 + $0x288] sm:$0xff]
  %v106 = vld [vmem:[%s1 + $0x290] sm:$0xff]
  %v107 = vld [vmem:[%s1 + $0x298] sm:$0xff]
  %v108 = vld [vmem:[%s1 + $0x2a0] sm:$0xff]
  %v109 = vld [vmem:[%s1 + $0x2a8] sm:$0xff]
  %v110 = vld [vmem:[%s1 + $0x2b0] sm:$0xff]
  %v111 = vld [vmem:[%s1 + $0x2b8] sm:$0xff]
  %v112 = vld [vmem:[%s1 + $0x2c0] sm:$0xff]
  %v113 = vld [vmem:[%s1 + $0x2c8] sm:$0xff]
  %v114 = vld [vmem:[%s1 + $0x2d0] sm:$0xff]
  %v115 = vld [vmem:[%s1 + $0x2d8] sm:$0xff]
  %v116 = vld [vmem:[%s1 + $0x2e0] sm:$0xff]
  %v117 = vld [vmem:[%s1 + $0x2e8] sm:$0xff]
  %v118 = vld [vmem:[%s1 + $0x2f0] sm:$0xff]
  %v119 = vld [vmem:[%s1 + $0x2f8] sm:$0xff]
  %v120 = vld [vmem:[%s1 + $0x300] sm:$0xff]
  %v121 = vld [vmem:[%s1 + $0x308] sm:$0xff]
  %v122 = vld [vmem:[%s1 + $0x310] sm:$0xff]
  %v123 = vld [vmem:[%s1 + $0x318] sm:$0xff]
  %v124 = vld [vmem:[%s1 + $0x320] sm:$0xff]
  %v125 = vld [vmem:[%s1 + $0x328] sm:$0xff]
  %v126 = vld [vmem:[%s1 + $0x330] sm:$0xff]
  %v127 = vld [vmem:[%s1 + $0x338] sm:$0xff]
  %v128 = vld [vmem:[%s1 + $0x340] sm:$0xff]
  %v129 = vld [vmem:[%s1 + $0x348] sm:$0xff]
  %v130 = vld [vmem:[%s1 + $0x350] sm:$0xff]
  %v131 = vld [vmem:[%s1 + $0x358] sm:$0xff]
  %v132 = vld [vmem:[%s1 + $0x360] sm:$0xff]
  %v133 = vld [vmem:[%s1 + $0x368] sm:$0xff]
  %v134 = vld [vmem:[%s1 + $0x370] sm:$0xff]
  %v135 = vld [vmem:[%s1 + $0x378] sm:$0xff]
  %v136 = vld [vmem:[%s1 + $0x380] sm:$0xff]
  %v137 = vld [vmem:[%s1 + $0x388] sm:$0xff]
  %v138 = vld [vmem:[%s1 + $0x390] sm:$0xff]
  %v139 = vld [vmem:[%s1 + $0x398] sm:$0xff]
  %v140 = vld [vmem:[%s1 + $0x3a0] sm:$0xff]
  %v141 = vld [vmem:[%s1 + $0x3a8] sm:$0xff]
  %v142 = vld [vmem:[%s1 + $0x3b0] sm:$0xff]
  %v143 = vld [vmem:[%s1 + $0x3b8] sm:$0xff]
  %v144 = vld [vmem:[%s1 + $0x3c0] sm:$0xff]
  %v145 = vld [vmem:[%s1 + $0x3c8] sm:$0xff]
  %v146 = vld [vmem:[%s1 + $0x3d0] sm:$0xff]
  %v147 = vld [vmem:[%s1 + $0x3d8] sm:$0xff]
  %v148 = vld [vmem:[%s1 + $0x3e0] sm:$0xff]
  %v149 = vld [vmem:[%s1 + $0x3e8] sm:$0xff]
  %v150 = vld [vmem:[%s1 + $0x3f0] sm:$0xff]
  %v151 = vld [vmem:[%s1 + $0x3f8] sm:$0xff]
  %v152 = vld [vmem:[%s1 + $0x400] sm:$0xff]
  %v153 = vld [vmem:[%s1 + $0x408] sm:$0xff]
  %v154 = vld [vmem:[%s1 + $0x410] sm:$0xff]
  %v155 = vld [vmem:[%s1 + $0x418] sm:$0xff]
  %v156 = vld [vmem:[%s1 + $0x420] sm:$0xff]
  %v157 = vld [vmem:[%s1 + $0x428] sm:$0xff]
  %v158 = vld [vmem:[%s1 + $0x430] sm:$0xff]
  %v159 = vld [vmem:[%s1 + $0x438] sm:$0xff]
  %v160 = vld [vmem:[%s1 + $0x440] sm:$0xff]
  %v161 = vld [vmem:[%s1 + $0x448] sm:$0xff]
  %v162 = vld [vmem:[%s1 + $0x450] sm:$0xff]
  %v163 = vld [vmem:[%s1 + $0x458] sm:$0xff]
  %v164 = vld [vmem:[%s1 + $0x460] sm:$0xff]
  %v165 = vld [vmem:[%s1 + $0x468] sm:$0xff]
  %v166 = vld [vmem:[%s1 + $0x470] sm:$0xff]
  %v167 = vld [vmem:[%s1 + $0x478] sm:$0xff]
  %s168 = sld [smem:[#allocation2]]
  %v169 = vstv %s168
  %170 = vmatprep.subr.mxu0 0.0
  %v171 = vand.u32 %v39, 4294901760
  %172 = vmatpush1.msra.mxu0 %v171
  %173 = vmatprep.subr.mxu0 0.0
  %v174 = vand.u32 %v38, 4294901760
  %175 = vmatpush1.msra.mxu0 %v174
  %176 = vmatprep.subr.mxu0 0.0
  %v177 = vand.u32 %v37, 4294901760
  %178 = vmatpush1.msra.mxu0 %v177
  %179 = vmatprep.subr.mxu0 0.0
  %v180 = vand.u32 %v36, 4294901760
  %181 = vmatpush1.msra.mxu0 %v180
  %182 = vmatprep.subr.mxu0 0.0
  %v183 = vand.u32 %v35, 4294901760
  %184 = vmatpush1.msra.mxu0 %v183
  %185 = vmatprep.subr.mxu0 0.0
  %v186 = vand.u32 %v34, 4294901760
  %187 = vmatpush1.msra.mxu0 %v186
  %188 = vmatprep.subr.mxu0 0.0
  %v189 = vand.u32 %v33, 4294901760
  %190 = vmatpush1.msra.mxu0 %v189
  %191 = vmatprep.subr.mxu0 0.0
  %v192 = vand.u32 %v32, 4294901760
  %193 = vmatpush1.msra.mxu0 %v192
  %194 = vmatprep.subr.mxu0 0.0
  %v195 = vand.u32 %v31, 4294901760
  %196 = vmatpush1.msra.mxu0 %v195
  %197 = vmatprep.subr.mxu0 0.0
  %v198 = vand.u32 %v30, 4294901760
  %199 = vmatpush1.msra.mxu0 %v198
  %200 = vmatprep.subr.mxu0 0.0
  %v201 = vand.u32 %v29, 4294901760
  %202 = vmatpush1.msra.mxu0 %v201
  %203 = vmatprep.subr.mxu0 0.0
  %v204 = vand.u32 %v28, 4294901760
  %205 = vmatpush1.msra.mxu0 %v204
  %206 = vmatprep.subr.mxu0 0.0
  %v207 = vand.u32 %v27, 4294901760
  %208 = vmatpush1.msra.mxu0 %v207
  %209 = vmatprep.subr.mxu0 0.0
  %v210 = vand.u32 %v26, 4294901760
  %211 = vmatpush1.msra.mxu0 %v210
  %212 = vmatprep.subr.mxu0 0.0
  %v213 = vand.u32 %v25, 4294901760
  %214 = vmatpush1.msra.mxu0 %v213
  %215 = vmatprep.subr.mxu0 0.0
  %v216 = vand.u32 %v24, 4294901760
  %217 = vmatpush1.msra.mxu0 %v216
  %218 = vmatprep.subr.mxu0 0.0
  %v219 = vand.u32 %v55, 4294901760
  %220 = vmatpush2.msra.mxu0 %v219
  %221 = vmatprep.subr.mxu0 0.0
  %v222 = vand.u32 %v54, 4294901760
  %223 = vmatpush2.msra.mxu0 %v222
  %224 = vmatprep.subr.mxu0 0.0
  %v225 = vand.u32 %v53, 4294901760
  %226 = vmatpush2.msra.mxu0 %v225
  %227 = vmatprep.subr.mxu0 0.0
  %v228 = vand.u32 %v52, 4294901760
  %229 = vmatpush2.msra.mxu0 %v228
  %230 = vmatprep.subr.mxu0 0.0
  %v231 = vand.u32 %v51, 4294901760
  %232 = vmatpush2.msra.mxu0 %v231
  %233 = vmatprep.subr.mxu0 0.0
  %v234 = vand.u32 %v50, 4294901760
  %235 = vmatpush2.msra.mxu0 %v234
  %236 = vmatprep.subr.mxu0 0.0
  %v237 = vand.u32 %v49, 4294901760
  %238 = vmatpush2.msra.mxu0 %v237
  %239 = vmatprep.subr.mxu0 0.0
  %v240 = vand.u32 %v48, 4294901760
  %241 = vmatpush2.msra.mxu0 %v240
  %242 = vmatprep.subr.mxu0 0.0
  %v243 = vand.u32 %v47, 4294901760
  %244 = vmatpush2.msra.mxu0 %v243
  %245 = vmatprep.subr.mxu0 0.0
  %v246 = vand.u32 %v46, 4294901760
  %247 = vmatpush2.msra.mxu0 %v246
  %248 = vmatprep.subr.mxu0 0.0
  %v249 = vand.u32 %v45, 4294901760
  %250 = vmatpush2.msra.mxu0 %v249
  %251 = vmatprep.subr.mxu0 0.0
  %v252 = vand.u32 %v44, 4294901760
  %253 = vmatpush2.msra.mxu0 %v252
  %254 = vmatprep.subr.mxu0 0.0
  %v255 = vand.u32 %v43, 4294901760
  %256 = vmatpush2.msra.mxu0 %v255
  %257 = vmatprep.subr.mxu0 0.0
  %v258 = vand.u32 %v42, 4294901760
  %259 = vmatpush2.msra.mxu0 %v258
  %260 = vmatprep.subr.mxu0 0.0
  %v261 = vand.u32 %v41, 4294901760
  %262 = vmatpush2.msra.mxu0 %v261
  %263 = vmatprep.subr.mxu0 0.0
  %v264 = vand.u32 %v40, 4294901760
  %265 = vmatpush2.msra.mxu0 %v264
  %v266 = vand.u32 %v16, 4294901760
  %v267 = vsub.f32 %v16, %v266
  %v268 = vand.u32 %v267, 4294901760
  %v269 = vsub.f32 %v267, %v268
  %v270 = vand.u32 %v269, 4294901760
  %271 = vmatprep.mubr.f32.mxu0 %v270
  %v272 = vand.u32 %v15, 4294901760
  %v273 = vsub.f32 %v15, %v272
  %v274 = vand.u32 %v273, 4294901760
  %v275 = vsub.f32 %v273, %v274
  %v276 = vand.u32 %v275, 4294901760
  %277 = vmatmul.mubr.f32.gmra.mxu0 %v276
  %v278 = vpop.f32.mrf.mxu0
  %v279 = vadd.f32 %v169, %v278
  %v280 = vpop.f32.mrf.mxu0
  %281 = vdwg.mxu0
  %282 = vmatprep.subr.mxu0 0.0
  %v283 = vand.u32 %v39, 4294901760
  %v284 = vsub.f32 %v39, %v283
  %v285 = vand.u32 %v284, 4294901760
  %v286 = vsub.f32 %v284, %v285
  %v287 = vand.u32 %v286, 4294901760
  %288 = vmatpush1.msra.mxu0 %v287
  %289 = vmatprep.subr.mxu0 0.0
  %v290 = vand.u32 %v38, 4294901760
  %v291 = vsub.f32 %v38, %v290
  %v292 = vand.u32 %v291, 4294901760
  %v293 = vsub.f32 %v291, %v292
  %v294 = vand.u32 %v293, 4294901760
  %295 = vmatpush1.msra.mxu0 %v294
  %296 = vmatprep.subr.mxu0 0.0
  %v297 = vand.u32 %v37, 4294901760
  %v298 = vsub.f32 %v37, %v297
  %v299 = vand.u32 %v298, 4294901760
  %v300 = vsub.f32 %v298, %v299
  %v301 = vand.u32 %v300, 4294901760
  %302 = vmatpush1.msra.mxu0 %v301
  %303 = vmatprep.subr.mxu0 0.0
  %v304 = vand.u32 %v36, 4294901760
  %v305 = vsub.f32 %v36, %v304
  %v306 = vand.u32 %v305, 4294901760
  %v307 = vsub.f32 %v305, %v306
  %v308 = vand.u32 %v307, 4294901760
  %309 = vmatpush1.msra.mxu0 %v308
  %310 = vmatprep.subr.mxu0 0.0
  %v311 = vand.u32 %v35, 4294901760
  %v312 = vsub.f32 %v35, %v311
  %v313 = vand.u32 %v312, 4294901760
  %v314 = vsub.f32 %v312, %v313
  %v315 = vand.u32 %v314, 4294901760
  %316 = vmatpush1.msra.mxu0 %v315
  %317 = vmatprep.subr.mxu0 0.0
  %v318 = vand.u32 %v34, 4294901760
  %v319 = vsub.f32 %v34, %v318
  %v320 = vand.u32 %v319, 4294901760
  %v321 = vsub.f32 %v319, %v320
  %v322 = vand.u32 %v321, 4294901760
  %323 = vmatpush1.msra.mxu0 %v322
  %324 = vmatprep.subr.mxu0 0.0
  %v325 = vand.u32 %v33, 4294901760
  %v326 = vsub.f32 %v33, %v325
  %v327 = vand.u32 %v326, 4294901760
  %v328 = vsub.f32 %v326, %v327
  %v329 = vand.u32 %v328, 4294901760
  %330 = vmatpush1.msra.mxu0 %v329
  %331 = vmatprep.subr.mxu0 0.0
  %v332 = vand.u32 %v32, 4294901760
  %v333 = vsub.f32 %v32, %v332
  %v334 = vand.u32 %v333, 4294901760
  %v335 = vsub.f32 %v333, %v334
  %v336 = vand.u32 %v335, 4294901760
  %337 = vmatpush1.msra.mxu0 %v336
  %338 = vmatprep.subr.mxu0 0.0
  %v339 = vand.u32 %v31, 4294901760
  %v340 = vsub.f32 %v31, %v339
  %v341 = vand.u32 %v340, 4294901760
  %v342 = vsub.f32 %v340, %v341
  %v343 = vand.u32 %v342, 4294901760
  %344 = vmatpush1.msra.mxu0 %v343
  %345 = vmatprep.subr.mxu0 0.0
  %v346 = vand.u32 %v30, 4294901760
  %v347 = vsub.f32 %v30, %v346
  %v348 = vand.u32 %v347, 4294901760
  %v349 = vsub.f32 %v347, %v348
  %v350 = vand.u32 %v349, 4294901760
  %351 = vmatpush1.msra.mxu0 %v350
  %352 = vmatprep.subr.mxu0 0.0
  %v353 = vand.u32 %v29, 4294901760
  %v354 = vsub.f32 %v29, %v353
  %v355 = vand.u32 %v354, 4294901760
  %v356 = vsub.f32 %v354, %v355
  %v357 = vand.u32 %v356, 4294901760
  %358 = vmatpush1.msra.mxu0 %v357
  %359 = vmatprep.subr.mxu0 0.0
  %v360 = vand.u32 %v28, 4294901760
  %v361 = vsub.f32 %v28, %v360
  %v362 = vand.u32 %v361, 4294901760
  %v363 = vsub.f32 %v361, %v362
  %v364 = vand.u32 %v363, 4294901760
  %365 = vmatpush1.msra.mxu0 %v364
  %366 = vmatprep.subr.mxu0 0.0
  %v367 = vand.u32 %v27, 4294901760
  %v368 = vsub.f32 %v27, %v367
  %v369 = vand.u32 %v368, 4294901760
  %v370 = vsub.f32 %v368, %v369
  %v371 = vand.u32 %v370, 4294901760
  %372 = vmatpush1.msra.mxu0 %v371
  %373 = vmatprep.subr.mxu0 0.0
  %v374 = vand.u32 %v26, 4294901760
  %v375 = vsub.f32 %v26, %v374
  %v376 = vand.u32 %v375, 4294901760
  %v377 = vsub.f32 %v375, %v376
  %v378 = vand.u32 %v377, 4294901760
  %379 = vmatpush1.msra.mxu0 %v378
  %380 = vmatprep.subr.mxu0 0.0
  %v381 = vand.u32 %v25, 4294901760
  %v382 = vsub.f32 %v25, %v381
  %v383 = vand.u32 %v382, 4294901760
  %v384 = vsub.f32 %v382, %v383
  %v385 = vand.u32 %v384, 4294901760
  %386 = vmatpush1.msra.mxu0 %v385
  %387 = vmatprep.subr.mxu0 0.0
  %v388 = vand.u32 %v24, 4294901760
  %v389 = vsub.f32 %v24, %v388
  %v390 = vand.u32 %v389, 4294901760
  %v391 = vsub.f32 %v389, %v390
  %v392 = vand.u32 %v391, 4294901760
  %393 = vmatpush1.msra.mxu0 %v392
  %394 = vmatprep.subr.mxu0 0.0
  %v395 = vand.u32 %v55, 4294901760
  %v396 = vsub.f32 %v55, %v395
  %v397 = vand.u32 %v396, 4294901760
  %v398 = vsub.f32 %v396, %v397
  %v399 = vand.u32 %v398, 4294901760
  %400 = vmatpush2.msra.mxu0 %v399
  %401 = vmatprep.subr.mxu0 0.0
  %v402 = vand.u32 %v54, 4294901760
  %v403 = vsub.f32 %v54, %v402
  %v404 = vand.u32 %v403, 4294901760
  %v405 = vsub.f32 %v403, %v404
  %v406 = vand.u32 %v405, 4294901760
  %407 = vmatpush2.msra.mxu0 %v406
  %408 = vmatprep.subr.mxu0 0.0
  %v409 = vand.u32 %v53, 4294901760
  %v410 = vsub.f32 %v53, %v409
  %v411 = vand.u32 %v410, 4294901760
  %v412 = vsub.f32 %v410, %v411
  %v413 = vand.u32 %v412, 4294901760
  %414 = vmatpush2.msra.mxu0 %v413
  %415 = vmatprep.subr.mxu0 0.0
  %v416 = vand.u32 %v52, 4294901760
  %v417 = vsub.f32 %v52, %v416
  %v418 = vand.u32 %v417, 4294901760
  %v419 = vsub.f32 %v417, %v418
  %v420 = vand.u32 %v419, 4294901760
  %421 = vmatpush2.msra.mxu0 %v420
  %422 = vmatprep.subr.mxu0 0.0
  %v423 = vand.u32 %v51, 4294901760
  %v424 = vsub.f32 %v51, %v423
  %v425 = vand.u32 %v424, 4294901760
  %v426 = vsub.f32 %v424, %v425
  %v427 = vand.u32 %v426, 4294901760
  %428 = vmatpush2.msra.mxu0 %v427
  %429 = vmatprep.subr.mxu0 0.0
  %v430 = vand.u32 %v50, 4294901760
  %v431 = vsub.f32 %v50, %v430
  %v432 = vand.u32 %v431, 4294901760
  %v433 = vsub.f32 %v431, %v432
  %v434 = vand.u32 %v433, 4294901760
  %435 = vmatpush2.msra.mxu0 %v434
  %436 = vmatprep.subr.mxu0 0.0
  %v437 = vand.u32 %v49, 4294901760
  %v438 = vsub.f32 %v49, %v437
  %v439 = vand.u32 %v438, 4294901760
  %v440 = vsub.f32 %v438, %v439
  %v441 = vand.u32 %v440, 4294901760
  %442 = vmatpush2.msra.mxu0 %v441
  %443 = vmatprep.subr.mxu0 0.0
  %v444 = vand.u32 %v48, 4294901760
  %v445 = vsub.f32 %v48, %v444
  %v446 = vand.u32 %v445, 4294901760
  %v447 = vsub.f32 %v445, %v446
  %v448 = vand.u32 %v447, 4294901760
  %449 = vmatpush2.msra.mxu0 %v448
  %450 = vmatprep.subr.mxu0 0.0
  %v451 = vand.u32 %v47, 4294901760
  %v452 = vsub.f32 %v47, %v451
  %v453 = vand.u32 %v452, 4294901760
  %v454 = vsub.f32 %v452, %v453
  %v455 = vand.u32 %v454, 4294901760
  %456 = vmatpush2.msra.mxu0 %v455
  %457 = vmatprep.subr.mxu0 0.0
  %v458 = vand.u32 %v46, 4294901760
  %v459 = vsub.f32 %v46, %v458
  %v460 = vand.u32 %v459, 4294901760
  %v461 = vsub.f32 %v459, %v460
  %v462 = vand.u32 %v461, 4294901760
  %463 = vmatpush2.msra.mxu0 %v462
  %464 = vmatprep.subr.mxu0 0.0
  %v465 = vand.u32 %v45, 4294901760
  %v466 = vsub.f32 %v45, %v465
  %v467 = vand.u32 %v466, 4294901760
  %v468 = vsub.f32 %v466, %v467
  %v469 = vand.u32 %v468, 4294901760
  %470 = vmatpush2.msra.mxu0 %v469
  %471 = vmatprep.subr.mxu0 0.0
  %v472 = vand.u32 %v44, 4294901760
  %v473 = vsub.f32 %v44, %v472
  %v474 = vand.u32 %v473, 4294901760
  %v475 = vsub.f32 %v473, %v474
  %v476 = vand.u32 %v475, 4294901760
  %477 = vmatpush2.msra.mxu0 %v476
  %478 = vmatprep.subr.mxu0 0.0
  %v479 = vand.u32 %v43, 4294901760
  %v480 = vsub.f32 %v43, %v479
  %v481 = vand.u32 %v480, 4294901760
  %v482 = vsub.f32 %v480, %v481
  %v483 = vand.u32 %v482, 4294901760
  %484 = vmatpush2.msra.mxu0 %v483
  %485 = vmatprep.subr.mxu0 0.0
  %v486 = vand.u32 %v42, 4294901760
  %v487 = vsub.f32 %v42, %v486
  %v488 = vand.u32 %v487, 4294901760
  %v489 = vsub.f32 %v487, %v488
  %v490 = vand.u32 %v489, 4294901760
  %491 = vmatpush2.msra.mxu0 %v490
  %492 = vmatprep.subr.mxu0 0.0
  %v493 = vand.u32 %v41, 4294901760
  %v494 = vsub.f32 %v41, %v493
  %v495 = vand.u32 %v494, 4294901760
  %v496 = vsub.f32 %v494, %v495
  %v497 = vand.u32 %v496, 4294901760
  %498 = vmatpush2.msra.mxu0 %v497
  %499 = vmatprep.subr.mxu0 0.0
  %v500 = vand.u32 %v40, 4294901760
  %v501 = vsub.f32 %v40, %v500
  %v502 = vand.u32 %v501, 4294901760
  %v503 = vsub.f32 %v501, %v502
  %v504 = vand.u32 %v503, 4294901760
  %505 = vmatpush2.msra.mxu0 %v504
  %v506 = vand.u32 %v16, 4294901760
  %507 = vmatprep.mubr.f32.mxu0 %v506
  %v508 = vand.u32 %v15, 4294901760
  %509 = vmatmul.mubr.f32.gmra.mxu0 %v508
  %v510 = vpop.f32.mrf.mxu0
  %v511 = vadd.f32 %v279, %v510
  %v512 = vpop.f32.mrf.mxu0
  %513 = vdwg.mxu0
  %514 = vmatprep.subr.mxu0 0.0
  %v515 = vand.u32 %v39, 4294901760
  %v516 = vsub.f32 %v39, %v515
  %517 = vmatpush1.msra.mxu0 %v516
  %518 = vmatprep.subr.mxu0 0.0
  %v519 = vand.u32 %v38, 4294901760
  %v520 = vsub.f32 %v38, %v519
  %521 = vmatpush1.msra.mxu0 %v520
  %522 = vmatprep.subr.mxu0 0.0
  %v523 = vand.u32 %v37, 4294901760
  %v524 = vsub.f32 %v37, %v523
  %525 = vmatpush1.msra.mxu0 %v524
  %526 = vmatprep.subr.mxu0 0.0
  %v527 = vand.u32 %v36, 4294901760
  %v528 = vsub.f32 %v36, %v527
  %529 = vmatpush1.msra.mxu0 %v528
  %530 = vmatprep.subr.mxu0 0.0
  %v531 = vand.u32 %v35, 4294901760
  %v532 = vsub.f32 %v35, %v531
  %533 = vmatpush1.msra.mxu0 %v532
  %534 = vmatprep.subr.mxu0 0.0
  %v535 = vand.u32 %v34, 4294901760
  %v536 = vsub.f32 %v34, %v535
  %537 = vmatpush1.msra.mxu0 %v536
  %538 = vmatprep.subr.mxu0 0.0
  %v539 = vand.u32 %v33, 4294901760
  %v540 = vsub.f32 %v33, %v539
  %541 = vmatpush1.msra.mxu0 %v540
  %542 = vmatprep.subr.mxu0 0.0
  %v543 = vand.u32 %v32, 4294901760
  %v544 = vsub.f32 %v32, %v543
  %545 = vmatpush1.msra.mxu0 %v544
  %546 = vmatprep.subr.mxu0 0.0
  %v547 = vand.u32 %v31, 4294901760
  %v548 = vsub.f32 %v31, %v547
  %549 = vmatpush1.msra.mxu0 %v548
  %550 = vmatprep.subr.mxu0 0.0
  %v551 = vand.u32 %v30, 4294901760
  %v552 = vsub.f32 %v30, %v551
  %553 = vmatpush1.msra.mxu0 %v552
  %554 = vmatprep.subr.mxu0 0.0
  %v555 = vand.u32 %v29, 4294901760
  %v556 = vsub.f32 %v29, %v555
  %557 = vmatpush1.msra.mxu0 %v556
  %558 = vmatprep.subr.mxu0 0.0
  %v559 = vand.u32 %v28, 4294901760
  %v560 = vsub.f32 %v28, %v559
  %561 = vmatpush1.msra.mxu0 %v560
  %562 = vmatprep.subr.mxu0 0.0
  %v563 = vand.u32 %v27, 4294901760
  %v564 = vsub.f32 %v27, %v563
  %565 = vmatpush1.msra.mxu0 %v564
  %566 = vmatprep.subr.mxu0 0.0
  %v567 = vand.u32 %v26, 4294901760
  %v568 = vsub.f32 %v26, %v567
  %569 = vmatpush1.msra.mxu0 %v568
  %570 = vmatprep.subr.mxu0 0.0
  %v571 = vand.u32 %v25, 4294901760
  %v572 = vsub.f32 %v25, %v571
  %573 = vmatpush1.msra.mxu0 %v572
  %574 = vmatprep.subr.mxu0 0.0
  %v575 = vand.u32 %v24, 4294901760
  %v576 = vsub.f32 %v24, %v575
  %577 = vmatpush1.msra.mxu0 %v576
  %578 = vmatprep.subr.mxu0 0.0
  %v579 = vand.u32 %v55, 4294901760
  %v580 = vsub.f32 %v55, %v579
  %581 = vmatpush2.msra.mxu0 %v580
  %582 = vmatprep.subr.mxu0 0.0
  %v583 = vand.u32 %v54, 4294901760
  %v584 = vsub.f32 %v54, %v583
  %585 = vmatpush2.msra.mxu0 %v584
  %586 = vmatprep.subr.mxu0 0.0
  %v587 = vand.u32 %v53, 4294901760
  %v588 = vsub.f32 %v53, %v587
  %589 = vmatpush2.msra.mxu0 %v588
  %590 = vmatprep.subr.mxu0 0.0
  %v591 = vand.u32 %v52, 4294901760
  %v592 = vsub.f32 %v52, %v591
  %593 = vmatpush2.msra.mxu0 %v592
  %594 = vmatprep.subr.mxu0 0.0
  %v595 = vand.u32 %v51, 4294901760
  %v596 = vsub.f32 %v51, %v595
  %597 = vmatpush2.msra.mxu0 %v596
  %598 = vmatprep.subr.mxu0 0.0
  %v599 = vand.u32 %v50, 4294901760
  %v600 = vsub.f32 %v50, %v599
  %601 = vmatpush2.msra.mxu0 %v600
  %602 = vmatprep.subr.mxu0 0.0
  %v603 = vand.u32 %v49, 4294901760
  %v604 = vsub.f32 %v49, %v603
  %605 = vmatpush2.msra.mxu0 %v604
  %606 = vmatprep.subr.mxu0 0.0
  %v607 = vand.u32 %v48, 4294901760
  %v608 = vsub.f32 %v48, %v607
  %609 = vmatpush2.msra.mxu0 %v608
  %610 = vmatprep.subr.mxu0 0.0
  %v611 = vand.u32 %v47, 4294901760
  %v612 = vsub.f32 %v47, %v611
  %613 = vmatpush2.msra.mxu0 %v612
  %614 = vmatprep.subr.mxu0 0.0
  %v615 = vand.u32 %v46, 4294901760
  %v616 = vsub.f32 %v46, %v615
  %617 = vmatpush2.msra.mxu0 %v616
  %618 = vmatprep.subr.mxu0 0.0
  %v619 = vand.u32 %v45, 4294901760
  %v620 = vsub.f32 %v45, %v619
  %621 = vmatpush2.msra.mxu0 %v620
  %622 = vmatprep.subr.mxu0 0.0
  %v623 = vand.u32 %v44, 4294901760
  %v624 = vsub.f32 %v44, %v623
  %625 = vmatpush2.msra.mxu0 %v624
  %626 = vmatprep.subr.mxu0 0.0
  %v627 = vand.u32 %v43, 4294901760
  %v628 = vsub.f32 %v43, %v627
  %629 = vmatpush2.msra.mxu0 %v628
  %630 = vmatprep.subr.mxu0 0.0
  %v631 = vand.u32 %v42, 4294901760
  %v632 = vsub.f32 %v42, %v631
  %633 = vmatpush2.msra.mxu0 %v632
  %634 = vmatprep.subr.mxu0 0.0
  %v635 = vand.u32 %v41, 4294901760
  %v636 = vsub.f32 %v41, %v635
  %637 = vmatpush2.msra.mxu0 %v636
  %638 = vmatprep.subr.mxu0 0.0
  %v639 = vand.u32 %v40, 4294901760
  %v640 = vsub.f32 %v40, %v639
  %641 = vmatpush2.msra.mxu0 %v640
  %v642 = vand.u32 %v16, 4294901760
  %v643 = vsub.f32 %v16, %v642
  %644 = vmatprep.mubr.f32.mxu0 %v643
  %v645 = vand.u32 %v15, 4294901760
  %v646 = vsub.f32 %v15, %v645
  %647 = vmatmul.mubr.f32.gmra.mxu0 %v646
  %v648 = vpop.f32.mrf.mxu0
  %v649 = vadd.f32 %v511, %v648
  %v650 = vpop.f32.mrf.mxu0
  %651 = vdwg.mxu0
  %652 = vmatprep.subr.mxu0 0.0
  %v653 = vand.u32 %v39, 4294901760
  %654 = vmatpush1.msra.mxu0 %v653
  %655 = vmatprep.subr.mxu0 0.0
  %v656 = vand.u32 %v38, 4294901760
  %657 = vmatpush1.msra.mxu0 %v656
  %658 = vmatprep.subr.mxu0 0.0
  %v659 = vand.u32 %v37, 4294901760
  %660 = vmatpush1.msra.mxu0 %v659
  %661 = vmatprep.subr.mxu0 0.0
  %v662 = vand.u32 %v36, 4294901760
  %663 = vmatpush1.msra.mxu0 %v662
  %664 = vmatprep.subr.mxu0 0.0
  %v665 = vand.u32 %v35, 4294901760
  %666 = vmatpush1.msra.mxu0 %v665
  %667 = vmatprep.subr.mxu0 0.0
  %v668 = vand.u32 %v34, 4294901760
  %669 = vmatpush1.msra.mxu0 %v668
  %670 = vmatprep.subr.mxu0 0.0
  %v671 = vand.u32 %v33, 4294901760
  %672 = vmatpush1.msra.mxu0 %v671
  %673 = vmatprep.subr.mxu0 0.0
  %v674 = vand.u32 %v32, 4294901760
  %675 = vmatpush1.msra.mxu0 %v674
  %676 = vmatprep.subr.mxu0 0.0
  %v677 = vand.u32 %v31, 4294901760
  %678 = vmatpush1.msra.mxu0 %v677
  %679 = vmatprep.subr.mxu0 0.0
  %v680 = vand.u32 %v30, 4294901760
  %681 = vmatpush1.msra.mxu0 %v680
  %682 = vmatprep.subr.mxu0 0.0
  %v683 = vand.u32 %v29, 4294901760
  %684 = vmatpush1.msra.mxu0 %v683
  %685 = vmatprep.subr.mxu0 0.0
  %v686 = vand.u32 %v28, 4294901760
  %687 = vmatpush1.msra.mxu0 %v686
  %688 = vmatprep.subr.mxu0 0.0
  %v689 = vand.u32 %v27, 4294901760
  %690 = vmatpush1.msra.mxu0 %v689
  %691 = vmatprep.subr.mxu0 0.0
  %v692 = vand.u32 %v26, 4294901760
  %693 = vmatpush1.msra.mxu0 %v692
  %694 = vmatprep.subr.mxu0 0.0
  %v695 = vand.u32 %v25, 4294901760
  %696 = vmatpush1.msra.mxu0 %v695
  %697 = vmatprep.subr.mxu0 0.0
  %v698 = vand.u32 %v24, 4294901760
  %699 = vmatpush1.msra.mxu0 %v698
  %700 = vmatprep.subr.mxu0 0.0
  %v701 = vand.u32 %v55, 4294901760
  %702 = vmatpush2.msra.mxu0 %v701
  %703 = vmatprep.subr.mxu0 0.0
  %v704 = vand.u32 %v54, 4294901760
  %705 = vmatpush2.msra.mxu0 %v704
  %706 = vmatprep.subr.mxu0 0.0
  %v707 = vand.u32 %v53, 4294901760
  %708 = vmatpush2.msra.mxu0 %v707
  %709 = vmatprep.subr.mxu0 0.0
  %v710 = vand.u32 %v52, 4294901760
  %711 = vmatpush2.msra.mxu0 %v710
  %712 = vmatprep.subr.mxu0 0.0
  %v713 = vand.u32 %v51, 4294901760
  %714 = vmatpush2.msra.mxu0 %v713
  %715 = vmatprep.subr.mxu0 0.0
  %v716 = vand.u32 %v50, 4294901760
  %717 = vmatpush2.msra.mxu0 %v716
  %718 = vmatprep.subr.mxu0 0.0
  %v719 = vand.u32 %v49, 4294901760
  %720 = vmatpush2.msra.mxu0 %v719
  %721 = vmatprep.subr.mxu0 0.0
  %v722 = vand.u32 %v48, 4294901760
  %723 = vmatpush2.msra.mxu0 %v722
  %724 = vmatprep.subr.mxu0 0.0
  %v725 = vand.u32 %v47, 4294901760
  %726 = vmatpush2.msra.mxu0 %v725
  %727 = vmatprep.subr.mxu0 0.0
  %v728 = vand.u32 %v46, 4294901760
  %729 = vmatpush2.msra.mxu0 %v728
  %730 = vmatprep.subr.mxu0 0.0
  %v731 = vand.u32 %v45, 4294901760
  %732 = vmatpush2.msra.mxu0 %v731
  %733 = vmatprep.subr.mxu0 0.0
  %v734 = vand.u32 %v44, 4294901760
  %735 = vmatpush2.msra.mxu0 %v734
  %736 = vmatprep.subr.mxu0 0.0
  %v737 = vand.u32 %v43, 4294901760
  %738 = vmatpush2.msra.mxu0 %v737
  %739 = vmatprep.subr.mxu0 0.0
  %v740 = vand.u32 %v42, 4294901760
  %741 = vmatpush2.msra.mxu0 %v740
  %742 = vmatprep.subr.mxu0 0.0
  %v743 = vand.u32 %v41, 4294901760
  %744 = vmatpush2.msra.mxu0 %v743
  %745 = vmatprep.subr.mxu0 0.0
  %v746 = vand.u32 %v40, 4294901760
  %747 = vmatpush2.msra.mxu0 %v746
  %v748 = vand.u32 %v16, 4294901760
  %v749 = vsub.f32 %v16, %v748
  %v750 = vand.u32 %v749, 4294901760
  %751 = vmatprep.mubr.f32.mxu0 %v750
  %v752 = vand.u32 %v15, 4294901760
  %v753 = vsub.f32 %v15, %v752
  %v754 = vand.u32 %v753, 4294901760
  %755 = vmatmul.mubr.f32.gmra.mxu0 %v754
  %v756 = vpop.f32.mrf.mxu0
  %v757 = vadd.f32 %v649, %v756
  %v758 = vpop.f32.mrf.mxu0
  %759 = vdwg.mxu0
  %760 = vmatprep.subr.mxu0 0.0
  %v761 = vand.u32 %v39, 4294901760
  %v762 = vsub.f32 %v39, %v761
  %v763 = vand.u32 %v762, 4294901760
  %764 = vmatpush1.msra.mxu0 %v763
  %765 = vmatprep.subr.mxu0 0.0
  %v766 = vand.u32 %v38, 4294901760
  %v767 = vsub.f32 %v38, %v766
  %v768 = vand.u32 %v767, 4294901760
  %769 = vmatpush1.msra.mxu0 %v768
  %770 = vmatprep.subr.mxu0 0.0
  %v771 = vand.u32 %v37, 4294901760
  %v772 = vsub.f32 %v37, %v771
  %v773 = vand.u32 %v772, 4294901760
  %774 = vmatpush1.msra.mxu0 %v773
  %775 = vmatprep.subr.mxu0 0.0
  %v776 = vand.u32 %v36, 4294901760
  %v777 = vsub.f32 %v36, %v776
  %v778 = vand.u32 %v777, 4294901760
  %779 = vmatpush1.msra.mxu0 %v778
  %780 = vmatprep.subr.mxu0 0.0
  %v781 = vand.u32 %v35, 4294901760
  %v782 = vsub.f32 %v35, %v781
  %v783 = vand.u32 %v782, 4294901760
  %784 = vmatpush1.msra.mxu0 %v783
  %785 = vmatprep.subr.mxu0 0.0
  %v786 = vand.u32 %v34, 4294901760
  %v787 = vsub.f32 %v34, %v786
  %v788 = vand.u32 %v787, 4294901760
  %789 = vmatpush1.msra.mxu0 %v788
  %790 = vmatprep.subr.mxu0 0.0
  %v791 = vand.u32 %v33, 4294901760
  %v792 = vsub.f32 %v33, %v791
  %v793 = vand.u32 %v792, 4294901760
  %794 = vmatpush1.msra.mxu0 %v793
  %795 = vmatprep.subr.mxu0 0.0
  %v796 = vand.u32 %v32, 4294901760
  %v797 = vsub.f32 %v32, %v796
  %v798 = vand.u32 %v797, 4294901760
  %799 = vmatpush1.msra.mxu0 %v798
  %800 = vmatprep.subr.mxu0 0.0
  %v801 = vand.u32 %v31, 4294901760
  %v802 = vsub.f32 %v31, %v801
  %v803 = vand.u32 %v802, 4294901760
  %804 = vmatpush1.msra.mxu0 %v803
  %805 = vmatprep.subr.mxu0 0.0
  %v806 = vand.u32 %v30, 4294901760
  %v807 = vsub.f32 %v30, %v806
  %v808 = vand.u32 %v807, 4294901760
  %809 = vmatpush1.msra.mxu0 %v808
  %810 = vmatprep.subr.mxu0 0.0
  %v811 = vand.u32 %v29, 4294901760
  %v812 = vsub.f32 %v29, %v811
  %v813 = vand.u32 %v812, 4294901760
  %814 = vmatpush1.msra.mxu0 %v813
  %815 = vmatprep.subr.mxu0 0.0
  %v816 = vand.u32 %v28, 4294901760
  %v817 = vsub.f32 %v28, %v816
  %v818 = vand.u32 %v817, 4294901760
  %819 = vmatpush1.msra.mxu0 %v818
  %820 = vmatprep.subr.mxu0 0.0
  %v821 = vand.u32 %v27, 4294901760
  %v822 = vsub.f32 %v27, %v821
  %v823 = vand.u32 %v822, 4294901760
  %824 = vmatpush1.msra.mxu0 %v823
  %825 = vmatprep.subr.mxu0 0.0
  %v826 = vand.u32 %v26, 4294901760
  %v827 = vsub.f32 %v26, %v826
  %v828 = vand.u32 %v827, 4294901760
  %829 = vmatpush1.msra.mxu0 %v828
  %830 = vmatprep.subr.mxu0 0.0
  %v831 = vand.u32 %v25, 4294901760
  %v832 = vsub.f32 %v25, %v831
  %v833 = vand.u32 %v832, 4294901760
  %834 = vmatpush1.msra.mxu0 %v833
  %835 = vmatprep.subr.mxu0 0.0
  %v836 = vand.u32 %v24, 4294901760
  %v837 = vsub.f32 %v24, %v836
  %v838 = vand.u32 %v837, 4294901760
  %839 = vmatpush1.msra.mxu0 %v838
  %840 = vmatprep.subr.mxu0 0.0
  %v841 = vand.u32 %v55, 4294901760
  %v842 = vsub.f32 %v55, %v841
  %v843 = vand.u32 %v842, 4294901760
  %844 = vmatpush2.msra.mxu0 %v843
  %845 = vmatprep.subr.mxu0 0.0
  %v846 = vand.u32 %v54, 4294901760
  %v847 = vsub.f32 %v54, %v846
  %v848 = vand.u32 %v847, 4294901760
  %849 = vmatpush2.msra.mxu0 %v848
  %850 = vmatprep.subr.mxu0 0.0
  %v851 = vand.u32 %v53, 4294901760
  %v852 = vsub.f32 %v53, %v851
  %v853 = vand.u32 %v852, 4294901760
  %854 = vmatpush2.msra.mxu0 %v853
  %855 = vmatprep.subr.mxu0 0.0
  %v856 = vand.u32 %v52, 4294901760
  %v857 = vsub.f32 %v52, %v856
  %v858 = vand.u32 %v857, 4294901760
  %859 = vmatpush2.msra.mxu0 %v858
  %860 = vmatprep.subr.mxu0 0.0
  %v861 = vand.u32 %v51, 4294901760
  %v862 = vsub.f32 %v51, %v861
  %v863 = vand.u32 %v862, 4294901760
  %864 = vmatpush2.msra.mxu0 %v863
  %865 = vmatprep.subr.mxu0 0.0
  %v866 = vand.u32 %v50, 4294901760
  %v867 = vsub.f32 %v50, %v866
  %v868 = vand.u32 %v867, 4294901760
  %869 = vmatpush2.msra.mxu0 %v868
  %870 = vmatprep.subr.mxu0 0.0
  %v871 = vand.u32 %v49, 4294901760
  %v872 = vsub.f32 %v49, %v871
  %v873 = vand.u32 %v872, 4294901760
  %874 = vmatpush2.msra.mxu0 %v873
  %875 = vmatprep.subr.mxu0 0.0
  %v876 = vand.u32 %v48, 4294901760
  %v877 = vsub.f32 %v48, %v876
  %v878 = vand.u32 %v877, 4294901760
  %879 = vmatpush2.msra.mxu0 %v878
  %880 = vmatprep.subr.mxu0 0.0
  %v881 = vand.u32 %v47, 4294901760
  %v882 = vsub.f32 %v47, %v881
  %v883 = vand.u32 %v882, 4294901760
  %884 = vmatpush2.msra.mxu0 %v883
  %885 = vmatprep.subr.mxu0 0.0
  %v886 = vand.u32 %v46, 4294901760
  %v887 = vsub.f32 %v46, %v886
  %v888 = vand.u32 %v887, 4294901760
  %889 = vmatpush2.msra.mxu0 %v888
  %890 = vmatprep.subr.mxu0 0.0
  %v891 = vand.u32 %v45, 4294901760
  %v892 = vsub.f32 %v45, %v891
  %v893 = vand.u32 %v892, 4294901760
  %894 = vmatpush2.msra.mxu0 %v893
  %895 = vmatprep.subr.mxu0 0.0
  %v896 = vand.u32 %v44, 4294901760
  %v897 = vsub.f32 %v44, %v896
  %v898 = vand.u32 %v897, 4294901760
  %899 = vmatpush2.msra.mxu0 %v898
  %900 = vmatprep.subr.mxu0 0.0
  %v901 = vand.u32 %v43, 4294901760
  %v902 = vsub.f32 %v43, %v901
  %v903 = vand.u32 %v902, 4294901760
  %904 = vmatpush2.msra.mxu0 %v903
  %905 = vmatprep.subr.mxu0 0.0
  %v906 = vand.u32 %v42, 4294901760
  %v907 = vsub.f32 %v42, %v906
  %v908 = vand.u32 %v907, 4294901760
  %909 = vmatpush2.msra.mxu0 %v908
  %910 = vmatprep.subr.mxu0 0.0
  %v911 = vand.u32 %v41, 4294901760
  %v912 = vsub.f32 %v41, %v911
  %v913 = vand.u32 %v912, 4294901760
  %914 = vmatpush2.msra.mxu0 %v913
  %915 = vmatprep.subr.mxu0 0.0
  %v916 = vand.u32 %v40, 4294901760
  %v917 = vsub.f32 %v40, %v916
  %v918 = vand.u32 %v917, 4294901760
  %919 = vmatpush2.msra.mxu0 %v918
  %v920 = vand.u32 %v16, 4294901760
  %921 = vmatprep.mubr.f32.mxu0 %v920
  %v922 = vand.u32 %v15, 4294901760
  %923 = vmatmul.mubr.f32.gmra.mxu0 %v922
  %v924 = vpop.f32.mrf.mxu0
  %v925 = vadd.f32 %v757, %v924
  %v926 = vpop.f32.mrf.mxu0
  %927 = vdwg.mxu0
  %928 = vmatprep.subr.mxu0 0.0
  %v929 = vand.u32 %v39, 4294901760
  %930 = vmatpush1.msra.mxu0 %v929
  %931 = vmatprep.subr.mxu0 0.0
  %v932 = vand.u32 %v38, 4294901760
  %933 = vmatpush1.msra.mxu0 %v932
  %934 = vmatprep.subr.mxu0 0.0
  %v935 = vand.u32 %v37, 4294901760
  %936 = vmatpush1.msra.mxu0 %v935
  %937 = vmatprep.subr.mxu0 0.0
  %v938 = vand.u32 %v36, 4294901760
  %939 = vmatpush1.msra.mxu0 %v938
  %940 = vmatprep.subr.mxu0 0.0
  %v941 = vand.u32 %v35, 4294901760
  %942 = vmatpush1.msra.mxu0 %v941
  %943 = vmatprep.subr.mxu0 0.0
  %v944 = vand.u32 %v34, 4294901760
  %945 = vmatpush1.msra.mxu0 %v944
  %946 = vmatprep.subr.mxu0 0.0
  %v947 = vand.u32 %v33, 4294901760
  %948 = vmatpush1.msra.mxu0 %v947
  %949 = vmatprep.subr.mxu0 0.0
  %v950 = vand.u32 %v32, 4294901760
  %951 = vmatpush1.msra.mxu0 %v950
  %952 = vmatprep.subr.mxu0 0.0
  %v953 = vand.u32 %v31, 4294901760
  %954 = vmatpush1.msra.mxu0 %v953
  %955 = vmatprep.subr.mxu0 0.0
  %v956 = vand.u32 %v30, 4294901760
  %957 = vmatpush1.msra.mxu0 %v956
  %958 = vmatprep.subr.mxu0 0.0
  %v959 = vand.u32 %v29, 4294901760
  %960 = vmatpush1.msra.mxu0 %v959
  %961 = vmatprep.subr.mxu0 0.0
  %v962 = vand.u32 %v28, 4294901760
  %963 = vmatpush1.msra.mxu0 %v962
  %964 = vmatprep.subr.mxu0 0.0
  %v965 = vand.u32 %v27, 4294901760
  %966 = vmatpush1.msra.mxu0 %v965
  %967 = vmatprep.subr.mxu0 0.0
  %v968 = vand.u32 %v26, 4294901760
  %969 = vmatpush1.msra.mxu0 %v968
  %970 = vmatprep.subr.mxu0 0.0
  %v971 = vand.u32 %v25, 4294901760
  %972 = vmatpush1.msra.mxu0 %v971
  %973 = vmatprep.subr.mxu0 0.0
  %v974 = vand.u32 %v24, 4294901760
  %975 = vmatpush1.msra.mxu0 %v974
  %976 = vmatprep.subr.mxu0 0.0
  %v977 = vand.u32 %v55, 4294901760
  %978 = vmatpush2.msra.mxu0 %v977
  %979 = vmatprep.subr.mxu0 0.0
  %v980 = vand.u32 %v54, 4294901760
  %981 = vmatpush2.msra.mxu0 %v980
  %982 = vmatprep.subr.mxu0 0.0
  %v983 = vand.u32 %v53, 4294901760
  %984 = vmatpush2.msra.mxu0 %v983
  %985 = vmatprep.subr.mxu0 0.0
  %v986 = vand.u32 %v52, 4294901760
  %987 = vmatpush2.msra.mxu0 %v986
  %988 = vmatprep.subr.mxu0 0.0
  %v989 = vand.u32 %v51, 4294901760
  %990 = vmatpush2.msra.mxu0 %v989
  %991 = vmatprep.subr.mxu0 0.0
  %v992 = vand.u32 %v50, 4294901760
  %993 = vmatpush2.msra.mxu0 %v992
  %994 = vmatprep.subr.mxu0 0.0
  %v995 = vand.u32 %v49, 4294901760
  %996 = vmatpush2.msra.mxu0 %v995
  %997 = vmatprep.subr.mxu0 0.0
  %v998 = vand.u32 %v48, 4294901760
  %999 = vmatpush2.msra.mxu0 %v998
  %1000 = vmatprep.subr.mxu0 0.0
  %v1001 = vand.u32 %v47, 4294901760
  %1002 = vmatpush2.msra.mxu0 %v1001
  %1003 = vmatprep.subr.mxu0 0.0
  %v1004 = vand.u32 %v46, 4294901760
  %1005 = vmatpush2.msra.mxu0 %v1004
  %1006 = vmatprep.subr.mxu0 0.0
  %v1007 = vand.u32 %v45, 4294901760
  %1008 = vmatpush2.msra.mxu0 %v1007
  %1009 = vmatprep.subr.mxu0 0.0
  %v1010 = vand.u32 %v44, 4294901760
  %1011 = vmatpush2.msra.mxu0 %v1010
  %1012 = vmatprep.subr.mxu0 0.0
  %v1013 = vand.u32 %v43, 4294901760
  %1014 = vmatpush2.msra.mxu0 %v1013
  %1015 = vmatprep.subr.mxu0 0.0
  %v1016 = vand.u32 %v42, 4294901760
  %1017 = vmatpush2.msra.mxu0 %v1016
  %1018 = vmatprep.subr.mxu0 0.0
  %v1019 = vand.u32 %v41, 4294901760
  %1020 = vmatpush2.msra.mxu0 %v1019
  %1021 = vmatprep.subr.mxu0 0.0
  %v1022 = vand.u32 %v40, 4294901760
  %1023 = vmatpush2.msra.mxu0 %v1022
  %v1024 = vand.u32 %v16, 4294901760
  %1025 = vmatprep.mubr.f32.mxu0 %v1024
  %v1026 = vand.u32 %v15, 4294901760
  %1027 = vmatmul.mubr.f32.gmra.mxu0 %v1026
  %v1028 = vpop.f32.mrf.mxu0
  %v1029 = vadd.f32 %v925, %v1028
  %v1030 = vpop.f32.mrf.mxu0
  %1031 = vdwg.mxu0
  %1032 = vmatprep.subr.mxu0 0.0
  %v1033 = vand.u32 %v71, 4294901760
  %1034 = vmatpush1.msra.mxu0 %v1033
  %1035 = vmatprep.subr.mxu0 0.0
  %v1036 = vand.u32 %v70, 4294901760
  %1037 = vmatpush1.msra.mxu0 %v1036
  %1038 = vmatprep.subr.mxu0 0.0
  %v1039 = vand.u32 %v69, 4294901760
  %1040 = vmatpush1.msra.mxu0 %v1039
  %1041 = vmatprep.subr.mxu0 0.0
  %v1042 = vand.u32 %v68, 4294901760
  %1043 = vmatpush1.msra.mxu0 %v1042
  %1044 = vmatprep.subr.mxu0 0.0
  %v1045 = vand.u32 %v67, 4294901760
  %1046 = vmatpush1.msra.mxu0 %v1045
  %1047 = vmatprep.subr.mxu0 0.0
  %v1048 = vand.u32 %v66, 4294901760
  %1049 = vmatpush1.msra.mxu0 %v1048
  %1050 = vmatprep.subr.mxu0 0.0
  %v1051 = vand.u32 %v65, 4294901760
  %1052 = vmatpush1.msra.mxu0 %v1051
  %1053 = vmatprep.subr.mxu0 0.0
  %v1054 = vand.u32 %v64, 4294901760
  %1055 = vmatpush1.msra.mxu0 %v1054
  %1056 = vmatprep.subr.mxu0 0.0
  %v1057 = vand.u32 %v63, 4294901760
  %1058 = vmatpush1.msra.mxu0 %v1057
  %1059 = vmatprep.subr.mxu0 0.0
  %v1060 = vand.u32 %v62, 4294901760
  %1061 = vmatpush1.msra.mxu0 %v1060
  %1062 = vmatprep.subr.mxu0 0.0
  %v1063 = vand.u32 %v61, 4294901760
  %1064 = vmatpush1.msra.mxu0 %v1063
  %1065 = vmatprep.subr.mxu0 0.0
  %v1066 = vand.u32 %v60, 4294901760
  %1067 = vmatpush1.msra.mxu0 %v1066
  %1068 = vmatprep.subr.mxu0 0.0
  %v1069 = vand.u32 %v59, 4294901760
  %1070 = vmatpush1.msra.mxu0 %v1069
  %1071 = vmatprep.subr.mxu0 0.0
  %v1072 = vand.u32 %v58, 4294901760
  %1073 = vmatpush1.msra.mxu0 %v1072
  %1074 = vmatprep.subr.mxu0 0.0
  %v1075 = vand.u32 %v57, 4294901760
  %1076 = vmatpush1.msra.mxu0 %v1075
  %1077 = vmatprep.subr.mxu0 0.0
  %v1078 = vand.u32 %v56, 4294901760
  %1079 = vmatpush1.msra.mxu0 %v1078
  %1080 = vmatprep.subr.mxu0 0.0
  %v1081 = vand.u32 %v87, 4294901760
  %1082 = vmatpush2.msra.mxu0 %v1081
  %1083 = vmatprep.subr.mxu0 0.0
  %v1084 = vand.u32 %v86, 4294901760
  %1085 = vmatpush2.msra.mxu0 %v1084
  %1086 = vmatprep.subr.mxu0 0.0
  %v1087 = vand.u32 %v85, 4294901760
  %1088 = vmatpush2.msra.mxu0 %v1087
  %1089 = vmatprep.subr.mxu0 0.0
  %v1090 = vand.u32 %v84, 4294901760
  %1091 = vmatpush2.msra.mxu0 %v1090
  %1092 = vmatprep.subr.mxu0 0.0
  %v1093 = vand.u32 %v83, 4294901760
  %1094 = vmatpush2.msra.mxu0 %v1093
  %1095 = vmatprep.subr.mxu0 0.0
  %v1096 = vand.u32 %v82, 4294901760
  %1097 = vmatpush2.msra.mxu0 %v1096
  %1098 = vmatprep.subr.mxu0 0.0
  %v1099 = vand.u32 %v81, 4294901760
  %1100 = vmatpush2.msra.mxu0 %v1099
  %1101 = vmatprep.subr.mxu0 0.0
  %v1102 = vand.u32 %v80, 4294901760
  %1103 = vmatpush2.msra.mxu0 %v1102
  %1104 = vmatprep.subr.mxu0 0.0
  %v1105 = vand.u32 %v79, 4294901760
  %1106 = vmatpush2.msra.mxu0 %v1105
  %1107 = vmatprep.subr.mxu0 0.0
  %v1108 = vand.u32 %v78, 4294901760
  %1109 = vmatpush2.msra.mxu0 %v1108
  %1110 = vmatprep.subr.mxu0 0.0
  %v1111 = vand.u32 %v77, 4294901760
  %1112 = vmatpush2.msra.mxu0 %v1111
  %1113 = vmatprep.subr.mxu0 0.0
  %v1114 = vand.u32 %v76, 4294901760
  %1115 = vmatpush2.msra.mxu0 %v1114
  %1116 = vmatprep.subr.mxu0 0.0
  %v1117 = vand.u32 %v75, 4294901760
  %1118 = vmatpush2.msra.mxu0 %v1117
  %1119 = vmatprep.subr.mxu0 0.0
  %v1120 = vand.u32 %v74, 4294901760
  %1121 = vmatpush2.msra.mxu0 %v1120
  %1122 = vmatprep.subr.mxu0 0.0
  %v1123 = vand.u32 %v73, 4294901760
  %1124 = vmatpush2.msra.mxu0 %v1123
  %1125 = vmatprep.subr.mxu0 0.0
  %v1126 = vand.u32 %v72, 4294901760
  %1127 = vmatpush2.msra.mxu0 %v1126
  %v1128 = vand.u32 %v18, 4294901760
  %v1129 = vsub.f32 %v18, %v1128
  %v1130 = vand.u32 %v1129, 4294901760
  %v1131 = vsub.f32 %v1129, %v1130
  %v1132 = vand.u32 %v1131, 4294901760
  %1133 = vmatprep.mubr.f32.mxu0 %v1132
  %v1134 = vand.u32 %v17, 4294901760
  %v1135 = vsub.f32 %v17, %v1134
  %v1136 = vand.u32 %v1135, 4294901760
  %v1137 = vsub.f32 %v1135, %v1136
  %v1138 = vand.u32 %v1137, 4294901760
  %1139 = vmatmul.mubr.f32.gmra.mxu0 %v1138
  %v1140 = vpop.f32.mrf.mxu0
  %v1141 = vadd.f32 %v1029, %v1140
  %v1142 = vpop.f32.mrf.mxu0
  %1143 = vdwg.mxu0
  %1144 = vmatprep.subr.mxu0 0.0
  %v1145 = vand.u32 %v71, 4294901760
  %v1146 = vsub.f32 %v71, %v1145
  %v1147 = vand.u32 %v1146, 4294901760
  %v1148 = vsub.f32 %v1146, %v1147
  %v1149 = vand.u32 %v1148, 4294901760
  %1150 = vmatpush1.msra.mxu0 %v1149
  %1151 = vmatprep.subr.mxu0 0.0
  %v1152 = vand.u32 %v70, 4294901760
  %v1153 = vsub.f32 %v70, %v1152
  %v1154 = vand.u32 %v1153, 4294901760
  %v1155 = vsub.f32 %v1153, %v1154
  %v1156 = vand.u32 %v1155, 4294901760
  %1157 = vmatpush1.msra.mxu0 %v1156
  %1158 = vmatprep.subr.mxu0 0.0
  %v1159 = vand.u32 %v69, 4294901760
  %v1160 = vsub.f32 %v69, %v1159
  %v1161 = vand.u32 %v1160, 4294901760
  %v1162 = vsub.f32 %v1160, %v1161
  %v1163 = vand.u32 %v1162, 4294901760
  %1164 = vmatpush1.msra.mxu0 %v1163
  %1165 = vmatprep.subr.mxu0 0.0
  %v1166 = vand.u32 %v68, 4294901760
  %v1167 = vsub.f32 %v68, %v1166
  %v1168 = vand.u32 %v1167, 4294901760
  %v1169 = vsub.f32 %v1167, %v1168
  %v1170 = vand.u32 %v1169, 4294901760
  %1171 = vmatpush1.msra.mxu0 %v1170
  %1172 = vmatprep.subr.mxu0 0.0
  %v1173 = vand.u32 %v67, 4294901760
  %v1174 = vsub.f32 %v67, %v1173
  %v1175 = vand.u32 %v1174, 4294901760
  %v1176 = vsub.f32 %v1174, %v1175
  %v1177 = vand.u32 %v1176, 4294901760
  %1178 = vmatpush1.msra.mxu0 %v1177
  %1179 = vmatprep.subr.mxu0 0.0
  %v1180 = vand.u32 %v66, 4294901760
  %v1181 = vsub.f32 %v66, %v1180
  %v1182 = vand.u32 %v1181, 4294901760
  %v1183 = vsub.f32 %v1181, %v1182
  %v1184 = vand.u32 %v1183, 4294901760
  %1185 = vmatpush1.msra.mxu0 %v1184
  %1186 = vmatprep.subr.mxu0 0.0
  %v1187 = vand.u32 %v65, 4294901760
  %v1188 = vsub.f32 %v65, %v1187
  %v1189 = vand.u32 %v1188, 4294901760
  %v1190 = vsub.f32 %v1188, %v1189
  %v1191 = vand.u32 %v1190, 4294901760
  %1192 = vmatpush1.msra.mxu0 %v1191
  %1193 = vmatprep.subr.mxu0 0.0
  %v1194 = vand.u32 %v64, 4294901760
  %v1195 = vsub.f32 %v64, %v1194
  %v1196 = vand.u32 %v1195, 4294901760
  %v1197 = vsub.f32 %v1195, %v1196
  %v1198 = vand.u32 %v1197, 4294901760
  %1199 = vmatpush1.msra.mxu0 %v1198
  %1200 = vmatprep.subr.mxu0 0.0
  %v1201 = vand.u32 %v63, 4294901760
  %v1202 = vsub.f32 %v63, %v1201
  %v1203 = vand.u32 %v1202, 4294901760
  %v1204 = vsub.f32 %v1202, %v1203
  %v1205 = vand.u32 %v1204, 4294901760
  %1206 = vmatpush1.msra.mxu0 %v1205
  %1207 = vmatprep.subr.mxu0 0.0
  %v1208 = vand.u32 %v62, 4294901760
  %v1209 = vsub.f32 %v62, %v1208
  %v1210 = vand.u32 %v1209, 4294901760
  %v1211 = vsub.f32 %v1209, %v1210
  %v1212 = vand.u32 %v1211, 4294901760
  %1213 = vmatpush1.msra.mxu0 %v1212
  %1214 = vmatprep.subr.mxu0 0.0
  %v1215 = vand.u32 %v61, 4294901760
  %v1216 = vsub.f32 %v61, %v1215
  %v1217 = vand.u32 %v1216, 4294901760
  %v1218 = vsub.f32 %v1216, %v1217
  %v1219 = vand.u32 %v1218, 4294901760
  %1220 = vmatpush1.msra.mxu0 %v1219
  %1221 = vmatprep.subr.mxu0 0.0
  %v1222 = vand.u32 %v60, 4294901760
  %v1223 = vsub.f32 %v60, %v1222
  %v1224 = vand.u32 %v1223, 4294901760
  %v1225 = vsub.f32 %v1223, %v1224
  %v1226 = vand.u32 %v1225, 4294901760
  %1227 = vmatpush1.msra.mxu0 %v1226
  %1228 = vmatprep.subr.mxu0 0.0
  %v1229 = vand.u32 %v59, 4294901760
  %v1230 = vsub.f32 %v59, %v1229
  %v1231 = vand.u32 %v1230, 4294901760
  %v1232 = vsub.f32 %v1230, %v1231
  %v1233 = vand.u32 %v1232, 4294901760
  %1234 = vmatpush1.msra.mxu0 %v1233
  %1235 = vmatprep.subr.mxu0 0.0
  %v1236 = vand.u32 %v58, 4294901760
  %v1237 = vsub.f32 %v58, %v1236
  %v1238 = vand.u32 %v1237, 4294901760
  %v1239 = vsub.f32 %v1237, %v1238
  %v1240 = vand.u32 %v1239, 4294901760
  %1241 = vmatpush1.msra.mxu0 %v1240
  %1242 = vmatprep.subr.mxu0 0.0
  %v1243 = vand.u32 %v57, 4294901760
  %v1244 = vsub.f32 %v57, %v1243
  %v1245 = vand.u32 %v1244, 4294901760
  %v1246 = vsub.f32 %v1244, %v1245
  %v1247 = vand.u32 %v1246, 4294901760
  %1248 = vmatpush1.msra.mxu0 %v1247
  %1249 = vmatprep.subr.mxu0 0.0
  %v1250 = vand.u32 %v56, 4294901760
  %v1251 = vsub.f32 %v56, %v1250
  %v1252 = vand.u32 %v1251, 4294901760
  %v1253 = vsub.f32 %v1251, %v1252
  %v1254 = vand.u32 %v1253, 4294901760
  %1255 = vmatpush1.msra.mxu0 %v1254
  %1256 = vmatprep.subr.mxu0 0.0
  %v1257 = vand.u32 %v87, 4294901760
  %v1258 = vsub.f32 %v87, %v1257
  %v1259 = vand.u32 %v1258, 4294901760
  %v1260 = vsub.f32 %v1258, %v1259
  %v1261 = vand.u32 %v1260, 4294901760
  %1262 = vmatpush2.msra.mxu0 %v1261
  %1263 = vmatprep.subr.mxu0 0.0
  %v1264 = vand.u32 %v86, 4294901760
  %v1265 = vsub.f32 %v86, %v1264
  %v1266 = vand.u32 %v1265, 4294901760
  %v1267 = vsub.f32 %v1265, %v1266
  %v1268 = vand.u32 %v1267, 4294901760
  %1269 = vmatpush2.msra.mxu0 %v1268
  %1270 = vmatprep.subr.mxu0 0.0
  %v1271 = vand.u32 %v85, 4294901760
  %v1272 = vsub.f32 %v85, %v1271
  %v1273 = vand.u32 %v1272, 4294901760
  %v1274 = vsub.f32 %v1272, %v1273
  %v1275 = vand.u32 %v1274, 4294901760
  %1276 = vmatpush2.msra.mxu0 %v1275
  %1277 = vmatprep.subr.mxu0 0.0
  %v1278 = vand.u32 %v84, 4294901760
  %v1279 = vsub.f32 %v84, %v1278
  %v1280 = vand.u32 %v1279, 4294901760
  %v1281 = vsub.f32 %v1279, %v1280
  %v1282 = vand.u32 %v1281, 4294901760
  %1283 = vmatpush2.msra.mxu0 %v1282
  %1284 = vmatprep.subr.mxu0 0.0
  %v1285 = vand.u32 %v83, 4294901760
  %v1286 = vsub.f32 %v83, %v1285
  %v1287 = vand.u32 %v1286, 4294901760
  %v1288 = vsub.f32 %v1286, %v1287
  %v1289 = vand.u32 %v1288, 4294901760
  %1290 = vmatpush2.msra.mxu0 %v1289
  %1291 = vmatprep.subr.mxu0 0.0
  %v1292 = vand.u32 %v82, 4294901760
  %v1293 = vsub.f32 %v82, %v1292
  %v1294 = vand.u32 %v1293, 4294901760
  %v1295 = vsub.f32 %v1293, %v1294
  %v1296 = vand.u32 %v1295, 4294901760
  %1297 = vmatpush2.msra.mxu0 %v1296
  %1298 = vmatprep.subr.mxu0 0.0
  %v1299 = vand.u32 %v81, 4294901760
  %v1300 = vsub.f32 %v81, %v1299
  %v1301 = vand.u32 %v1300, 4294901760
  %v1302 = vsub.f32 %v1300, %v1301
  %v1303 = vand.u32 %v1302, 4294901760
  %1304 = vmatpush2.msra.mxu0 %v1303
  %1305 = vmatprep.subr.mxu0 0.0
  %v1306 = vand.u32 %v80, 4294901760
  %v1307 = vsub.f32 %v80, %v1306
  %v1308 = vand.u32 %v1307, 4294901760
  %v1309 = vsub.f32 %v1307, %v1308
  %v1310 = vand.u32 %v1309, 4294901760
  %1311 = vmatpush2.msra.mxu0 %v1310
  %1312 = vmatprep.subr.mxu0 0.0
  %v1313 = vand.u32 %v79, 4294901760
  %v1314 = vsub.f32 %v79, %v1313
  %v1315 = vand.u32 %v1314, 4294901760
  %v1316 = vsub.f32 %v1314, %v1315
  %v1317 = vand.u32 %v1316, 4294901760
  %1318 = vmatpush2.msra.mxu0 %v1317
  %1319 = vmatprep.subr.mxu0 0.0
  %v1320 = vand.u32 %v78, 4294901760
  %v1321 = vsub.f32 %v78, %v1320
  %v1322 = vand.u32 %v1321, 4294901760
  %v1323 = vsub.f32 %v1321, %v1322
  %v1324 = vand.u32 %v1323, 4294901760
  %1325 = vmatpush2.msra.mxu0 %v1324
  %1326 = vmatprep.subr.mxu0 0.0
  %v1327 = vand.u32 %v77, 4294901760
  %v1328 = vsub.f32 %v77, %v1327
  %v1329 = vand.u32 %v1328, 4294901760
  %v1330 = vsub.f32 %v1328, %v1329
  %v1331 = vand.u32 %v1330, 4294901760
  %1332 = vmatpush2.msra.mxu0 %v1331
  %1333 = vmatprep.subr.mxu0 0.0
  %v1334 = vand.u32 %v76, 4294901760
  %v1335 = vsub.f32 %v76, %v1334
  %v1336 = vand.u32 %v1335, 4294901760
  %v1337 = vsub.f32 %v1335, %v1336
  %v1338 = vand.u32 %v1337, 4294901760
  %1339 = vmatpush2.msra.mxu0 %v1338
  %1340 = vmatprep.subr.mxu0 0.0
  %v1341 = vand.u32 %v75, 4294901760
  %v1342 = vsub.f32 %v75, %v1341
  %v1343 = vand.u32 %v1342, 4294901760
  %v1344 = vsub.f32 %v1342, %v1343
  %v1345 = vand.u32 %v1344, 4294901760
  %1346 = vmatpush2.msra.mxu0 %v1345
  %1347 = vmatprep.subr.mxu0 0.0
  %v1348 = vand.u32 %v74, 4294901760
  %v1349 = vsub.f32 %v74, %v1348
  %v1350 = vand.u32 %v1349, 4294901760
  %v1351 = vsub.f32 %v1349, %v1350
  %v1352 = vand.u32 %v1351, 4294901760
  %1353 = vmatpush2.msra.mxu0 %v1352
  %1354 = vmatprep.subr.mxu0 0.0
  %v1355 = vand.u32 %v73, 4294901760
  %v1356 = vsub.f32 %v73, %v1355
  %v1357 = vand.u32 %v1356, 4294901760
  %v1358 = vsub.f32 %v1356, %v1357
  %v1359 = vand.u32 %v1358, 4294901760
  %1360 = vmatpush2.msra.mxu0 %v1359
  %1361 = vmatprep.subr.mxu0 0.0
  %v1362 = vand.u32 %v72, 4294901760
  %v1363 = vsub.f32 %v72, %v1362
  %v1364 = vand.u32 %v1363, 4294901760
  %v1365 = vsub.f32 %v1363, %v1364
  %v1366 = vand.u32 %v1365, 4294901760
  %1367 = vmatpush2.msra.mxu0 %v1366
  %v1368 = vand.u32 %v18, 4294901760
  %1369 = vmatprep.mubr.f32.mxu0 %v1368
  %v1370 = vand.u32 %v17, 4294901760
  %1371 = vmatmul.mubr.f32.gmra.mxu0 %v1370
  %v1372 = vpop.f32.mrf.mxu0
  %v1373 = vadd.f32 %v1141, %v1372
  %v1374 = vpop.f32.mrf.mxu0
  %1375 = vdwg.mxu0
  %1376 = vmatprep.subr.mxu0 0.0
  %v1377 = vand.u32 %v71, 4294901760
  %v1378 = vsub.f32 %v71, %v1377
  %1379 = vmatpush1.msra.mxu0 %v1378
  %1380 = vmatprep.subr.mxu0 0.0
  %v1381 = vand.u32 %v70, 4294901760
  %v1382 = vsub.f32 %v70, %v1381
  %1383 = vmatpush1.msra.mxu0 %v1382
  %1384 = vmatprep.subr.mxu0 0.0
  %v1385 = vand.u32 %v69, 4294901760
  %v1386 = vsub.f32 %v69, %v1385
  %1387 = vmatpush1.msra.mxu0 %v1386
  %1388 = vmatprep.subr.mxu0 0.0
  %v1389 = vand.u32 %v68, 4294901760
  %v1390 = vsub.f32 %v68, %v1389
  %1391 = vmatpush1.msra.mxu0 %v1390
  %1392 = vmatprep.subr.mxu0 0.0
  %v1393 = vand.u32 %v67, 4294901760
  %v1394 = vsub.f32 %v67, %v1393
  %1395 = vmatpush1.msra.mxu0 %v1394
  %1396 = vmatprep.subr.mxu0 0.0
  %v1397 = vand.u32 %v66, 4294901760
  %v1398 = vsub.f32 %v66, %v1397
  %1399 = vmatpush1.msra.mxu0 %v1398
  %1400 = vmatprep.subr.mxu0 0.0
  %v1401 = vand.u32 %v65, 4294901760
  %v1402 = vsub.f32 %v65, %v1401
  %1403 = vmatpush1.msra.mxu0 %v1402
  %1404 = vmatprep.subr.mxu0 0.0
  %v1405 = vand.u32 %v64, 4294901760
  %v1406 = vsub.f32 %v64, %v1405
  %1407 = vmatpush1.msra.mxu0 %v1406
  %1408 = vmatprep.subr.mxu0 0.0
  %v1409 = vand.u32 %v63, 4294901760
  %v1410 = vsub.f32 %v63, %v1409
  %1411 = vmatpush1.msra.mxu0 %v1410
  %1412 = vmatprep.subr.mxu0 0.0
  %v1413 = vand.u32 %v62, 4294901760
  %v1414 = vsub.f32 %v62, %v1413
  %1415 = vmatpush1.msra.mxu0 %v1414
  %1416 = vmatprep.subr.mxu0 0.0
  %v1417 = vand.u32 %v61, 4294901760
  %v1418 = vsub.f32 %v61, %v1417
  %1419 = vmatpush1.msra.mxu0 %v1418
  %1420 = vmatprep.subr.mxu0 0.0
  %v1421 = vand.u32 %v60, 4294901760
  %v1422 = vsub.f32 %v60, %v1421
  %1423 = vmatpush1.msra.mxu0 %v1422
  %1424 = vmatprep.subr.mxu0 0.0
  %v1425 = vand.u32 %v59, 4294901760
  %v1426 = vsub.f32 %v59, %v1425
  %1427 = vmatpush1.msra.mxu0 %v1426
  %1428 = vmatprep.subr.mxu0 0.0
  %v1429 = vand.u32 %v58, 4294901760
  %v1430 = vsub.f32 %v58, %v1429
  %1431 = vmatpush1.msra.mxu0 %v1430
  %1432 = vmatprep.subr.mxu0 0.0
  %v1433 = vand.u32 %v57, 4294901760
  %v1434 = vsub.f32 %v57, %v1433
  %1435 = vmatpush1.msra.mxu0 %v1434
  %1436 = vmatprep.subr.mxu0 0.0
  %v1437 = vand.u32 %v56, 4294901760
  %v1438 = vsub.f32 %v56, %v1437
  %1439 = vmatpush1.msra.mxu0 %v1438
  %1440 = vmatprep.subr.mxu0 0.0
  %v1441 = vand.u32 %v87, 4294901760
  %v1442 = vsub.f32 %v87, %v1441
  %1443 = vmatpush2.msra.mxu0 %v1442
  %1444 = vmatprep.subr.mxu0 0.0
  %v1445 = vand.u32 %v86, 4294901760
  %v1446 = vsub.f32 %v86, %v1445
  %1447 = vmatpush2.msra.mxu0 %v1446
  %1448 = vmatprep.subr.mxu0 0.0
  %v1449 = vand.u32 %v85, 4294901760
  %v1450 = vsub.f32 %v85, %v1449
  %1451 = vmatpush2.msra.mxu0 %v1450
  %1452 = vmatprep.subr.mxu0 0.0
  %v1453 = vand.u32 %v84, 4294901760
  %v1454 = vsub.f32 %v84, %v1453
  %1455 = vmatpush2.msra.mxu0 %v1454
  %1456 = vmatprep.subr.mxu0 0.0
  %v1457 = vand.u32 %v83, 4294901760
  %v1458 = vsub.f32 %v83, %v1457
  %1459 = vmatpush2.msra.mxu0 %v1458
  %1460 = vmatprep.subr.mxu0 0.0
  %v1461 = vand.u32 %v82, 4294901760
  %v1462 = vsub.f32 %v82, %v1461
  %1463 = vmatpush2.msra.mxu0 %v1462
  %1464 = vmatprep.subr.mxu0 0.0
  %v1465 = vand.u32 %v81, 4294901760
  %v1466 = vsub.f32 %v81, %v1465
  %1467 = vmatpush2.msra.mxu0 %v1466
  %1468 = vmatprep.subr.mxu0 0.0
  %v1469 = vand.u32 %v80, 4294901760
  %v1470 = vsub.f32 %v80, %v1469
  %1471 = vmatpush2.msra.mxu0 %v1470
  %1472 = vmatprep.subr.mxu0 0.0
  %v1473 = vand.u32 %v79, 4294901760
  %v1474 = vsub.f32 %v79, %v1473
  %1475 = vmatpush2.msra.mxu0 %v1474
  %1476 = vmatprep.subr.mxu0 0.0
  %v1477 = vand.u32 %v78, 4294901760
  %v1478 = vsub.f32 %v78, %v1477
  %1479 = vmatpush2.msra.mxu0 %v1478
  %1480 = vmatprep.subr.mxu0 0.0
  %v1481 = vand.u32 %v77, 4294901760
  %v1482 = vsub.f32 %v77, %v1481
  %1483 = vmatpush2.msra.mxu0 %v1482
  %1484 = vmatprep.subr.mxu0 0.0
  %v1485 = vand.u32 %v76, 4294901760
  %v1486 = vsub.f32 %v76, %v1485
  %1487 = vmatpush2.msra.mxu0 %v1486
  %1488 = vmatprep.subr.mxu0 0.0
  %v1489 = vand.u32 %v75, 4294901760
  %v1490 = vsub.f32 %v75, %v1489
  %1491 = vmatpush2.msra.mxu0 %v1490
  %1492 = vmatprep.subr.mxu0 0.0
  %v1493 = vand.u32 %v74, 4294901760
  %v1494 = vsub.f32 %v74, %v1493
  %1495 = vmatpush2.msra.mxu0 %v1494
  %1496 = vmatprep.subr.mxu0 0.0
  %v1497 = vand.u32 %v73, 4294901760
  %v1498 = vsub.f32 %v73, %v1497
  %1499 = vmatpush2.msra.mxu0 %v1498
  %1500 = vmatprep.subr.mxu0 0.0
  %v1501 = vand.u32 %v72, 4294901760
  %v1502 = vsub.f32 %v72, %v1501
  %1503 = vmatpush2.msra.mxu0 %v1502
  %v1504 = vand.u32 %v18, 4294901760
  %v1505 = vsub.f32 %v18, %v1504
  %1506 = vmatprep.mubr.f32.mxu0 %v1505
  %v1507 = vand.u32 %v17, 4294901760
  %v1508 = vsub.f32 %v17, %v1507
  %1509 = vmatmul.mubr.f32.gmra.mxu0 %v1508
  %v1510 = vpop.f32.mrf.mxu0
  %v1511 = vadd.f32 %v1373, %v1510
  %v1512 = vpop.f32.mrf.mxu0
  %1513 = vdwg.mxu0
  %1514 = vmatprep.subr.mxu0 0.0
  %v1515 = vand.u32 %v71, 4294901760
  %1516 = vmatpush1.msra.mxu0 %v1515
  %1517 = vmatprep.subr.mxu0 0.0
  %v1518 = vand.u32 %v70, 4294901760
  %1519 = vmatpush1.msra.mxu0 %v1518
  %1520 = vmatprep.subr.mxu0 0.0
  %v1521 = vand.u32 %v69, 4294901760
  %1522 = vmatpush1.msra.mxu0 %v1521
  %1523 = vmatprep.subr.mxu0 0.0
  %v1524 = vand.u32 %v68, 4294901760
  %1525 = vmatpush1.msra.mxu0 %v1524
  %1526 = vmatprep.subr.mxu0 0.0
  %v1527 = vand.u32 %v67, 4294901760
  %1528 = vmatpush1.msra.mxu0 %v1527
  %1529 = vmatprep.subr.mxu0 0.0
  %v1530 = vand.u32 %v66, 4294901760
  %1531 = vmatpush1.msra.mxu0 %v1530
  %1532 = vmatprep.subr.mxu0 0.0
  %v1533 = vand.u32 %v65, 4294901760
  %1534 = vmatpush1.msra.mxu0 %v1533
  %1535 = vmatprep.subr.mxu0 0.0
  %v1536 = vand.u32 %v64, 4294901760
  %1537 = vmatpush1.msra.mxu0 %v1536
  %1538 = vmatprep.subr.mxu0 0.0
  %v1539 = vand.u32 %v63, 4294901760
  %1540 = vmatpush1.msra.mxu0 %v1539
  %1541 = vmatprep.subr.mxu0 0.0
  %v1542 = vand.u32 %v62, 4294901760
  %1543 = vmatpush1.msra.mxu0 %v1542
  %1544 = vmatprep.subr.mxu0 0.0
  %v1545 = vand.u32 %v61, 4294901760
  %1546 = vmatpush1.msra.mxu0 %v1545
  %1547 = vmatprep.subr.mxu0 0.0
  %v1548 = vand.u32 %v60, 4294901760
  %1549 = vmatpush1.msra.mxu0 %v1548
  %1550 = vmatprep.subr.mxu0 0.0
  %v1551 = vand.u32 %v59, 4294901760
  %1552 = vmatpush1.msra.mxu0 %v1551
  %1553 = vmatprep.subr.mxu0 0.0
  %v1554 = vand.u32 %v58, 4294901760
  %1555 = vmatpush1.msra.mxu0 %v1554
  %1556 = vmatprep.subr.mxu0 0.0
  %v1557 = vand.u32 %v57, 4294901760
  %1558 = vmatpush1.msra.mxu0 %v1557
  %1559 = vmatprep.subr.mxu0 0.0
  %v1560 = vand.u32 %v56, 4294901760
  %1561 = vmatpush1.msra.mxu0 %v1560
  %1562 = vmatprep.subr.mxu0 0.0
  %v1563 = vand.u32 %v87, 4294901760
  %1564 = vmatpush2.msra.mxu0 %v1563
  %1565 = vmatprep.subr.mxu0 0.0
  %v1566 = vand.u32 %v86, 4294901760
  %1567 = vmatpush2.msra.mxu0 %v1566
  %1568 = vmatprep.subr.mxu0 0.0
  %v1569 = vand.u32 %v85, 4294901760
  %1570 = vmatpush2.msra.mxu0 %v1569
  %1571 = vmatprep.subr.mxu0 0.0
  %v1572 = vand.u32 %v84, 4294901760
  %1573 = vmatpush2.msra.mxu0 %v1572
  %1574 = vmatprep.subr.mxu0 0.0
  %v1575 = vand.u32 %v83, 4294901760
  %1576 = vmatpush2.msra.mxu0 %v1575
  %1577 = vmatprep.subr.mxu0 0.0
  %v1578 = vand.u32 %v82, 4294901760
  %1579 = vmatpush2.msra.mxu0 %v1578
  %1580 = vmatprep.subr.mxu0 0.0
  %v1581 = vand.u32 %v81, 4294901760
  %1582 = vmatpush2.msra.mxu0 %v1581
  %1583 = vmatprep.subr.mxu0 0.0
  %v1584 = vand.u32 %v80, 4294901760
  %1585 = vmatpush2.msra.mxu0 %v1584
  %1586 = vmatprep.subr.mxu0 0.0
  %v1587 = vand.u32 %v79, 4294901760
  %1588 = vmatpush2.msra.mxu0 %v1587
  %1589 = vmatprep.subr.mxu0 0.0
  %v1590 = vand.u32 %v78, 4294901760
  %1591 = vmatpush2.msra.mxu0 %v1590
  %1592 = vmatprep.subr.mxu0 0.0
  %v1593 = vand.u32 %v77, 4294901760
  %1594 = vmatpush2.msra.mxu0 %v1593
  %1595 = vmatprep.subr.mxu0 0.0
  %v1596 = vand.u32 %v76, 4294901760
  %1597 = vmatpush2.msra.mxu0 %v1596
  %1598 = vmatprep.subr.mxu0 0.0
  %v1599 = vand.u32 %v75, 4294901760
  %1600 = vmatpush2.msra.mxu0 %v1599
  %1601 = vmatprep.subr.mxu0 0.0
  %v1602 = vand.u32 %v74, 4294901760
  %1603 = vmatpush2.msra.mxu0 %v1602
  %1604 = vmatprep.subr.mxu0 0.0
  %v1605 = vand.u32 %v73, 4294901760
  %1606 = vmatpush2.msra.mxu0 %v1605
  %1607 = vmatprep.subr.mxu0 0.0
  %v1608 = vand.u32 %v72, 4294901760
  %1609 = vmatpush2.msra.mxu0 %v1608
  %v1610 = vand.u32 %v18, 4294901760
  %v1611 = vsub.f32 %v18, %v1610
  %v1612 = vand.u32 %v1611, 4294901760
  %1613 = vmatprep.mubr.f32.mxu0 %v1612
  %v1614 = vand.u32 %v17, 4294901760
  %v1615 = vsub.f32 %v17, %v1614
  %v1616 = vand.u32 %v1615, 4294901760
  %1617 = vmatmul.mubr.f32.gmra.mxu0 %v1616
  %v1618 = vpop.f32.mrf.mxu0
  %v1619 = vadd.f32 %v1511, %v1618
  %v1620 = vpop.f32.mrf.mxu0
  %1621 = vdwg.mxu0
  %1622 = vmatprep.subr.mxu0 0.0
  %v1623 = vand.u32 %v71, 4294901760
  %v1624 = vsub.f32 %v71, %v1623
  %v1625 = vand.u32 %v1624, 4294901760
  %1626 = vmatpush1.msra.mxu0 %v1625
  %1627 = vmatprep.subr.mxu0 0.0
  %v1628 = vand.u32 %v70, 4294901760
  %v1629 = vsub.f32 %v70, %v1628
  %v1630 = vand.u32 %v1629, 4294901760
  %1631 = vmatpush1.msra.mxu0 %v1630
  %1632 = vmatprep.subr.mxu0 0.0
  %v1633 = vand.u32 %v69, 4294901760
  %v1634 = vsub.f32 %v69, %v1633
  %v1635 = vand.u32 %v1634, 4294901760
  %1636 = vmatpush1.msra.mxu0 %v1635
  %1637 = vmatprep.subr.mxu0 0.0
  %v1638 = vand.u32 %v68, 4294901760
  %v1639 = vsub.f32 %v68, %v1638
  %v1640 = vand.u32 %v1639, 4294901760
  %1641 = vmatpush1.msra.mxu0 %v1640
  %1642 = vmatprep.subr.mxu0 0.0
  %v1643 = vand.u32 %v67, 4294901760
  %v1644 = vsub.f32 %v67, %v1643
  %v1645 = vand.u32 %v1644, 4294901760
  %1646 = vmatpush1.msra.mxu0 %v1645
  %1647 = vmatprep.subr.mxu0 0.0
  %v1648 = vand.u32 %v66, 4294901760
  %v1649 = vsub.f32 %v66, %v1648
  %v1650 = vand.u32 %v1649, 4294901760
  %1651 = vmatpush1.msra.mxu0 %v1650
  %1652 = vmatprep.subr.mxu0 0.0
  %v1653 = vand.u32 %v65, 4294901760
  %v1654 = vsub.f32 %v65, %v1653
  %v1655 = vand.u32 %v1654, 4294901760
  %1656 = vmatpush1.msra.mxu0 %v1655
  %1657 = vmatprep.subr.mxu0 0.0
  %v1658 = vand.u32 %v64, 4294901760
  %v1659 = vsub.f32 %v64, %v1658
  %v1660 = vand.u32 %v1659, 4294901760
  %1661 = vmatpush1.msra.mxu0 %v1660
  %1662 = vmatprep.subr.mxu0 0.0
  %v1663 = vand.u32 %v63, 4294901760
  %v1664 = vsub.f32 %v63, %v1663
  %v1665 = vand.u32 %v1664, 4294901760
  %1666 = vmatpush1.msra.mxu0 %v1665
  %1667 = vmatprep.subr.mxu0 0.0
  %v1668 = vand.u32 %v62, 4294901760
  %v1669 = vsub.f32 %v62, %v1668
  %v1670 = vand.u32 %v1669, 4294901760
  %1671 = vmatpush1.msra.mxu0 %v1670
  %1672 = vmatprep.subr.mxu0 0.0
  %v1673 = vand.u32 %v61, 4294901760
  %v1674 = vsub.f32 %v61, %v1673
  %v1675 = vand.u32 %v1674, 4294901760
  %1676 = vmatpush1.msra.mxu0 %v1675
  %1677 = vmatprep.subr.mxu0 0.0
  %v1678 = vand.u32 %v60, 4294901760
  %v1679 = vsub.f32 %v60, %v1678
  %v1680 = vand.u32 %v1679, 4294901760
  %1681 = vmatpush1.msra.mxu0 %v1680
  %1682 = vmatprep.subr.mxu0 0.0
  %v1683 = vand.u32 %v59, 4294901760
  %v1684 = vsub.f32 %v59, %v1683
  %v1685 = vand.u32 %v1684, 4294901760
  %1686 = vmatpush1.msra.mxu0 %v1685
  %1687 = vmatprep.subr.mxu0 0.0
  %v1688 = vand.u32 %v58, 4294901760
  %v1689 = vsub.f32 %v58, %v1688
  %v1690 = vand.u32 %v1689, 4294901760
  %1691 = vmatpush1.msra.mxu0 %v1690
  %1692 = vmatprep.subr.mxu0 0.0
  %v1693 = vand.u32 %v57, 4294901760
  %v1694 = vsub.f32 %v57, %v1693
  %v1695 = vand.u32 %v1694, 4294901760
  %1696 = vmatpush1.msra.mxu0 %v1695
  %1697 = vmatprep.subr.mxu0 0.0
  %v1698 = vand.u32 %v56, 4294901760
  %v1699 = vsub.f32 %v56, %v1698
  %v1700 = vand.u32 %v1699, 4294901760
  %1701 = vmatpush1.msra.mxu0 %v1700
  %1702 = vmatprep.subr.mxu0 0.0
  %v1703 = vand.u32 %v87, 4294901760
  %v1704 = vsub.f32 %v87, %v1703
  %v1705 = vand.u32 %v1704, 4294901760
  %1706 = vmatpush2.msra.mxu0 %v1705
  %1707 = vmatprep.subr.mxu0 0.0
  %v1708 = vand.u32 %v86, 4294901760
  %v1709 = vsub.f32 %v86, %v1708
  %v1710 = vand.u32 %v1709, 4294901760
  %1711 = vmatpush2.msra.mxu0 %v1710
  %1712 = vmatprep.subr.mxu0 0.0
  %v1713 = vand.u32 %v85, 4294901760
  %v1714 = vsub.f32 %v85, %v1713
  %v1715 = vand.u32 %v1714, 4294901760
  %1716 = vmatpush2.msra.mxu0 %v1715
  %1717 = vmatprep.subr.mxu0 0.0
  %v1718 = vand.u32 %v84, 4294901760
  %v1719 = vsub.f32 %v84, %v1718
  %v1720 = vand.u32 %v1719, 4294901760
  %1721 = vmatpush2.msra.mxu0 %v1720
  %1722 = vmatprep.subr.mxu0 0.0
  %v1723 = vand.u32 %v83, 4294901760
  %v1724 = vsub.f32 %v83, %v1723
  %v1725 = vand.u32 %v1724, 4294901760
  %1726 = vmatpush2.msra.mxu0 %v1725
  %1727 = vmatprep.subr.mxu0 0.0
  %v1728 = vand.u32 %v82, 4294901760
  %v1729 = vsub.f32 %v82, %v1728
  %v1730 = vand.u32 %v1729, 4294901760
  %1731 = vmatpush2.msra.mxu0 %v1730
  %1732 = vmatprep.subr.mxu0 0.0
  %v1733 = vand.u32 %v81, 4294901760
  %v1734 = vsub.f32 %v81, %v1733
  %v1735 = vand.u32 %v1734, 4294901760
  %1736 = vmatpush2.msra.mxu0 %v1735
  %1737 = vmatprep.subr.mxu0 0.0
  %v1738 = vand.u32 %v80, 4294901760
  %v1739 = vsub.f32 %v80, %v1738
  %v1740 = vand.u32 %v1739, 4294901760
  %1741 = vmatpush2.msra.mxu0 %v1740
  %1742 = vmatprep.subr.mxu0 0.0
  %v1743 = vand.u32 %v79, 4294901760
  %v1744 = vsub.f32 %v79, %v1743
  %v1745 = vand.u32 %v1744, 4294901760
  %1746 = vmatpush2.msra.mxu0 %v1745
  %1747 = vmatprep.subr.mxu0 0.0
  %v1748 = vand.u32 %v78, 4294901760
  %v1749 = vsub.f32 %v78, %v1748
  %v1750 = vand.u32 %v1749, 4294901760
  %1751 = vmatpush2.msra.mxu0 %v1750
  %1752 = vmatprep.subr.mxu0 0.0
  %v1753 = vand.u32 %v77, 4294901760
  %v1754 = vsub.f32 %v77, %v1753
  %v1755 = vand.u32 %v1754, 4294901760
  %1756 = vmatpush2.msra.mxu0 %v1755
  %1757 = vmatprep.subr.mxu0 0.0
  %v1758 = vand.u32 %v76, 4294901760
  %v1759 = vsub.f32 %v76, %v1758
  %v1760 = vand.u32 %v1759, 4294901760
  %1761 = vmatpush2.msra.mxu0 %v1760
  %1762 = vmatprep.subr.mxu0 0.0
  %v1763 = vand.u32 %v75, 4294901760
  %v1764 = vsub.f32 %v75, %v1763
  %v1765 = vand.u32 %v1764, 4294901760
  %1766 = vmatpush2.msra.mxu0 %v1765
  %1767 = vmatprep.subr.mxu0 0.0
  %v1768 = vand.u32 %v74, 4294901760
  %v1769 = vsub.f32 %v74, %v1768
  %v1770 = vand.u32 %v1769, 4294901760
  %1771 = vmatpush2.msra.mxu0 %v1770
  %1772 = vmatprep.subr.mxu0 0.0
  %v1773 = vand.u32 %v73, 4294901760
  %v1774 = vsub.f32 %v73, %v1773
  %v1775 = vand.u32 %v1774, 4294901760
  %1776 = vmatpush2.msra.mxu0 %v1775
  %1777 = vmatprep.subr.mxu0 0.0
  %v1778 = vand.u32 %v72, 4294901760
  %v1779 = vsub.f32 %v72, %v1778
  %v1780 = vand.u32 %v1779, 4294901760
  %1781 = vmatpush2.msra.mxu0 %v1780
  %v1782 = vand.u32 %v18, 4294901760
  %1783 = vmatprep.mubr.f32.mxu0 %v1782
  %v1784 = vand.u32 %v17, 4294901760
  %1785 = vmatmul.mubr.f32.gmra.mxu0 %v1784
  %v1786 = vpop.f32.mrf.mxu0
  %v1787 = vadd.f32 %v1619, %v1786
  %v1788 = vpop.f32.mrf.mxu0
  %1789 = vdwg.mxu0
  %1790 = vmatprep.subr.mxu0 0.0
  %v1791 = vand.u32 %v71, 4294901760
  %1792 = vmatpush1.msra.mxu0 %v1791
  %1793 = vmatprep.subr.mxu0 0.0
  %v1794 = vand.u32 %v70, 4294901760
  %1795 = vmatpush1.msra.mxu0 %v1794
  %1796 = vmatprep.subr.mxu0 0.0
  %v1797 = vand.u32 %v69, 4294901760
  %1798 = vmatpush1.msra.mxu0 %v1797
  %1799 = vmatprep.subr.mxu0 0.0
  %v1800 = vand.u32 %v68, 4294901760
  %1801 = vmatpush1.msra.mxu0 %v1800
  %1802 = vmatprep.subr.mxu0 0.0
  %v1803 = vand.u32 %v67, 4294901760
  %1804 = vmatpush1.msra.mxu0 %v1803
  %1805 = vmatprep.subr.mxu0 0.0
  %v1806 = vand.u32 %v66, 4294901760
  %1807 = vmatpush1.msra.mxu0 %v1806
  %1808 = vmatprep.subr.mxu0 0.0
  %v1809 = vand.u32 %v65, 4294901760
  %1810 = vmatpush1.msra.mxu0 %v1809
  %1811 = vmatprep.subr.mxu0 0.0
  %v1812 = vand.u32 %v64, 4294901760
  %1813 = vmatpush1.msra.mxu0 %v1812
  %1814 = vmatprep.subr.mxu0 0.0
  %v1815 = vand.u32 %v63, 4294901760
  %1816 = vmatpush1.msra.mxu0 %v1815
  %1817 = vmatprep.subr.mxu0 0.0
  %v1818 = vand.u32 %v62, 4294901760
  %1819 = vmatpush1.msra.mxu0 %v1818
  %1820 = vmatprep.subr.mxu0 0.0
  %v1821 = vand.u32 %v61, 4294901760
  %1822 = vmatpush1.msra.mxu0 %v1821
  %1823 = vmatprep.subr.mxu0 0.0
  %v1824 = vand.u32 %v60, 4294901760
  %1825 = vmatpush1.msra.mxu0 %v1824
  %1826 = vmatprep.subr.mxu0 0.0
  %v1827 = vand.u32 %v59, 4294901760
  %1828 = vmatpush1.msra.mxu0 %v1827
  %1829 = vmatprep.subr.mxu0 0.0
  %v1830 = vand.u32 %v58, 4294901760
  %1831 = vmatpush1.msra.mxu0 %v1830
  %1832 = vmatprep.subr.mxu0 0.0
  %v1833 = vand.u32 %v57, 4294901760
  %1834 = vmatpush1.msra.mxu0 %v1833
  %1835 = vmatprep.subr.mxu0 0.0
  %v1836 = vand.u32 %v56, 4294901760
  %1837 = vmatpush1.msra.mxu0 %v1836
  %1838 = vmatprep.subr.mxu0 0.0
  %v1839 = vand.u32 %v87, 4294901760
  %1840 = vmatpush2.msra.mxu0 %v1839
  %1841 = vmatprep.subr.mxu0 0.0
  %v1842 = vand.u32 %v86, 4294901760
  %1843 = vmatpush2.msra.mxu0 %v1842
  %1844 = vmatprep.subr.mxu0 0.0
  %v1845 = vand.u32 %v85, 4294901760
  %1846 = vmatpush2.msra.mxu0 %v1845
  %1847 = vmatprep.subr.mxu0 0.0
  %v1848 = vand.u32 %v84, 4294901760
  %1849 = vmatpush2.msra.mxu0 %v1848
  %1850 = vmatprep.subr.mxu0 0.0
  %v1851 = vand.u32 %v83, 4294901760
  %1852 = vmatpush2.msra.mxu0 %v1851
  %1853 = vmatprep.subr.mxu0 0.0
  %v1854 = vand.u32 %v82, 4294901760
  %1855 = vmatpush2.msra.mxu0 %v1854
  %1856 = vmatprep.subr.mxu0 0.0
  %v1857 = vand.u32 %v81, 4294901760
  %1858 = vmatpush2.msra.mxu0 %v1857
  %1859 = vmatprep.subr.mxu0 0.0
  %v1860 = vand.u32 %v80, 4294901760
  %1861 = vmatpush2.msra.mxu0 %v1860
  %1862 = vmatprep.subr.mxu0 0.0
  %v1863 = vand.u32 %v79, 4294901760
  %1864 = vmatpush2.msra.mxu0 %v1863
  %1865 = vmatprep.subr.mxu0 0.0
  %v1866 = vand.u32 %v78, 4294901760
  %1867 = vmatpush2.msra.mxu0 %v1866
  %1868 = vmatprep.subr.mxu0 0.0
  %v1869 = vand.u32 %v77, 4294901760
  %1870 = vmatpush2.msra.mxu0 %v1869
  %1871 = vmatprep.subr.mxu0 0.0
  %v1872 = vand.u32 %v76, 4294901760
  %1873 = vmatpush2.msra.mxu0 %v1872
  %1874 = vmatprep.subr.mxu0 0.0
  %v1875 = vand.u32 %v75, 4294901760
  %1876 = vmatpush2.msra.mxu0 %v1875
  %1877 = vmatprep.subr.mxu0 0.0
  %v1878 = vand.u32 %v74, 4294901760
  %1879 = vmatpush2.msra.mxu0 %v1878
  %1880 = vmatprep.subr.mxu0 0.0
  %v1881 = vand.u32 %v73, 4294901760
  %1882 = vmatpush2.msra.mxu0 %v1881
  %1883 = vmatprep.subr.mxu0 0.0
  %v1884 = vand.u32 %v72, 4294901760
  %1885 = vmatpush2.msra.mxu0 %v1884
  %v1886 = vand.u32 %v18, 4294901760
  %1887 = vmatprep.mubr.f32.mxu0 %v1886
  %v1888 = vand.u32 %v17, 4294901760
  %1889 = vmatmul.mubr.f32.gmra.mxu0 %v1888
  %v1890 = vpop.f32.mrf.mxu0
  %v1891 = vadd.f32 %v1787, %v1890
  %v1892 = vpop.f32.mrf.mxu0
  %1893 = vdwg.mxu0
  %1894 = vmatprep.subr.mxu0 0.0
  %v1895 = vand.u32 %v103, 4294901760
  %1896 = vmatpush1.msra.mxu0 %v1895
  %1897 = vmatprep.subr.mxu0 0.0
  %v1898 = vand.u32 %v102, 4294901760
  %1899 = vmatpush1.msra.mxu0 %v1898
  %1900 = vmatprep.subr.mxu0 0.0
  %v1901 = vand.u32 %v101, 4294901760
  %1902 = vmatpush1.msra.mxu0 %v1901
  %1903 = vmatprep.subr.mxu0 0.0
  %v1904 = vand.u32 %v100, 4294901760
  %1905 = vmatpush1.msra.mxu0 %v1904
  %1906 = vmatprep.subr.mxu0 0.0
  %v1907 = vand.u32 %v99, 4294901760
  %1908 = vmatpush1.msra.mxu0 %v1907
  %1909 = vmatprep.subr.mxu0 0.0
  %v1910 = vand.u32 %v98, 4294901760
  %1911 = vmatpush1.msra.mxu0 %v1910
  %1912 = vmatprep.subr.mxu0 0.0
  %v1913 = vand.u32 %v97, 4294901760
  %1914 = vmatpush1.msra.mxu0 %v1913
  %1915 = vmatprep.subr.mxu0 0.0
  %v1916 = vand.u32 %v96, 4294901760
  %1917 = vmatpush1.msra.mxu0 %v1916
  %1918 = vmatprep.subr.mxu0 0.0
  %v1919 = vand.u32 %v95, 4294901760
  %1920 = vmatpush1.msra.mxu0 %v1919
  %1921 = vmatprep.subr.mxu0 0.0
  %v1922 = vand.u32 %v94, 4294901760
  %1923 = vmatpush1.msra.mxu0 %v1922
  %1924 = vmatprep.subr.mxu0 0.0
  %v1925 = vand.u32 %v93, 4294901760
  %1926 = vmatpush1.msra.mxu0 %v1925
  %1927 = vmatprep.subr.mxu0 0.0
  %v1928 = vand.u32 %v92, 4294901760
  %1929 = vmatpush1.msra.mxu0 %v1928
  %1930 = vmatprep.subr.mxu0 0.0
  %v1931 = vand.u32 %v91, 4294901760
  %1932 = vmatpush1.msra.mxu0 %v1931
  %1933 = vmatprep.subr.mxu0 0.0
  %v1934 = vand.u32 %v90, 4294901760
  %1935 = vmatpush1.msra.mxu0 %v1934
  %1936 = vmatprep.subr.mxu0 0.0
  %v1937 = vand.u32 %v89, 4294901760
  %1938 = vmatpush1.msra.mxu0 %v1937
  %1939 = vmatprep.subr.mxu0 0.0
  %v1940 = vand.u32 %v88, 4294901760
  %1941 = vmatpush1.msra.mxu0 %v1940
  %1942 = vmatprep.subr.mxu0 0.0
  %v1943 = vand.u32 %v119, 4294901760
  %1944 = vmatpush2.msra.mxu0 %v1943
  %1945 = vmatprep.subr.mxu0 0.0
  %v1946 = vand.u32 %v118, 4294901760
  %1947 = vmatpush2.msra.mxu0 %v1946
  %1948 = vmatprep.subr.mxu0 0.0
  %v1949 = vand.u32 %v117, 4294901760
  %1950 = vmatpush2.msra.mxu0 %v1949
  %1951 = vmatprep.subr.mxu0 0.0
  %v1952 = vand.u32 %v116, 4294901760
  %1953 = vmatpush2.msra.mxu0 %v1952
  %1954 = vmatprep.subr.mxu0 0.0
  %v1955 = vand.u32 %v115, 4294901760
  %1956 = vmatpush2.msra.mxu0 %v1955
  %1957 = vmatprep.subr.mxu0 0.0
  %v1958 = vand.u32 %v114, 4294901760
  %1959 = vmatpush2.msra.mxu0 %v1958
  %1960 = vmatprep.subr.mxu0 0.0
  %v1961 = vand.u32 %v113, 4294901760
  %1962 = vmatpush2.msra.mxu0 %v1961
  %1963 = vmatprep.subr.mxu0 0.0
  %v1964 = vand.u32 %v112, 4294901760
  %1965 = vmatpush2.msra.mxu0 %v1964
  %1966 = vmatprep.subr.mxu0 0.0
  %v1967 = vand.u32 %v111, 4294901760
  %1968 = vmatpush2.msra.mxu0 %v1967
  %1969 = vmatprep.subr.mxu0 0.0
  %v1970 = vand.u32 %v110, 4294901760
  %1971 = vmatpush2.msra.mxu0 %v1970
  %1972 = vmatprep.subr.mxu0 0.0
  %v1973 = vand.u32 %v109, 4294901760
  %1974 = vmatpush2.msra.mxu0 %v1973
  %1975 = vmatprep.subr.mxu0 0.0
  %v1976 = vand.u32 %v108, 4294901760
  %1977 = vmatpush2.msra.mxu0 %v1976
  %1978 = vmatprep.subr.mxu0 0.0
  %v1979 = vand.u32 %v107, 4294901760
  %1980 = vmatpush2.msra.mxu0 %v1979
  %1981 = vmatprep.subr.mxu0 0.0
  %v1982 = vand.u32 %v106, 4294901760
  %1983 = vmatpush2.msra.mxu0 %v1982
  %1984 = vmatprep.subr.mxu0 0.0
  %v1985 = vand.u32 %v105, 4294901760
  %1986 = vmatpush2.msra.mxu0 %v1985
  %1987 = vmatprep.subr.mxu0 0.0
  %v1988 = vand.u32 %v104, 4294901760
  %1989 = vmatpush2.msra.mxu0 %v1988
  %v1990 = vand.u32 %v20, 4294901760
  %v1991 = vsub.f32 %v20, %v1990
  %v1992 = vand.u32 %v1991, 4294901760
  %v1993 = vsub.f32 %v1991, %v1992
  %v1994 = vand.u32 %v1993, 4294901760
  %1995 = vmatprep.mubr.f32.mxu0 %v1994
  %v1996 = vand.u32 %v19, 4294901760
  %v1997 = vsub.f32 %v19, %v1996
  %v1998 = vand.u32 %v1997, 4294901760
  %v1999 = vsub.f32 %v1997, %v1998
  %v2000 = vand.u32 %v1999, 4294901760
  %2001 = vmatmul.mubr.f32.gmra.mxu0 %v2000
  %v2002 = vpop.f32.mrf.mxu0
  %v2003 = vadd.f32 %v1891, %v2002
  %v2004 = vpop.f32.mrf.mxu0
  %2005 = vdwg.mxu0
  %2006 = vmatprep.subr.mxu0 0.0
  %v2007 = vand.u32 %v103, 4294901760
  %v2008 = vsub.f32 %v103, %v2007
  %v2009 = vand.u32 %v2008, 4294901760
  %v2010 = vsub.f32 %v2008, %v2009
  %v2011 = vand.u32 %v2010, 4294901760
  %2012 = vmatpush1.msra.mxu0 %v2011
  %2013 = vmatprep.subr.mxu0 0.0
  %v2014 = vand.u32 %v102, 4294901760
  %v2015 = vsub.f32 %v102, %v2014
  %v2016 = vand.u32 %v2015, 4294901760
  %v2017 = vsub.f32 %v2015, %v2016
  %v2018 = vand.u32 %v2017, 4294901760
  %2019 = vmatpush1.msra.mxu0 %v2018
  %2020 = vmatprep.subr.mxu0 0.0
  %v2021 = vand.u32 %v101, 4294901760
  %v2022 = vsub.f32 %v101, %v2021
  %v2023 = vand.u32 %v2022, 4294901760
  %v2024 = vsub.f32 %v2022, %v2023
  %v2025 = vand.u32 %v2024, 4294901760
  %2026 = vmatpush1.msra.mxu0 %v2025
  %2027 = vmatprep.subr.mxu0 0.0
  %v2028 = vand.u32 %v100, 4294901760
  %v2029 = vsub.f32 %v100, %v2028
  %v2030 = vand.u32 %v2029, 4294901760
  %v2031 = vsub.f32 %v2029, %v2030
  %v2032 = vand.u32 %v2031, 4294901760
  %2033 = vmatpush1.msra.mxu0 %v2032
  %2034 = vmatprep.subr.mxu0 0.0
  %v2035 = vand.u32 %v99, 4294901760
  %v2036 = vsub.f32 %v99, %v2035
  %v2037 = vand.u32 %v2036, 4294901760
  %v2038 = vsub.f32 %v2036, %v2037
  %v2039 = vand.u32 %v2038, 4294901760
  %2040 = vmatpush1.msra.mxu0 %v2039
  %2041 = vmatprep.subr.mxu0 0.0
  %v2042 = vand.u32 %v98, 4294901760
  %v2043 = vsub.f32 %v98, %v2042
  %v2044 = vand.u32 %v2043, 4294901760
  %v2045 = vsub.f32 %v2043, %v2044
  %v2046 = vand.u32 %v2045, 4294901760
  %2047 = vmatpush1.msra.mxu0 %v2046
  %2048 = vmatprep.subr.mxu0 0.0
  %v2049 = vand.u32 %v97, 4294901760
  %v2050 = vsub.f32 %v97, %v2049
  %v2051 = vand.u32 %v2050, 4294901760
  %v2052 = vsub.f32 %v2050, %v2051
  %v2053 = vand.u32 %v2052, 4294901760
  %2054 = vmatpush1.msra.mxu0 %v2053
  %2055 = vmatprep.subr.mxu0 0.0
  %v2056 = vand.u32 %v96, 4294901760
  %v2057 = vsub.f32 %v96, %v2056
  %v2058 = vand.u32 %v2057, 4294901760
  %v2059 = vsub.f32 %v2057, %v2058
  %v2060 = vand.u32 %v2059, 4294901760
  %2061 = vmatpush1.msra.mxu0 %v2060
  %2062 = vmatprep.subr.mxu0 0.0
  %v2063 = vand.u32 %v95, 4294901760
  %v2064 = vsub.f32 %v95, %v2063
  %v2065 = vand.u32 %v2064, 4294901760
  %v2066 = vsub.f32 %v2064, %v2065
  %v2067 = vand.u32 %v2066, 4294901760
  %2068 = vmatpush1.msra.mxu0 %v2067
  %2069 = vmatprep.subr.mxu0 0.0
  %v2070 = vand.u32 %v94, 4294901760
  %v2071 = vsub.f32 %v94, %v2070
  %v2072 = vand.u32 %v2071, 4294901760
  %v2073 = vsub.f32 %v2071, %v2072
  %v2074 = vand.u32 %v2073, 4294901760
  %2075 = vmatpush1.msra.mxu0 %v2074
  %2076 = vmatprep.subr.mxu0 0.0
  %v2077 = vand.u32 %v93, 4294901760
  %v2078 = vsub.f32 %v93, %v2077
  %v2079 = vand.u32 %v2078, 4294901760
  %v2080 = vsub.f32 %v2078, %v2079
  %v2081 = vand.u32 %v2080, 4294901760
  %2082 = vmatpush1.msra.mxu0 %v2081
  %2083 = vmatprep.subr.mxu0 0.0
  %v2084 = vand.u32 %v92, 4294901760
  %v2085 = vsub.f32 %v92, %v2084
  %v2086 = vand.u32 %v2085, 4294901760
  %v2087 = vsub.f32 %v2085, %v2086
  %v2088 = vand.u32 %v2087, 4294901760
  %2089 = vmatpush1.msra.mxu0 %v2088
  %2090 = vmatprep.subr.mxu0 0.0
  %v2091 = vand.u32 %v91, 4294901760
  %v2092 = vsub.f32 %v91, %v2091
  %v2093 = vand.u32 %v2092, 4294901760
  %v2094 = vsub.f32 %v2092, %v2093
  %v2095 = vand.u32 %v2094, 4294901760
  %2096 = vmatpush1.msra.mxu0 %v2095
  %2097 = vmatprep.subr.mxu0 0.0
  %v2098 = vand.u32 %v90, 4294901760
  %v2099 = vsub.f32 %v90, %v2098
  %v2100 = vand.u32 %v2099, 4294901760
  %v2101 = vsub.f32 %v2099, %v2100
  %v2102 = vand.u32 %v2101, 4294901760
  %2103 = vmatpush1.msra.mxu0 %v2102
  %2104 = vmatprep.subr.mxu0 0.0
  %v2105 = vand.u32 %v89, 4294901760
  %v2106 = vsub.f32 %v89, %v2105
  %v2107 = vand.u32 %v2106, 4294901760
  %v2108 = vsub.f32 %v2106, %v2107
  %v2109 = vand.u32 %v2108, 4294901760
  %2110 = vmatpush1.msra.mxu0 %v2109
  %2111 = vmatprep.subr.mxu0 0.0
  %v2112 = vand.u32 %v88, 4294901760
  %v2113 = vsub.f32 %v88, %v2112
  %v2114 = vand.u32 %v2113, 4294901760
  %v2115 = vsub.f32 %v2113, %v2114
  %v2116 = vand.u32 %v2115, 4294901760
  %2117 = vmatpush1.msra.mxu0 %v2116
  %2118 = vmatprep.subr.mxu0 0.0
  %v2119 = vand.u32 %v119, 4294901760
  %v2120 = vsub.f32 %v119, %v2119
  %v2121 = vand.u32 %v2120, 4294901760
  %v2122 = vsub.f32 %v2120, %v2121
  %v2123 = vand.u32 %v2122, 4294901760
  %2124 = vmatpush2.msra.mxu0 %v2123
  %2125 = vmatprep.subr.mxu0 0.0
  %v2126 = vand.u32 %v118, 4294901760
  %v2127 = vsub.f32 %v118, %v2126
  %v2128 = vand.u32 %v2127, 4294901760
  %v2129 = vsub.f32 %v2127, %v2128
  %v2130 = vand.u32 %v2129, 4294901760
  %2131 = vmatpush2.msra.mxu0 %v2130
  %2132 = vmatprep.subr.mxu0 0.0
  %v2133 = vand.u32 %v117, 4294901760
  %v2134 = vsub.f32 %v117, %v2133
  %v2135 = vand.u32 %v2134, 4294901760
  %v2136 = vsub.f32 %v2134, %v2135
  %v2137 = vand.u32 %v2136, 4294901760
  %2138 = vmatpush2.msra.mxu0 %v2137
  %2139 = vmatprep.subr.mxu0 0.0
  %v2140 = vand.u32 %v116, 4294901760
  %v2141 = vsub.f32 %v116, %v2140
  %v2142 = vand.u32 %v2141, 4294901760
  %v2143 = vsub.f32 %v2141, %v2142
  %v2144 = vand.u32 %v2143, 4294901760
  %2145 = vmatpush2.msra.mxu0 %v2144
  %2146 = vmatprep.subr.mxu0 0.0
  %v2147 = vand.u32 %v115, 4294901760
  %v2148 = vsub.f32 %v115, %v2147
  %v2149 = vand.u32 %v2148, 4294901760
  %v2150 = vsub.f32 %v2148, %v2149
  %v2151 = vand.u32 %v2150, 4294901760
  %2152 = vmatpush2.msra.mxu0 %v2151
  %2153 = vmatprep.subr.mxu0 0.0
  %v2154 = vand.u32 %v114, 4294901760
  %v2155 = vsub.f32 %v114, %v2154
  %v2156 = vand.u32 %v2155, 4294901760
  %v2157 = vsub.f32 %v2155, %v2156
  %v2158 = vand.u32 %v2157, 4294901760
  %2159 = vmatpush2.msra.mxu0 %v2158
  %2160 = vmatprep.subr.mxu0 0.0
  %v2161 = vand.u32 %v113, 4294901760
  %v2162 = vsub.f32 %v113, %v2161
  %v2163 = vand.u32 %v2162, 4294901760
  %v2164 = vsub.f32 %v2162, %v2163
  %v2165 = vand.u32 %v2164, 4294901760
  %2166 = vmatpush2.msra.mxu0 %v2165
  %2167 = vmatprep.subr.mxu0 0.0
  %v2168 = vand.u32 %v112, 4294901760
  %v2169 = vsub.f32 %v112, %v2168
  %v2170 = vand.u32 %v2169, 4294901760
  %v2171 = vsub.f32 %v2169, %v2170
  %v2172 = vand.u32 %v2171, 4294901760
  %2173 = vmatpush2.msra.mxu0 %v2172
  %2174 = vmatprep.subr.mxu0 0.0
  %v2175 = vand.u32 %v111, 4294901760
  %v2176 = vsub.f32 %v111, %v2175
  %v2177 = vand.u32 %v2176, 4294901760
  %v2178 = vsub.f32 %v2176, %v2177
  %v2179 = vand.u32 %v2178, 4294901760
  %2180 = vmatpush2.msra.mxu0 %v2179
  %2181 = vmatprep.subr.mxu0 0.0
  %v2182 = vand.u32 %v110, 4294901760
  %v2183 = vsub.f32 %v110, %v2182
  %v2184 = vand.u32 %v2183, 4294901760
  %v2185 = vsub.f32 %v2183, %v2184
  %v2186 = vand.u32 %v2185, 4294901760
  %2187 = vmatpush2.msra.mxu0 %v2186
  %2188 = vmatprep.subr.mxu0 0.0
  %v2189 = vand.u32 %v109, 4294901760
  %v2190 = vsub.f32 %v109, %v2189
  %v2191 = vand.u32 %v2190, 4294901760
  %v2192 = vsub.f32 %v2190, %v2191
  %v2193 = vand.u32 %v2192, 4294901760
  %2194 = vmatpush2.msra.mxu0 %v2193
  %2195 = vmatprep.subr.mxu0 0.0
  %v2196 = vand.u32 %v108, 4294901760
  %v2197 = vsub.f32 %v108, %v2196
  %v2198 = vand.u32 %v2197, 4294901760
  %v2199 = vsub.f32 %v2197, %v2198
  %v2200 = vand.u32 %v2199, 4294901760
  %2201 = vmatpush2.msra.mxu0 %v2200
  %2202 = vmatprep.subr.mxu0 0.0
  %v2203 = vand.u32 %v107, 4294901760
  %v2204 = vsub.f32 %v107, %v2203
  %v2205 = vand.u32 %v2204, 4294901760
  %v2206 = vsub.f32 %v2204, %v2205
  %v2207 = vand.u32 %v2206, 4294901760
  %2208 = vmatpush2.msra.mxu0 %v2207
  %2209 = vmatprep.subr.mxu0 0.0
  %v2210 = vand.u32 %v106, 4294901760
  %v2211 = vsub.f32 %v106, %v2210
  %v2212 = vand.u32 %v2211, 4294901760
  %v2213 = vsub.f32 %v2211, %v2212
  %v2214 = vand.u32 %v2213, 4294901760
  %2215 = vmatpush2.msra.mxu0 %v2214
  %2216 = vmatprep.subr.mxu0 0.0
  %v2217 = vand.u32 %v105, 4294901760
  %v2218 = vsub.f32 %v105, %v2217
  %v2219 = vand.u32 %v2218, 4294901760
  %v2220 = vsub.f32 %v2218, %v2219
  %v2221 = vand.u32 %v2220, 4294901760
  %2222 = vmatpush2.msra.mxu0 %v2221
  %2223 = vmatprep.subr.mxu0 0.0
  %v2224 = vand.u32 %v104, 4294901760
  %v2225 = vsub.f32 %v104, %v2224
  %v2226 = vand.u32 %v2225, 4294901760
  %v2227 = vsub.f32 %v2225, %v2226
  %v2228 = vand.u32 %v2227, 4294901760
  %2229 = vmatpush2.msra.mxu0 %v2228
  %v2230 = vand.u32 %v20, 4294901760
  %2231 = vmatprep.mubr.f32.mxu0 %v2230
  %v2232 = vand.u32 %v19, 4294901760
  %2233 = vmatmul.mubr.f32.gmra.mxu0 %v2232
  %v2234 = vpop.f32.mrf.mxu0
  %v2235 = vadd.f32 %v2003, %v2234
  %v2236 = vpop.f32.mrf.mxu0
  %2237 = vdwg.mxu0
  %2238 = vmatprep.subr.mxu0 0.0
  %v2239 = vand.u32 %v103, 4294901760
  %v2240 = vsub.f32 %v103, %v2239
  %2241 = vmatpush1.msra.mxu0 %v2240
  %2242 = vmatprep.subr.mxu0 0.0
  %v2243 = vand.u32 %v102, 4294901760
  %v2244 = vsub.f32 %v102, %v2243
  %2245 = vmatpush1.msra.mxu0 %v2244
  %2246 = vmatprep.subr.mxu0 0.0
  %v2247 = vand.u32 %v101, 4294901760
  %v2248 = vsub.f32 %v101, %v2247
  %2249 = vmatpush1.msra.mxu0 %v2248
  %2250 = vmatprep.subr.mxu0 0.0
  %v2251 = vand.u32 %v100, 4294901760
  %v2252 = vsub.f32 %v100, %v2251
  %2253 = vmatpush1.msra.mxu0 %v2252
  %2254 = vmatprep.subr.mxu0 0.0
  %v2255 = vand.u32 %v99, 4294901760
  %v2256 = vsub.f32 %v99, %v2255
  %2257 = vmatpush1.msra.mxu0 %v2256
  %2258 = vmatprep.subr.mxu0 0.0
  %v2259 = vand.u32 %v98, 4294901760
  %v2260 = vsub.f32 %v98, %v2259
  %2261 = vmatpush1.msra.mxu0 %v2260
  %2262 = vmatprep.subr.mxu0 0.0
  %v2263 = vand.u32 %v97, 4294901760
  %v2264 = vsub.f32 %v97, %v2263
  %2265 = vmatpush1.msra.mxu0 %v2264
  %2266 = vmatprep.subr.mxu0 0.0
  %v2267 = vand.u32 %v96, 4294901760
  %v2268 = vsub.f32 %v96, %v2267
  %2269 = vmatpush1.msra.mxu0 %v2268
  %2270 = vmatprep.subr.mxu0 0.0
  %v2271 = vand.u32 %v95, 4294901760
  %v2272 = vsub.f32 %v95, %v2271
  %2273 = vmatpush1.msra.mxu0 %v2272
  %2274 = vmatprep.subr.mxu0 0.0
  %v2275 = vand.u32 %v94, 4294901760
  %v2276 = vsub.f32 %v94, %v2275
  %2277 = vmatpush1.msra.mxu0 %v2276
  %2278 = vmatprep.subr.mxu0 0.0
  %v2279 = vand.u32 %v93, 4294901760
  %v2280 = vsub.f32 %v93, %v2279
  %2281 = vmatpush1.msra.mxu0 %v2280
  %2282 = vmatprep.subr.mxu0 0.0
  %v2283 = vand.u32 %v92, 4294901760
  %v2284 = vsub.f32 %v92, %v2283
  %2285 = vmatpush1.msra.mxu0 %v2284
  %2286 = vmatprep.subr.mxu0 0.0
  %v2287 = vand.u32 %v91, 4294901760
  %v2288 = vsub.f32 %v91, %v2287
  %2289 = vmatpush1.msra.mxu0 %v2288
  %2290 = vmatprep.subr.mxu0 0.0
  %v2291 = vand.u32 %v90, 4294901760
  %v2292 = vsub.f32 %v90, %v2291
  %2293 = vmatpush1.msra.mxu0 %v2292
  %2294 = vmatprep.subr.mxu0 0.0
  %v2295 = vand.u32 %v89, 4294901760
  %v2296 = vsub.f32 %v89, %v2295
  %2297 = vmatpush1.msra.mxu0 %v2296
  %2298 = vmatprep.subr.mxu0 0.0
  %v2299 = vand.u32 %v88, 4294901760
  %v2300 = vsub.f32 %v88, %v2299
  %2301 = vmatpush1.msra.mxu0 %v2300
  %2302 = vmatprep.subr.mxu0 0.0
  %v2303 = vand.u32 %v119, 4294901760
  %v2304 = vsub.f32 %v119, %v2303
  %2305 = vmatpush2.msra.mxu0 %v2304
  %2306 = vmatprep.subr.mxu0 0.0
  %v2307 = vand.u32 %v118, 4294901760
  %v2308 = vsub.f32 %v118, %v2307
  %2309 = vmatpush2.msra.mxu0 %v2308
  %2310 = vmatprep.subr.mxu0 0.0
  %v2311 = vand.u32 %v117, 4294901760
  %v2312 = vsub.f32 %v117, %v2311
  %2313 = vmatpush2.msra.mxu0 %v2312
  %2314 = vmatprep.subr.mxu0 0.0
  %v2315 = vand.u32 %v116, 4294901760
  %v2316 = vsub.f32 %v116, %v2315
  %2317 = vmatpush2.msra.mxu0 %v2316
  %2318 = vmatprep.subr.mxu0 0.0
  %v2319 = vand.u32 %v115, 4294901760
  %v2320 = vsub.f32 %v115, %v2319
  %2321 = vmatpush2.msra.mxu0 %v2320
  %2322 = vmatprep.subr.mxu0 0.0
  %v2323 = vand.u32 %v114, 4294901760
  %v2324 = vsub.f32 %v114, %v2323
  %2325 = vmatpush2.msra.mxu0 %v2324
  %2326 = vmatprep.subr.mxu0 0.0
  %v2327 = vand.u32 %v113, 4294901760
  %v2328 = vsub.f32 %v113, %v2327
  %2329 = vmatpush2.msra.mxu0 %v2328
  %2330 = vmatprep.subr.mxu0 0.0
  %v2331 = vand.u32 %v112, 4294901760
  %v2332 = vsub.f32 %v112, %v2331
  %2333 = vmatpush2.msra.mxu0 %v2332
  %2334 = vmatprep.subr.mxu0 0.0
  %v2335 = vand.u32 %v111, 4294901760
  %v2336 = vsub.f32 %v111, %v2335
  %2337 = vmatpush2.msra.mxu0 %v2336
  %2338 = vmatprep.subr.mxu0 0.0
  %v2339 = vand.u32 %v110, 4294901760
  %v2340 = vsub.f32 %v110, %v2339
  %2341 = vmatpush2.msra.mxu0 %v2340
  %2342 = vmatprep.subr.mxu0 0.0
  %v2343 = vand.u32 %v109, 4294901760
  %v2344 = vsub.f32 %v109, %v2343
  %2345 = vmatpush2.msra.mxu0 %v2344
  %2346 = vmatprep.subr.mxu0 0.0
  %v2347 = vand.u32 %v108, 4294901760
  %v2348 = vsub.f32 %v108, %v2347
  %2349 = vmatpush2.msra.mxu0 %v2348
  %2350 = vmatprep.subr.mxu0 0.0
  %v2351 = vand.u32 %v107, 4294901760
  %v2352 = vsub.f32 %v107, %v2351
  %2353 = vmatpush2.msra.mxu0 %v2352
  %2354 = vmatprep.subr.mxu0 0.0
  %v2355 = vand.u32 %v106, 4294901760
  %v2356 = vsub.f32 %v106, %v2355
  %2357 = vmatpush2.msra.mxu0 %v2356
  %2358 = vmatprep.subr.mxu0 0.0
  %v2359 = vand.u32 %v105, 4294901760
  %v2360 = vsub.f32 %v105, %v2359
  %2361 = vmatpush2.msra.mxu0 %v2360
  %2362 = vmatprep.subr.mxu0 0.0
  %v2363 = vand.u32 %v104, 4294901760
  %v2364 = vsub.f32 %v104, %v2363
  %2365 = vmatpush2.msra.mxu0 %v2364
  %v2366 = vand.u32 %v20, 4294901760
  %v2367 = vsub.f32 %v20, %v2366
  %2368 = vmatprep.mubr.f32.mxu0 %v2367
  %v2369 = vand.u32 %v19, 4294901760
  %v2370 = vsub.f32 %v19, %v2369
  %2371 = vmatmul.mubr.f32.gmra.mxu0 %v2370
  %v2372 = vpop.f32.mrf.mxu0
  %v2373 = vadd.f32 %v2235, %v2372
  %v2374 = vpop.f32.mrf.mxu0
  %2375 = vdwg.mxu0
  %2376 = vmatprep.subr.mxu0 0.0
  %v2377 = vand.u32 %v103, 4294901760
  %2378 = vmatpush1.msra.mxu0 %v2377
  %2379 = vmatprep.subr.mxu0 0.0
  %v2380 = vand.u32 %v102, 4294901760
  %2381 = vmatpush1.msra.mxu0 %v2380
  %2382 = vmatprep.subr.mxu0 0.0
  %v2383 = vand.u32 %v101, 4294901760
  %2384 = vmatpush1.msra.mxu0 %v2383
  %2385 = vmatprep.subr.mxu0 0.0
  %v2386 = vand.u32 %v100, 4294901760
  %2387 = vmatpush1.msra.mxu0 %v2386
  %2388 = vmatprep.subr.mxu0 0.0
  %v2389 = vand.u32 %v99, 4294901760
  %2390 = vmatpush1.msra.mxu0 %v2389
  %2391 = vmatprep.subr.mxu0 0.0
  %v2392 = vand.u32 %v98, 4294901760
  %2393 = vmatpush1.msra.mxu0 %v2392
  %2394 = vmatprep.subr.mxu0 0.0
  %v2395 = vand.u32 %v97, 4294901760
  %2396 = vmatpush1.msra.mxu0 %v2395
  %2397 = vmatprep.subr.mxu0 0.0
  %v2398 = vand.u32 %v96, 4294901760
  %2399 = vmatpush1.msra.mxu0 %v2398
  %2400 = vmatprep.subr.mxu0 0.0
  %v2401 = vand.u32 %v95, 4294901760
  %2402 = vmatpush1.msra.mxu0 %v2401
  %2403 = vmatprep.subr.mxu0 0.0
  %v2404 = vand.u32 %v94, 4294901760
  %2405 = vmatpush1.msra.mxu0 %v2404
  %2406 = vmatprep.subr.mxu0 0.0
  %v2407 = vand.u32 %v93, 4294901760
  %2408 = vmatpush1.msra.mxu0 %v2407
  %2409 = vmatprep.subr.mxu0 0.0
  %v2410 = vand.u32 %v92, 4294901760
  %2411 = vmatpush1.msra.mxu0 %v2410
  %2412 = vmatprep.subr.mxu0 0.0
  %v2413 = vand.u32 %v91, 4294901760
  %2414 = vmatpush1.msra.mxu0 %v2413
  %2415 = vmatprep.subr.mxu0 0.0
  %v2416 = vand.u32 %v90, 4294901760
  %2417 = vmatpush1.msra.mxu0 %v2416
  %2418 = vmatprep.subr.mxu0 0.0
  %v2419 = vand.u32 %v89, 4294901760
  %2420 = vmatpush1.msra.mxu0 %v2419
  %2421 = vmatprep.subr.mxu0 0.0
  %v2422 = vand.u32 %v88, 4294901760
  %2423 = vmatpush1.msra.mxu0 %v2422
  %2424 = vmatprep.subr.mxu0 0.0
  %v2425 = vand.u32 %v119, 4294901760
  %2426 = vmatpush2.msra.mxu0 %v2425
  %2427 = vmatprep.subr.mxu0 0.0
  %v2428 = vand.u32 %v118, 4294901760
  %2429 = vmatpush2.msra.mxu0 %v2428
  %2430 = vmatprep.subr.mxu0 0.0
  %v2431 = vand.u32 %v117, 4294901760
  %2432 = vmatpush2.msra.mxu0 %v2431
  %2433 = vmatprep.subr.mxu0 0.0
  %v2434 = vand.u32 %v116, 4294901760
  %2435 = vmatpush2.msra.mxu0 %v2434
  %2436 = vmatprep.subr.mxu0 0.0
  %v2437 = vand.u32 %v115, 4294901760
  %2438 = vmatpush2.msra.mxu0 %v2437
  %2439 = vmatprep.subr.mxu0 0.0
  %v2440 = vand.u32 %v114, 4294901760
  %2441 = vmatpush2.msra.mxu0 %v2440
  %2442 = vmatprep.subr.mxu0 0.0
  %v2443 = vand.u32 %v113, 4294901760
  %2444 = vmatpush2.msra.mxu0 %v2443
  %2445 = vmatprep.subr.mxu0 0.0
  %v2446 = vand.u32 %v112, 4294901760
  %2447 = vmatpush2.msra.mxu0 %v2446
  %2448 = vmatprep.subr.mxu0 0.0
  %v2449 = vand.u32 %v111, 4294901760
  %2450 = vmatpush2.msra.mxu0 %v2449
  %2451 = vmatprep.subr.mxu0 0.0
  %v2452 = vand.u32 %v110, 4294901760
  %2453 = vmatpush2.msra.mxu0 %v2452
  %2454 = vmatprep.subr.mxu0 0.0
  %v2455 = vand.u32 %v109, 4294901760
  %2456 = vmatpush2.msra.mxu0 %v2455
  %2457 = vmatprep.subr.mxu0 0.0
  %v2458 = vand.u32 %v108, 4294901760
  %2459 = vmatpush2.msra.mxu0 %v2458
  %2460 = vmatprep.subr.mxu0 0.0
  %v2461 = vand.u32 %v107, 4294901760
  %2462 = vmatpush2.msra.mxu0 %v2461
  %2463 = vmatprep.subr.mxu0 0.0
  %v2464 = vand.u32 %v106, 4294901760
  %2465 = vmatpush2.msra.mxu0 %v2464
  %2466 = vmatprep.subr.mxu0 0.0
  %v2467 = vand.u32 %v105, 4294901760
  %2468 = vmatpush2.msra.mxu0 %v2467
  %2469 = vmatprep.subr.mxu0 0.0
  %v2470 = vand.u32 %v104, 4294901760
  %2471 = vmatpush2.msra.mxu0 %v2470
  %v2472 = vand.u32 %v20, 4294901760
  %v2473 = vsub.f32 %v20, %v2472
  %v2474 = vand.u32 %v2473, 4294901760
  %2475 = vmatprep.mubr.f32.mxu0 %v2474
  %v2476 = vand.u32 %v19, 4294901760
  %v2477 = vsub.f32 %v19, %v2476
  %v2478 = vand.u32 %v2477, 4294901760
  %2479 = vmatmul.mubr.f32.gmra.mxu0 %v2478
  %v2480 = vpop.f32.mrf.mxu0
  %v2481 = vadd.f32 %v2373, %v2480
  %v2482 = vpop.f32.mrf.mxu0
  %2483 = vdwg.mxu0
  %2484 = vmatprep.subr.mxu0 0.0
  %v2485 = vand.u32 %v103, 4294901760
  %v2486 = vsub.f32 %v103, %v2485
  %v2487 = vand.u32 %v2486, 4294901760
  %2488 = vmatpush1.msra.mxu0 %v2487
  %2489 = vmatprep.subr.mxu0 0.0
  %v2490 = vand.u32 %v102, 4294901760
  %v2491 = vsub.f32 %v102, %v2490
  %v2492 = vand.u32 %v2491, 4294901760
  %2493 = vmatpush1.msra.mxu0 %v2492
  %2494 = vmatprep.subr.mxu0 0.0
  %v2495 = vand.u32 %v101, 4294901760
  %v2496 = vsub.f32 %v101, %v2495
  %v2497 = vand.u32 %v2496, 4294901760
  %2498 = vmatpush1.msra.mxu0 %v2497
  %2499 = vmatprep.subr.mxu0 0.0
  %v2500 = vand.u32 %v100, 4294901760
  %v2501 = vsub.f32 %v100, %v2500
  %v2502 = vand.u32 %v2501, 4294901760
  %2503 = vmatpush1.msra.mxu0 %v2502
  %2504 = vmatprep.subr.mxu0 0.0
  %v2505 = vand.u32 %v99, 4294901760
  %v2506 = vsub.f32 %v99, %v2505
  %v2507 = vand.u32 %v2506, 4294901760
  %2508 = vmatpush1.msra.mxu0 %v2507
  %2509 = vmatprep.subr.mxu0 0.0
  %v2510 = vand.u32 %v98, 4294901760
  %v2511 = vsub.f32 %v98, %v2510
  %v2512 = vand.u32 %v2511, 4294901760
  %2513 = vmatpush1.msra.mxu0 %v2512
  %2514 = vmatprep.subr.mxu0 0.0
  %v2515 = vand.u32 %v97, 4294901760
  %v2516 = vsub.f32 %v97, %v2515
  %v2517 = vand.u32 %v2516, 4294901760
  %2518 = vmatpush1.msra.mxu0 %v2517
  %2519 = vmatprep.subr.mxu0 0.0
  %v2520 = vand.u32 %v96, 4294901760
  %v2521 = vsub.f32 %v96, %v2520
  %v2522 = vand.u32 %v2521, 4294901760
  %2523 = vmatpush1.msra.mxu0 %v2522
  %2524 = vmatprep.subr.mxu0 0.0
  %v2525 = vand.u32 %v95, 4294901760
  %v2526 = vsub.f32 %v95, %v2525
  %v2527 = vand.u32 %v2526, 4294901760
  %2528 = vmatpush1.msra.mxu0 %v2527
  %2529 = vmatprep.subr.mxu0 0.0
  %v2530 = vand.u32 %v94, 4294901760
  %v2531 = vsub.f32 %v94, %v2530
  %v2532 = vand.u32 %v2531, 4294901760
  %2533 = vmatpush1.msra.mxu0 %v2532
  %2534 = vmatprep.subr.mxu0 0.0
  %v2535 = vand.u32 %v93, 4294901760
  %v2536 = vsub.f32 %v93, %v2535
  %v2537 = vand.u32 %v2536, 4294901760
  %2538 = vmatpush1.msra.mxu0 %v2537
  %2539 = vmatprep.subr.mxu0 0.0
  %v2540 = vand.u32 %v92, 4294901760
  %v2541 = vsub.f32 %v92, %v2540
  %v2542 = vand.u32 %v2541, 4294901760
  %2543 = vmatpush1.msra.mxu0 %v2542
  %2544 = vmatprep.subr.mxu0 0.0
  %v2545 = vand.u32 %v91, 4294901760
  %v2546 = vsub.f32 %v91, %v2545
  %v2547 = vand.u32 %v2546, 4294901760
  %2548 = vmatpush1.msra.mxu0 %v2547
  %2549 = vmatprep.subr.mxu0 0.0
  %v2550 = vand.u32 %v90, 4294901760
  %v2551 = vsub.f32 %v90, %v2550
  %v2552 = vand.u32 %v2551, 4294901760
  %2553 = vmatpush1.msra.mxu0 %v2552
  %2554 = vmatprep.subr.mxu0 0.0
  %v2555 = vand.u32 %v89, 4294901760
  %v2556 = vsub.f32 %v89, %v2555
  %v2557 = vand.u32 %v2556, 4294901760
  %2558 = vmatpush1.msra.mxu0 %v2557
  %2559 = vmatprep.subr.mxu0 0.0
  %v2560 = vand.u32 %v88, 4294901760
  %v2561 = vsub.f32 %v88, %v2560
  %v2562 = vand.u32 %v2561, 4294901760
  %2563 = vmatpush1.msra.mxu0 %v2562
  %2564 = vmatprep.subr.mxu0 0.0
  %v2565 = vand.u32 %v119, 4294901760
  %v2566 = vsub.f32 %v119, %v2565
  %v2567 = vand.u32 %v2566, 4294901760
  %2568 = vmatpush2.msra.mxu0 %v2567
  %2569 = vmatprep.subr.mxu0 0.0
  %v2570 = vand.u32 %v118, 4294901760
  %v2571 = vsub.f32 %v118, %v2570
  %v2572 = vand.u32 %v2571, 4294901760
  %2573 = vmatpush2.msra.mxu0 %v2572
  %2574 = vmatprep.subr.mxu0 0.0
  %v2575 = vand.u32 %v117, 4294901760
  %v2576 = vsub.f32 %v117, %v2575
  %v2577 = vand.u32 %v2576, 4294901760
  %2578 = vmatpush2.msra.mxu0 %v2577
  %2579 = vmatprep.subr.mxu0 0.0
  %v2580 = vand.u32 %v116, 4294901760
  %v2581 = vsub.f32 %v116, %v2580
  %v2582 = vand.u32 %v2581, 4294901760
  %2583 = vmatpush2.msra.mxu0 %v2582
  %2584 = vmatprep.subr.mxu0 0.0
  %v2585 = vand.u32 %v115, 4294901760
  %v2586 = vsub.f32 %v115, %v2585
  %v2587 = vand.u32 %v2586, 4294901760
  %2588 = vmatpush2.msra.mxu0 %v2587
  %2589 = vmatprep.subr.mxu0 0.0
  %v2590 = vand.u32 %v114, 4294901760
  %v2591 = vsub.f32 %v114, %v2590
  %v2592 = vand.u32 %v2591, 4294901760
  %2593 = vmatpush2.msra.mxu0 %v2592
  %2594 = vmatprep.subr.mxu0 0.0
  %v2595 = vand.u32 %v113, 4294901760
  %v2596 = vsub.f32 %v113, %v2595
  %v2597 = vand.u32 %v2596, 4294901760
  %2598 = vmatpush2.msra.mxu0 %v2597
  %2599 = vmatprep.subr.mxu0 0.0
  %v2600 = vand.u32 %v112, 4294901760
  %v2601 = vsub.f32 %v112, %v2600
  %v2602 = vand.u32 %v2601, 4294901760
  %2603 = vmatpush2.msra.mxu0 %v2602
  %2604 = vmatprep.subr.mxu0 0.0
  %v2605 = vand.u32 %v111, 4294901760
  %v2606 = vsub.f32 %v111, %v2605
  %v2607 = vand.u32 %v2606, 4294901760
  %2608 = vmatpush2.msra.mxu0 %v2607
  %2609 = vmatprep.subr.mxu0 0.0
  %v2610 = vand.u32 %v110, 4294901760
  %v2611 = vsub.f32 %v110, %v2610
  %v2612 = vand.u32 %v2611, 4294901760
  %2613 = vmatpush2.msra.mxu0 %v2612
  %2614 = vmatprep.subr.mxu0 0.0
  %v2615 = vand.u32 %v109, 4294901760
  %v2616 = vsub.f32 %v109, %v2615
  %v2617 = vand.u32 %v2616, 4294901760
  %2618 = vmatpush2.msra.mxu0 %v2617
  %2619 = vmatprep.subr.mxu0 0.0
  %v2620 = vand.u32 %v108, 4294901760
  %v2621 = vsub.f32 %v108, %v2620
  %v2622 = vand.u32 %v2621, 4294901760
  %2623 = vmatpush2.msra.mxu0 %v2622
  %2624 = vmatprep.subr.mxu0 0.0
  %v2625 = vand.u32 %v107, 4294901760
  %v2626 = vsub.f32 %v107, %v2625
  %v2627 = vand.u32 %v2626, 4294901760
  %2628 = vmatpush2.msra.mxu0 %v2627
  %2629 = vmatprep.subr.mxu0 0.0
  %v2630 = vand.u32 %v106, 4294901760
  %v2631 = vsub.f32 %v106, %v2630
  %v2632 = vand.u32 %v2631, 4294901760
  %2633 = vmatpush2.msra.mxu0 %v2632
  %2634 = vmatprep.subr.mxu0 0.0
  %v2635 = vand.u32 %v105, 4294901760
  %v2636 = vsub.f32 %v105, %v2635
  %v2637 = vand.u32 %v2636, 4294901760
  %2638 = vmatpush2.msra.mxu0 %v2637
  %2639 = vmatprep.subr.mxu0 0.0
  %v2640 = vand.u32 %v104, 4294901760
  %v2641 = vsub.f32 %v104, %v2640
  %v2642 = vand.u32 %v2641, 4294901760
  %2643 = vmatpush2.msra.mxu0 %v2642
  %v2644 = vand.u32 %v20, 4294901760
  %2645 = vmatprep.mubr.f32.mxu0 %v2644
  %v2646 = vand.u32 %v19, 4294901760
  %2647 = vmatmul.mubr.f32.gmra.mxu0 %v2646
  %v2648 = vpop.f32.mrf.mxu0
  %v2649 = vadd.f32 %v2481, %v2648
  %v2650 = vpop.f32.mrf.mxu0
  %2651 = vdwg.mxu0
  %2652 = vmatprep.subr.mxu0 0.0
  %v2653 = vand.u32 %v103, 4294901760
  %2654 = vmatpush1.msra.mxu0 %v2653
  %2655 = vmatprep.subr.mxu0 0.0
  %v2656 = vand.u32 %v102, 4294901760
  %2657 = vmatpush1.msra.mxu0 %v2656
  %2658 = vmatprep.subr.mxu0 0.0
  %v2659 = vand.u32 %v101, 4294901760
  %2660 = vmatpush1.msra.mxu0 %v2659
  %2661 = vmatprep.subr.mxu0 0.0
  %v2662 = vand.u32 %v100, 4294901760
  %2663 = vmatpush1.msra.mxu0 %v2662
  %2664 = vmatprep.subr.mxu0 0.0
  %v2665 = vand.u32 %v99, 4294901760
  %2666 = vmatpush1.msra.mxu0 %v2665
  %2667 = vmatprep.subr.mxu0 0.0
  %v2668 = vand.u32 %v98, 4294901760
  %2669 = vmatpush1.msra.mxu0 %v2668
  %2670 = vmatprep.subr.mxu0 0.0
  %v2671 = vand.u32 %v97, 4294901760
  %2672 = vmatpush1.msra.mxu0 %v2671
  %2673 = vmatprep.subr.mxu0 0.0
  %v2674 = vand.u32 %v96, 4294901760
  %2675 = vmatpush1.msra.mxu0 %v2674
  %2676 = vmatprep.subr.mxu0 0.0
  %v2677 = vand.u32 %v95, 4294901760
  %2678 = vmatpush1.msra.mxu0 %v2677
  %2679 = vmatprep.subr.mxu0 0.0
  %v2680 = vand.u32 %v94, 4294901760
  %2681 = vmatpush1.msra.mxu0 %v2680
  %2682 = vmatprep.subr.mxu0 0.0
  %v2683 = vand.u32 %v93, 4294901760
  %2684 = vmatpush1.msra.mxu0 %v2683
  %2685 = vmatprep.subr.mxu0 0.0
  %v2686 = vand.u32 %v92, 4294901760
  %2687 = vmatpush1.msra.mxu0 %v2686
  %2688 = vmatprep.subr.mxu0 0.0
  %v2689 = vand.u32 %v91, 4294901760
  %2690 = vmatpush1.msra.mxu0 %v2689
  %2691 = vmatprep.subr.mxu0 0.0
  %v2692 = vand.u32 %v90, 4294901760
  %2693 = vmatpush1.msra.mxu0 %v2692
  %2694 = vmatprep.subr.mxu0 0.0
  %v2695 = vand.u32 %v89, 4294901760
  %2696 = vmatpush1.msra.mxu0 %v2695
  %2697 = vmatprep.subr.mxu0 0.0
  %v2698 = vand.u32 %v88, 4294901760
  %2699 = vmatpush1.msra.mxu0 %v2698
  %2700 = vmatprep.subr.mxu0 0.0
  %v2701 = vand.u32 %v119, 4294901760
  %2702 = vmatpush2.msra.mxu0 %v2701
  %2703 = vmatprep.subr.mxu0 0.0
  %v2704 = vand.u32 %v118, 4294901760
  %2705 = vmatpush2.msra.mxu0 %v2704
  %2706 = vmatprep.subr.mxu0 0.0
  %v2707 = vand.u32 %v117, 4294901760
  %2708 = vmatpush2.msra.mxu0 %v2707
  %2709 = vmatprep.subr.mxu0 0.0
  %v2710 = vand.u32 %v116, 4294901760
  %2711 = vmatpush2.msra.mxu0 %v2710
  %2712 = vmatprep.subr.mxu0 0.0
  %v2713 = vand.u32 %v115, 4294901760
  %2714 = vmatpush2.msra.mxu0 %v2713
  %2715 = vmatprep.subr.mxu0 0.0
  %v2716 = vand.u32 %v114, 4294901760
  %2717 = vmatpush2.msra.mxu0 %v2716
  %2718 = vmatprep.subr.mxu0 0.0
  %v2719 = vand.u32 %v113, 4294901760
  %2720 = vmatpush2.msra.mxu0 %v2719
  %2721 = vmatprep.subr.mxu0 0.0
  %v2722 = vand.u32 %v112, 4294901760
  %2723 = vmatpush2.msra.mxu0 %v2722
  %2724 = vmatprep.subr.mxu0 0.0
  %v2725 = vand.u32 %v111, 4294901760
  %2726 = vmatpush2.msra.mxu0 %v2725
  %2727 = vmatprep.subr.mxu0 0.0
  %v2728 = vand.u32 %v110, 4294901760
  %2729 = vmatpush2.msra.mxu0 %v2728
  %2730 = vmatprep.subr.mxu0 0.0
  %v2731 = vand.u32 %v109, 4294901760
  %2732 = vmatpush2.msra.mxu0 %v2731
  %2733 = vmatprep.subr.mxu0 0.0
  %v2734 = vand.u32 %v108, 4294901760
  %2735 = vmatpush2.msra.mxu0 %v2734
  %2736 = vmatprep.subr.mxu0 0.0
  %v2737 = vand.u32 %v107, 4294901760
  %2738 = vmatpush2.msra.mxu0 %v2737
  %2739 = vmatprep.subr.mxu0 0.0
  %v2740 = vand.u32 %v106, 4294901760
  %2741 = vmatpush2.msra.mxu0 %v2740
  %2742 = vmatprep.subr.mxu0 0.0
  %v2743 = vand.u32 %v105, 4294901760
  %2744 = vmatpush2.msra.mxu0 %v2743
  %2745 = vmatprep.subr.mxu0 0.0
  %v2746 = vand.u32 %v104, 4294901760
  %2747 = vmatpush2.msra.mxu0 %v2746
  %v2748 = vand.u32 %v20, 4294901760
  %2749 = vmatprep.mubr.f32.mxu0 %v2748
  %v2750 = vand.u32 %v19, 4294901760
  %2751 = vmatmul.mubr.f32.gmra.mxu0 %v2750
  %v2752 = vpop.f32.mrf.mxu0
  %v2753 = vadd.f32 %v2649, %v2752
  %v2754 = vpop.f32.mrf.mxu0
  %2755 = vdwg.mxu0
  %2756 = vmatprep.subr.mxu0 0.0
  %v2757 = vand.u32 %v135, 4294901760
  %2758 = vmatpush1.msra.mxu0 %v2757
  %2759 = vmatprep.subr.mxu0 0.0
  %v2760 = vand.u32 %v134, 4294901760
  %2761 = vmatpush1.msra.mxu0 %v2760
  %2762 = vmatprep.subr.mxu0 0.0
  %v2763 = vand.u32 %v133, 4294901760
  %2764 = vmatpush1.msra.mxu0 %v2763
  %2765 = vmatprep.subr.mxu0 0.0
  %v2766 = vand.u32 %v132, 4294901760
  %2767 = vmatpush1.msra.mxu0 %v2766
  %2768 = vmatprep.subr.mxu0 0.0
  %v2769 = vand.u32 %v131, 4294901760
  %2770 = vmatpush1.msra.mxu0 %v2769
  %2771 = vmatprep.subr.mxu0 0.0
  %v2772 = vand.u32 %v130, 4294901760
  %2773 = vmatpush1.msra.mxu0 %v2772
  %2774 = vmatprep.subr.mxu0 0.0
  %v2775 = vand.u32 %v129, 4294901760
  %2776 = vmatpush1.msra.mxu0 %v2775
  %2777 = vmatprep.subr.mxu0 0.0
  %v2778 = vand.u32 %v128, 4294901760
  %2779 = vmatpush1.msra.mxu0 %v2778
  %2780 = vmatprep.subr.mxu0 0.0
  %v2781 = vand.u32 %v127, 4294901760
  %2782 = vmatpush1.msra.mxu0 %v2781
  %2783 = vmatprep.subr.mxu0 0.0
  %v2784 = vand.u32 %v126, 4294901760
  %2785 = vmatpush1.msra.mxu0 %v2784
  %2786 = vmatprep.subr.mxu0 0.0
  %v2787 = vand.u32 %v125, 4294901760
  %2788 = vmatpush1.msra.mxu0 %v2787
  %2789 = vmatprep.subr.mxu0 0.0
  %v2790 = vand.u32 %v124, 4294901760
  %2791 = vmatpush1.msra.mxu0 %v2790
  %2792 = vmatprep.subr.mxu0 0.0
  %v2793 = vand.u32 %v123, 4294901760
  %2794 = vmatpush1.msra.mxu0 %v2793
  %2795 = vmatprep.subr.mxu0 0.0
  %v2796 = vand.u32 %v122, 4294901760
  %2797 = vmatpush1.msra.mxu0 %v2796
  %2798 = vmatprep.subr.mxu0 0.0
  %v2799 = vand.u32 %v121, 4294901760
  %2800 = vmatpush1.msra.mxu0 %v2799
  %2801 = vmatprep.subr.mxu0 0.0
  %v2802 = vand.u32 %v120, 4294901760
  %2803 = vmatpush1.msra.mxu0 %v2802
  %2804 = vmatprep.subr.mxu0 0.0
  %v2805 = vand.u32 %v151, 4294901760
  %2806 = vmatpush2.msra.mxu0 %v2805
  %2807 = vmatprep.subr.mxu0 0.0
  %v2808 = vand.u32 %v150, 4294901760
  %2809 = vmatpush2.msra.mxu0 %v2808
  %2810 = vmatprep.subr.mxu0 0.0
  %v2811 = vand.u32 %v149, 4294901760
  %2812 = vmatpush2.msra.mxu0 %v2811
  %2813 = vmatprep.subr.mxu0 0.0
  %v2814 = vand.u32 %v148, 4294901760
  %2815 = vmatpush2.msra.mxu0 %v2814
  %2816 = vmatprep.subr.mxu0 0.0
  %v2817 = vand.u32 %v147, 4294901760
  %2818 = vmatpush2.msra.mxu0 %v2817
  %2819 = vmatprep.subr.mxu0 0.0
  %v2820 = vand.u32 %v146, 4294901760
  %2821 = vmatpush2.msra.mxu0 %v2820
  %2822 = vmatprep.subr.mxu0 0.0
  %v2823 = vand.u32 %v145, 4294901760
  %2824 = vmatpush2.msra.mxu0 %v2823
  %2825 = vmatprep.subr.mxu0 0.0
  %v2826 = vand.u32 %v144, 4294901760
  %2827 = vmatpush2.msra.mxu0 %v2826
  %2828 = vmatprep.subr.mxu0 0.0
  %v2829 = vand.u32 %v143, 4294901760
  %2830 = vmatpush2.msra.mxu0 %v2829
  %2831 = vmatprep.subr.mxu0 0.0
  %v2832 = vand.u32 %v142, 4294901760
  %2833 = vmatpush2.msra.mxu0 %v2832
  %2834 = vmatprep.subr.mxu0 0.0
  %v2835 = vand.u32 %v141, 4294901760
  %2836 = vmatpush2.msra.mxu0 %v2835
  %2837 = vmatprep.subr.mxu0 0.0
  %v2838 = vand.u32 %v140, 4294901760
  %2839 = vmatpush2.msra.mxu0 %v2838
  %2840 = vmatprep.subr.mxu0 0.0
  %v2841 = vand.u32 %v139, 4294901760
  %2842 = vmatpush2.msra.mxu0 %v2841
  %2843 = vmatprep.subr.mxu0 0.0
  %v2844 = vand.u32 %v138, 4294901760
  %2845 = vmatpush2.msra.mxu0 %v2844
  %2846 = vmatprep.subr.mxu0 0.0
  %v2847 = vand.u32 %v137, 4294901760
  %2848 = vmatpush2.msra.mxu0 %v2847
  %2849 = vmatprep.subr.mxu0 0.0
  %v2850 = vand.u32 %v136, 4294901760
  %2851 = vmatpush2.msra.mxu0 %v2850
  %v2852 = vand.u32 %v22, 4294901760
  %v2853 = vsub.f32 %v22, %v2852
  %v2854 = vand.u32 %v2853, 4294901760
  %v2855 = vsub.f32 %v2853, %v2854
  %v2856 = vand.u32 %v2855, 4294901760
  %2857 = vmatprep.mubr.f32.mxu0 %v2856
  %v2858 = vand.u32 %v21, 4294901760
  %v2859 = vsub.f32 %v21, %v2858
  %v2860 = vand.u32 %v2859, 4294901760
  %v2861 = vsub.f32 %v2859, %v2860
  %v2862 = vand.u32 %v2861, 4294901760
  %2863 = vmatmul.mubr.f32.gmra.mxu0 %v2862
  %v2864 = vpop.f32.mrf.mxu0
  %v2865 = vadd.f32 %v2753, %v2864
  %v2866 = vpop.f32.mrf.mxu0
  %2867 = vdwg.mxu0
  %2868 = vmatprep.subr.mxu0 0.0
  %v2869 = vand.u32 %v135, 4294901760
  %v2870 = vsub.f32 %v135, %v2869
  %v2871 = vand.u32 %v2870, 4294901760
  %v2872 = vsub.f32 %v2870, %v2871
  %v2873 = vand.u32 %v2872, 4294901760
  %2874 = vmatpush1.msra.mxu0 %v2873
  %2875 = vmatprep.subr.mxu0 0.0
  %v2876 = vand.u32 %v134, 4294901760
  %v2877 = vsub.f32 %v134, %v2876
  %v2878 = vand.u32 %v2877, 4294901760
  %v2879 = vsub.f32 %v2877, %v2878
  %v2880 = vand.u32 %v2879, 4294901760
  %2881 = vmatpush1.msra.mxu0 %v2880
  %2882 = vmatprep.subr.mxu0 0.0
  %v2883 = vand.u32 %v133, 4294901760
  %v2884 = vsub.f32 %v133, %v2883
  %v2885 = vand.u32 %v2884, 4294901760
  %v2886 = vsub.f32 %v2884, %v2885
  %v2887 = vand.u32 %v2886, 4294901760
  %2888 = vmatpush1.msra.mxu0 %v2887
  %2889 = vmatprep.subr.mxu0 0.0
  %v2890 = vand.u32 %v132, 4294901760
  %v2891 = vsub.f32 %v132, %v2890
  %v2892 = vand.u32 %v2891, 4294901760
  %v2893 = vsub.f32 %v2891, %v2892
  %v2894 = vand.u32 %v2893, 4294901760
  %2895 = vmatpush1.msra.mxu0 %v2894
  %2896 = vmatprep.subr.mxu0 0.0
  %v2897 = vand.u32 %v131, 4294901760
  %v2898 = vsub.f32 %v131, %v2897
  %v2899 = vand.u32 %v2898, 4294901760
  %v2900 = vsub.f32 %v2898, %v2899
  %v2901 = vand.u32 %v2900, 4294901760
  %2902 = vmatpush1.msra.mxu0 %v2901
  %2903 = vmatprep.subr.mxu0 0.0
  %v2904 = vand.u32 %v130, 4294901760
  %v2905 = vsub.f32 %v130, %v2904
  %v2906 = vand.u32 %v2905, 4294901760
  %v2907 = vsub.f32 %v2905, %v2906
  %v2908 = vand.u32 %v2907, 4294901760
  %2909 = vmatpush1.msra.mxu0 %v2908
  %2910 = vmatprep.subr.mxu0 0.0
  %v2911 = vand.u32 %v129, 4294901760
  %v2912 = vsub.f32 %v129, %v2911
  %v2913 = vand.u32 %v2912, 4294901760
  %v2914 = vsub.f32 %v2912, %v2913
  %v2915 = vand.u32 %v2914, 4294901760
  %2916 = vmatpush1.msra.mxu0 %v2915
  %2917 = vmatprep.subr.mxu0 0.0
  %v2918 = vand.u32 %v128, 4294901760
  %v2919 = vsub.f32 %v128, %v2918
  %v2920 = vand.u32 %v2919, 4294901760
  %v2921 = vsub.f32 %v2919, %v2920
  %v2922 = vand.u32 %v2921, 4294901760
  %2923 = vmatpush1.msra.mxu0 %v2922
  %2924 = vmatprep.subr.mxu0 0.0
  %v2925 = vand.u32 %v127, 4294901760
  %v2926 = vsub.f32 %v127, %v2925
  %v2927 = vand.u32 %v2926, 4294901760
  %v2928 = vsub.f32 %v2926, %v2927
  %v2929 = vand.u32 %v2928, 4294901760
  %2930 = vmatpush1.msra.mxu0 %v2929
  %2931 = vmatprep.subr.mxu0 0.0
  %v2932 = vand.u32 %v126, 4294901760
  %v2933 = vsub.f32 %v126, %v2932
  %v2934 = vand.u32 %v2933, 4294901760
  %v2935 = vsub.f32 %v2933, %v2934
  %v2936 = vand.u32 %v2935, 4294901760
  %2937 = vmatpush1.msra.mxu0 %v2936
  %2938 = vmatprep.subr.mxu0 0.0
  %v2939 = vand.u32 %v125, 4294901760
  %v2940 = vsub.f32 %v125, %v2939
  %v2941 = vand.u32 %v2940, 4294901760
  %v2942 = vsub.f32 %v2940, %v2941
  %v2943 = vand.u32 %v2942, 4294901760
  %2944 = vmatpush1.msra.mxu0 %v2943
  %2945 = vmatprep.subr.mxu0 0.0
  %v2946 = vand.u32 %v124, 4294901760
  %v2947 = vsub.f32 %v124, %v2946
  %v2948 = vand.u32 %v2947, 4294901760
  %v2949 = vsub.f32 %v2947, %v2948
  %v2950 = vand.u32 %v2949, 4294901760
  %2951 = vmatpush1.msra.mxu0 %v2950
  %2952 = vmatprep.subr.mxu0 0.0
  %v2953 = vand.u32 %v123, 4294901760
  %v2954 = vsub.f32 %v123, %v2953
  %v2955 = vand.u32 %v2954, 4294901760
  %v2956 = vsub.f32 %v2954, %v2955
  %v2957 = vand.u32 %v2956, 4294901760
  %2958 = vmatpush1.msra.mxu0 %v2957
  %2959 = vmatprep.subr.mxu0 0.0
  %v2960 = vand.u32 %v122, 4294901760
  %v2961 = vsub.f32 %v122, %v2960
  %v2962 = vand.u32 %v2961, 4294901760
  %v2963 = vsub.f32 %v2961, %v2962
  %v2964 = vand.u32 %v2963, 4294901760
  %2965 = vmatpush1.msra.mxu0 %v2964
  %2966 = vmatprep.subr.mxu0 0.0
  %v2967 = vand.u32 %v121, 4294901760
  %v2968 = vsub.f32 %v121, %v2967
  %v2969 = vand.u32 %v2968, 4294901760
  %v2970 = vsub.f32 %v2968, %v2969
  %v2971 = vand.u32 %v2970, 4294901760
  %2972 = vmatpush1.msra.mxu0 %v2971
  %2973 = vmatprep.subr.mxu0 0.0
  %v2974 = vand.u32 %v120, 4294901760
  %v2975 = vsub.f32 %v120, %v2974
  %v2976 = vand.u32 %v2975, 4294901760
  %v2977 = vsub.f32 %v2975, %v2976
  %v2978 = vand.u32 %v2977, 4294901760
  %2979 = vmatpush1.msra.mxu0 %v2978
  %2980 = vmatprep.subr.mxu0 0.0
  %v2981 = vand.u32 %v151, 4294901760
  %v2982 = vsub.f32 %v151, %v2981
  %v2983 = vand.u32 %v2982, 4294901760
  %v2984 = vsub.f32 %v2982, %v2983
  %v2985 = vand.u32 %v2984, 4294901760
  %2986 = vmatpush2.msra.mxu0 %v2985
  %2987 = vmatprep.subr.mxu0 0.0
  %v2988 = vand.u32 %v150, 4294901760
  %v2989 = vsub.f32 %v150, %v2988
  %v2990 = vand.u32 %v2989, 4294901760
  %v2991 = vsub.f32 %v2989, %v2990
  %v2992 = vand.u32 %v2991, 4294901760
  %2993 = vmatpush2.msra.mxu0 %v2992
  %2994 = vmatprep.subr.mxu0 0.0
  %v2995 = vand.u32 %v149, 4294901760
  %v2996 = vsub.f32 %v149, %v2995
  %v2997 = vand.u32 %v2996, 4294901760
  %v2998 = vsub.f32 %v2996, %v2997
  %v2999 = vand.u32 %v2998, 4294901760
  %3000 = vmatpush2.msra.mxu0 %v2999
  %3001 = vmatprep.subr.mxu0 0.0
  %v3002 = vand.u32 %v148, 4294901760
  %v3003 = vsub.f32 %v148, %v3002
  %v3004 = vand.u32 %v3003, 4294901760
  %v3005 = vsub.f32 %v3003, %v3004
  %v3006 = vand.u32 %v3005, 4294901760
  %3007 = vmatpush2.msra.mxu0 %v3006
  %3008 = vmatprep.subr.mxu0 0.0
  %v3009 = vand.u32 %v147, 4294901760
  %v3010 = vsub.f32 %v147, %v3009
  %v3011 = vand.u32 %v3010, 4294901760
  %v3012 = vsub.f32 %v3010, %v3011
  %v3013 = vand.u32 %v3012, 4294901760
  %3014 = vmatpush2.msra.mxu0 %v3013
  %3015 = vmatprep.subr.mxu0 0.0
  %v3016 = vand.u32 %v146, 4294901760
  %v3017 = vsub.f32 %v146, %v3016
  %v3018 = vand.u32 %v3017, 4294901760
  %v3019 = vsub.f32 %v3017, %v3018
  %v3020 = vand.u32 %v3019, 4294901760
  %3021 = vmatpush2.msra.mxu0 %v3020
  %3022 = vmatprep.subr.mxu0 0.0
  %v3023 = vand.u32 %v145, 4294901760
  %v3024 = vsub.f32 %v145, %v3023
  %v3025 = vand.u32 %v3024, 4294901760
  %v3026 = vsub.f32 %v3024, %v3025
  %v3027 = vand.u32 %v3026, 4294901760
  %3028 = vmatpush2.msra.mxu0 %v3027
  %3029 = vmatprep.subr.mxu0 0.0
  %v3030 = vand.u32 %v144, 4294901760
  %v3031 = vsub.f32 %v144, %v3030
  %v3032 = vand.u32 %v3031, 4294901760
  %v3033 = vsub.f32 %v3031, %v3032
  %v3034 = vand.u32 %v3033, 4294901760
  %3035 = vmatpush2.msra.mxu0 %v3034
  %3036 = vmatprep.subr.mxu0 0.0
  %v3037 = vand.u32 %v143, 4294901760
  %v3038 = vsub.f32 %v143, %v3037
  %v3039 = vand.u32 %v3038, 4294901760
  %v3040 = vsub.f32 %v3038, %v3039
  %v3041 = vand.u32 %v3040, 4294901760
  %3042 = vmatpush2.msra.mxu0 %v3041
  %3043 = vmatprep.subr.mxu0 0.0
  %v3044 = vand.u32 %v142, 4294901760
  %v3045 = vsub.f32 %v142, %v3044
  %v3046 = vand.u32 %v3045, 4294901760
  %v3047 = vsub.f32 %v3045, %v3046
  %v3048 = vand.u32 %v3047, 4294901760
  %3049 = vmatpush2.msra.mxu0 %v3048
  %3050 = vmatprep.subr.mxu0 0.0
  %v3051 = vand.u32 %v141, 4294901760
  %v3052 = vsub.f32 %v141, %v3051
  %v3053 = vand.u32 %v3052, 4294901760
  %v3054 = vsub.f32 %v3052, %v3053
  %v3055 = vand.u32 %v3054, 4294901760
  %3056 = vmatpush2.msra.mxu0 %v3055
  %3057 = vmatprep.subr.mxu0 0.0
  %v3058 = vand.u32 %v140, 4294901760
  %v3059 = vsub.f32 %v140, %v3058
  %v3060 = vand.u32 %v3059, 4294901760
  %v3061 = vsub.f32 %v3059, %v3060
  %v3062 = vand.u32 %v3061, 4294901760
  %3063 = vmatpush2.msra.mxu0 %v3062
  %3064 = vmatprep.subr.mxu0 0.0
  %v3065 = vand.u32 %v139, 4294901760
  %v3066 = vsub.f32 %v139, %v3065
  %v3067 = vand.u32 %v3066, 4294901760
  %v3068 = vsub.f32 %v3066, %v3067
  %v3069 = vand.u32 %v3068, 4294901760
  %3070 = vmatpush2.msra.mxu0 %v3069
  %3071 = vmatprep.subr.mxu0 0.0
  %v3072 = vand.u32 %v138, 4294901760
  %v3073 = vsub.f32 %v138, %v3072
  %v3074 = vand.u32 %v3073, 4294901760
  %v3075 = vsub.f32 %v3073, %v3074
  %v3076 = vand.u32 %v3075, 4294901760
  %3077 = vmatpush2.msra.mxu0 %v3076
  %3078 = vmatprep.subr.mxu0 0.0
  %v3079 = vand.u32 %v137, 4294901760
  %v3080 = vsub.f32 %v137, %v3079
  %v3081 = vand.u32 %v3080, 4294901760
  %v3082 = vsub.f32 %v3080, %v3081
  %v3083 = vand.u32 %v3082, 4294901760
  %3084 = vmatpush2.msra.mxu0 %v3083
  %3085 = vmatprep.subr.mxu0 0.0
  %v3086 = vand.u32 %v136, 4294901760
  %v3087 = vsub.f32 %v136, %v3086
  %v3088 = vand.u32 %v3087, 4294901760
  %v3089 = vsub.f32 %v3087, %v3088
  %v3090 = vand.u32 %v3089, 4294901760
  %3091 = vmatpush2.msra.mxu0 %v3090
  %v3092 = vand.u32 %v22, 4294901760
  %3093 = vmatprep.mubr.f32.mxu0 %v3092
  %v3094 = vand.u32 %v21, 4294901760
  %3095 = vmatmul.mubr.f32.gmra.mxu0 %v3094
  %v3096 = vpop.f32.mrf.mxu0
  %v3097 = vadd.f32 %v2865, %v3096
  %v3098 = vpop.f32.mrf.mxu0
  %3099 = vdwg.mxu0
  %3100 = vmatprep.subr.mxu0 0.0
  %v3101 = vand.u32 %v135, 4294901760
  %v3102 = vsub.f32 %v135, %v3101
  %3103 = vmatpush1.msra.mxu0 %v3102
  %3104 = vmatprep.subr.mxu0 0.0
  %v3105 = vand.u32 %v134, 4294901760
  %v3106 = vsub.f32 %v134, %v3105
  %3107 = vmatpush1.msra.mxu0 %v3106
  %3108 = vmatprep.subr.mxu0 0.0
  %v3109 = vand.u32 %v133, 4294901760
  %v3110 = vsub.f32 %v133, %v3109
  %3111 = vmatpush1.msra.mxu0 %v3110
  %3112 = vmatprep.subr.mxu0 0.0
  %v3113 = vand.u32 %v132, 4294901760
  %v3114 = vsub.f32 %v132, %v3113
  %3115 = vmatpush1.msra.mxu0 %v3114
  %3116 = vmatprep.subr.mxu0 0.0
  %v3117 = vand.u32 %v131, 4294901760
  %v3118 = vsub.f32 %v131, %v3117
  %3119 = vmatpush1.msra.mxu0 %v3118
  %3120 = vmatprep.subr.mxu0 0.0
  %v3121 = vand.u32 %v130, 4294901760
  %v3122 = vsub.f32 %v130, %v3121
  %3123 = vmatpush1.msra.mxu0 %v3122
  %3124 = vmatprep.subr.mxu0 0.0
  %v3125 = vand.u32 %v129, 4294901760
  %v3126 = vsub.f32 %v129, %v3125
  %3127 = vmatpush1.msra.mxu0 %v3126
  %3128 = vmatprep.subr.mxu0 0.0
  %v3129 = vand.u32 %v128, 4294901760
  %v3130 = vsub.f32 %v128, %v3129
  %3131 = vmatpush1.msra.mxu0 %v3130
  %3132 = vmatprep.subr.mxu0 0.0
  %v3133 = vand.u32 %v127, 4294901760
  %v3134 = vsub.f32 %v127, %v3133
  %3135 = vmatpush1.msra.mxu0 %v3134
  %3136 = vmatprep.subr.mxu0 0.0
  %v3137 = vand.u32 %v126, 4294901760
  %v3138 = vsub.f32 %v126, %v3137
  %3139 = vmatpush1.msra.mxu0 %v3138
  %3140 = vmatprep.subr.mxu0 0.0
  %v3141 = vand.u32 %v125, 4294901760
  %v3142 = vsub.f32 %v125, %v3141
  %3143 = vmatpush1.msra.mxu0 %v3142
  %3144 = vmatprep.subr.mxu0 0.0
  %v3145 = vand.u32 %v124, 4294901760
  %v3146 = vsub.f32 %v124, %v3145
  %3147 = vmatpush1.msra.mxu0 %v3146
  %3148 = vmatprep.subr.mxu0 0.0
  %v3149 = vand.u32 %v123, 4294901760
  %v3150 = vsub.f32 %v123, %v3149
  %3151 = vmatpush1.msra.mxu0 %v3150
  %3152 = vmatprep.subr.mxu0 0.0
  %v3153 = vand.u32 %v122, 4294901760
  %v3154 = vsub.f32 %v122, %v3153
  %3155 = vmatpush1.msra.mxu0 %v3154
  %3156 = vmatprep.subr.mxu0 0.0
  %v3157 = vand.u32 %v121, 4294901760
  %v3158 = vsub.f32 %v121, %v3157
  %3159 = vmatpush1.msra.mxu0 %v3158
  %3160 = vmatprep.subr.mxu0 0.0
  %v3161 = vand.u32 %v120, 4294901760
  %v3162 = vsub.f32 %v120, %v3161
  %3163 = vmatpush1.msra.mxu0 %v3162
  %3164 = vmatprep.subr.mxu0 0.0
  %v3165 = vand.u32 %v151, 4294901760
  %v3166 = vsub.f32 %v151, %v3165
  %3167 = vmatpush2.msra.mxu0 %v3166
  %3168 = vmatprep.subr.mxu0 0.0
  %v3169 = vand.u32 %v150, 4294901760
  %v3170 = vsub.f32 %v150, %v3169
  %3171 = vmatpush2.msra.mxu0 %v3170
  %3172 = vmatprep.subr.mxu0 0.0
  %v3173 = vand.u32 %v149, 4294901760
  %v3174 = vsub.f32 %v149, %v3173
  %3175 = vmatpush2.msra.mxu0 %v3174
  %3176 = vmatprep.subr.mxu0 0.0
  %v3177 = vand.u32 %v148, 4294901760
  %v3178 = vsub.f32 %v148, %v3177
  %3179 = vmatpush2.msra.mxu0 %v3178
  %3180 = vmatprep.subr.mxu0 0.0
  %v3181 = vand.u32 %v147, 4294901760
  %v3182 = vsub.f32 %v147, %v3181
  %3183 = vmatpush2.msra.mxu0 %v3182
  %3184 = vmatprep.subr.mxu0 0.0
  %v3185 = vand.u32 %v146, 4294901760
  %v3186 = vsub.f32 %v146, %v3185
  %3187 = vmatpush2.msra.mxu0 %v3186
  %3188 = vmatprep.subr.mxu0 0.0
  %v3189 = vand.u32 %v145, 4294901760
  %v3190 = vsub.f32 %v145, %v3189
  %3191 = vmatpush2.msra.mxu0 %v3190
  %3192 = vmatprep.subr.mxu0 0.0
  %v3193 = vand.u32 %v144, 4294901760
  %v3194 = vsub.f32 %v144, %v3193
  %3195 = vmatpush2.msra.mxu0 %v3194
  %3196 = vmatprep.subr.mxu0 0.0
  %v3197 = vand.u32 %v143, 4294901760
  %v3198 = vsub.f32 %v143, %v3197
  %3199 = vmatpush2.msra.mxu0 %v3198
  %3200 = vmatprep.subr.mxu0 0.0
  %v3201 = vand.u32 %v142, 4294901760
  %v3202 = vsub.f32 %v142, %v3201
  %3203 = vmatpush2.msra.mxu0 %v3202
  %3204 = vmatprep.subr.mxu0 0.0
  %v3205 = vand.u32 %v141, 4294901760
  %v3206 = vsub.f32 %v141, %v3205
  %3207 = vmatpush2.msra.mxu0 %v3206
  %3208 = vmatprep.subr.mxu0 0.0
  %v3209 = vand.u32 %v140, 4294901760
  %v3210 = vsub.f32 %v140, %v3209
  %3211 = vmatpush2.msra.mxu0 %v3210
  %3212 = vmatprep.subr.mxu0 0.0
  %v3213 = vand.u32 %v139, 4294901760
  %v3214 = vsub.f32 %v139, %v3213
  %3215 = vmatpush2.msra.mxu0 %v3214
  %3216 = vmatprep.subr.mxu0 0.0
  %v3217 = vand.u32 %v138, 4294901760
  %v3218 = vsub.f32 %v138, %v3217
  %3219 = vmatpush2.msra.mxu0 %v3218
  %3220 = vmatprep.subr.mxu0 0.0
  %v3221 = vand.u32 %v137, 4294901760
  %v3222 = vsub.f32 %v137, %v3221
  %3223 = vmatpush2.msra.mxu0 %v3222
  %3224 = vmatprep.subr.mxu0 0.0
  %v3225 = vand.u32 %v136, 4294901760
  %v3226 = vsub.f32 %v136, %v3225
  %3227 = vmatpush2.msra.mxu0 %v3226
  %v3228 = vand.u32 %v22, 4294901760
  %v3229 = vsub.f32 %v22, %v3228
  %3230 = vmatprep.mubr.f32.mxu0 %v3229
  %v3231 = vand.u32 %v21, 4294901760
  %v3232 = vsub.f32 %v21, %v3231
  %3233 = vmatmul.mubr.f32.gmra.mxu0 %v3232
  %v3234 = vpop.f32.mrf.mxu0
  %v3235 = vadd.f32 %v3097, %v3234
  %v3236 = vpop.f32.mrf.mxu0
  %3237 = vdwg.mxu0
  %3238 = vmatprep.subr.mxu0 0.0
  %v3239 = vand.u32 %v135, 4294901760
  %3240 = vmatpush1.msra.mxu0 %v3239
  %3241 = vmatprep.subr.mxu0 0.0
  %v3242 = vand.u32 %v134, 4294901760
  %3243 = vmatpush1.msra.mxu0 %v3242
  %3244 = vmatprep.subr.mxu0 0.0
  %v3245 = vand.u32 %v133, 4294901760
  %3246 = vmatpush1.msra.mxu0 %v3245
  %3247 = vmatprep.subr.mxu0 0.0
  %v3248 = vand.u32 %v132, 4294901760
  %3249 = vmatpush1.msra.mxu0 %v3248
  %3250 = vmatprep.subr.mxu0 0.0
  %v3251 = vand.u32 %v131, 4294901760
  %3252 = vmatpush1.msra.mxu0 %v3251
  %3253 = vmatprep.subr.mxu0 0.0
  %v3254 = vand.u32 %v130, 4294901760
  %3255 = vmatpush1.msra.mxu0 %v3254
  %3256 = vmatprep.subr.mxu0 0.0
  %v3257 = vand.u32 %v129, 4294901760
  %3258 = vmatpush1.msra.mxu0 %v3257
  %3259 = vmatprep.subr.mxu0 0.0
  %v3260 = vand.u32 %v128, 4294901760
  %3261 = vmatpush1.msra.mxu0 %v3260
  %3262 = vmatprep.subr.mxu0 0.0
  %v3263 = vand.u32 %v127, 4294901760
  %3264 = vmatpush1.msra.mxu0 %v3263
  %3265 = vmatprep.subr.mxu0 0.0
  %v3266 = vand.u32 %v126, 4294901760
  %3267 = vmatpush1.msra.mxu0 %v3266
  %3268 = vmatprep.subr.mxu0 0.0
  %v3269 = vand.u32 %v125, 4294901760
  %3270 = vmatpush1.msra.mxu0 %v3269
  %3271 = vmatprep.subr.mxu0 0.0
  %v3272 = vand.u32 %v124, 4294901760
  %3273 = vmatpush1.msra.mxu0 %v3272
  %3274 = vmatprep.subr.mxu0 0.0
  %v3275 = vand.u32 %v123, 4294901760
  %3276 = vmatpush1.msra.mxu0 %v3275
  %3277 = vmatprep.subr.mxu0 0.0
  %v3278 = vand.u32 %v122, 4294901760
  %3279 = vmatpush1.msra.mxu0 %v3278
  %3280 = vmatprep.subr.mxu0 0.0
  %v3281 = vand.u32 %v121, 4294901760
  %3282 = vmatpush1.msra.mxu0 %v3281
  %3283 = vmatprep.subr.mxu0 0.0
  %v3284 = vand.u32 %v120, 4294901760
  %3285 = vmatpush1.msra.mxu0 %v3284
  %3286 = vmatprep.subr.mxu0 0.0
  %v3287 = vand.u32 %v151, 4294901760
  %3288 = vmatpush2.msra.mxu0 %v3287
  %3289 = vmatprep.subr.mxu0 0.0
  %v3290 = vand.u32 %v150, 4294901760
  %3291 = vmatpush2.msra.mxu0 %v3290
  %3292 = vmatprep.subr.mxu0 0.0
  %v3293 = vand.u32 %v149, 4294901760
  %3294 = vmatpush2.msra.mxu0 %v3293
  %3295 = vmatprep.subr.mxu0 0.0
  %v3296 = vand.u32 %v148, 4294901760
  %3297 = vmatpush2.msra.mxu0 %v3296
  %3298 = vmatprep.subr.mxu0 0.0
  %v3299 = vand.u32 %v147, 4294901760
  %3300 = vmatpush2.msra.mxu0 %v3299
  %3301 = vmatprep.subr.mxu0 0.0
  %v3302 = vand.u32 %v146, 4294901760
  %3303 = vmatpush2.msra.mxu0 %v3302
  %3304 = vmatprep.subr.mxu0 0.0
  %v3305 = vand.u32 %v145, 4294901760
  %3306 = vmatpush2.msra.mxu0 %v3305
  %3307 = vmatprep.subr.mxu0 0.0
  %v3308 = vand.u32 %v144, 4294901760
  %3309 = vmatpush2.msra.mxu0 %v3308
  %3310 = vmatprep.subr.mxu0 0.0
  %v3311 = vand.u32 %v143, 4294901760
  %3312 = vmatpush2.msra.mxu0 %v3311
  %3313 = vmatprep.subr.mxu0 0.0
  %v3314 = vand.u32 %v142, 4294901760
  %3315 = vmatpush2.msra.mxu0 %v3314
  %3316 = vmatprep.subr.mxu0 0.0
  %v3317 = vand.u32 %v141, 4294901760
  %3318 = vmatpush2.msra.mxu0 %v3317
  %3319 = vmatprep.subr.mxu0 0.0
  %v3320 = vand.u32 %v140, 4294901760
  %3321 = vmatpush2.msra.mxu0 %v3320
  %3322 = vmatprep.subr.mxu0 0.0
  %v3323 = vand.u32 %v139, 4294901760
  %3324 = vmatpush2.msra.mxu0 %v3323
  %3325 = vmatprep.subr.mxu0 0.0
  %v3326 = vand.u32 %v138, 4294901760
  %3327 = vmatpush2.msra.mxu0 %v3326
  %3328 = vmatprep.subr.mxu0 0.0
  %v3329 = vand.u32 %v137, 4294901760
  %3330 = vmatpush2.msra.mxu0 %v3329
  %3331 = vmatprep.subr.mxu0 0.0
  %v3332 = vand.u32 %v136, 4294901760
  %3333 = vmatpush2.msra.mxu0 %v3332
  %v3334 = vand.u32 %v22, 4294901760
  %v3335 = vsub.f32 %v22, %v3334
  %v3336 = vand.u32 %v3335, 4294901760
  %3337 = vmatprep.mubr.f32.mxu0 %v3336
  %v3338 = vand.u32 %v21, 4294901760
  %v3339 = vsub.f32 %v21, %v3338
  %v3340 = vand.u32 %v3339, 4294901760
  %3341 = vmatmul.mubr.f32.gmra.mxu0 %v3340
  %v3342 = vpop.f32.mrf.mxu0
  %v3343 = vadd.f32 %v3235, %v3342
  %v3344 = vpop.f32.mrf.mxu0
  %3345 = vdwg.mxu0
  %3346 = vmatprep.subr.mxu0 0.0
  %v3347 = vand.u32 %v135, 4294901760
  %v3348 = vsub.f32 %v135, %v3347
  %v3349 = vand.u32 %v3348, 4294901760
  %3350 = vmatpush1.msra.mxu0 %v3349
  %3351 = vmatprep.subr.mxu0 0.0
  %v3352 = vand.u32 %v134, 4294901760
  %v3353 = vsub.f32 %v134, %v3352
  %v3354 = vand.u32 %v3353, 4294901760
  %3355 = vmatpush1.msra.mxu0 %v3354
  %3356 = vmatprep.subr.mxu0 0.0
  %v3357 = vand.u32 %v133, 4294901760
  %v3358 = vsub.f32 %v133, %v3357
  %v3359 = vand.u32 %v3358, 4294901760
  %3360 = vmatpush1.msra.mxu0 %v3359
  %3361 = vmatprep.subr.mxu0 0.0
  %v3362 = vand.u32 %v132, 4294901760
  %v3363 = vsub.f32 %v132, %v3362
  %v3364 = vand.u32 %v3363, 4294901760
  %3365 = vmatpush1.msra.mxu0 %v3364
  %3366 = vmatprep.subr.mxu0 0.0
  %v3367 = vand.u32 %v131, 4294901760
  %v3368 = vsub.f32 %v131, %v3367
  %v3369 = vand.u32 %v3368, 4294901760
  %3370 = vmatpush1.msra.mxu0 %v3369
  %3371 = vmatprep.subr.mxu0 0.0
  %v3372 = vand.u32 %v130, 4294901760
  %v3373 = vsub.f32 %v130, %v3372
  %v3374 = vand.u32 %v3373, 4294901760
  %3375 = vmatpush1.msra.mxu0 %v3374
  %3376 = vmatprep.subr.mxu0 0.0
  %v3377 = vand.u32 %v129, 4294901760
  %v3378 = vsub.f32 %v129, %v3377
  %v3379 = vand.u32 %v3378, 4294901760
  %3380 = vmatpush1.msra.mxu0 %v3379
  %3381 = vmatprep.subr.mxu0 0.0
  %v3382 = vand.u32 %v128, 4294901760
  %v3383 = vsub.f32 %v128, %v3382
  %v3384 = vand.u32 %v3383, 4294901760
  %3385 = vmatpush1.msra.mxu0 %v3384
  %3386 = vmatprep.subr.mxu0 0.0
  %v3387 = vand.u32 %v127, 4294901760
  %v3388 = vsub.f32 %v127, %v3387
  %v3389 = vand.u32 %v3388, 4294901760
  %3390 = vmatpush1.msra.mxu0 %v3389
  %3391 = vmatprep.subr.mxu0 0.0
  %v3392 = vand.u32 %v126, 4294901760
  %v3393 = vsub.f32 %v126, %v3392
  %v3394 = vand.u32 %v3393, 4294901760
  %3395 = vmatpush1.msra.mxu0 %v3394
  %3396 = vmatprep.subr.mxu0 0.0
  %v3397 = vand.u32 %v125, 4294901760
  %v3398 = vsub.f32 %v125, %v3397
  %v3399 = vand.u32 %v3398, 4294901760
  %3400 = vmatpush1.msra.mxu0 %v3399
  %3401 = vmatprep.subr.mxu0 0.0
  %v3402 = vand.u32 %v124, 4294901760
  %v3403 = vsub.f32 %v124, %v3402
  %v3404 = vand.u32 %v3403, 4294901760
  %3405 = vmatpush1.msra.mxu0 %v3404
  %3406 = vmatprep.subr.mxu0 0.0
  %v3407 = vand.u32 %v123, 4294901760
  %v3408 = vsub.f32 %v123, %v3407
  %v3409 = vand.u32 %v3408, 4294901760
  %3410 = vmatpush1.msra.mxu0 %v3409
  %3411 = vmatprep.subr.mxu0 0.0
  %v3412 = vand.u32 %v122, 4294901760
  %v3413 = vsub.f32 %v122, %v3412
  %v3414 = vand.u32 %v3413, 4294901760
  %3415 = vmatpush1.msra.mxu0 %v3414
  %3416 = vmatprep.subr.mxu0 0.0
  %v3417 = vand.u32 %v121, 4294901760
  %v3418 = vsub.f32 %v121, %v3417
  %v3419 = vand.u32 %v3418, 4294901760
  %3420 = vmatpush1.msra.mxu0 %v3419
  %3421 = vmatprep.subr.mxu0 0.0
  %v3422 = vand.u32 %v120, 4294901760
  %v3423 = vsub.f32 %v120, %v3422
  %v3424 = vand.u32 %v3423, 4294901760
  %3425 = vmatpush1.msra.mxu0 %v3424
  %3426 = vmatprep.subr.mxu0 0.0
  %v3427 = vand.u32 %v151, 4294901760
  %v3428 = vsub.f32 %v151, %v3427
  %v3429 = vand.u32 %v3428, 4294901760
  %3430 = vmatpush2.msra.mxu0 %v3429
  %3431 = vmatprep.subr.mxu0 0.0
  %v3432 = vand.u32 %v150, 4294901760
  %v3433 = vsub.f32 %v150, %v3432
  %v3434 = vand.u32 %v3433, 4294901760
  %3435 = vmatpush2.msra.mxu0 %v3434
  %3436 = vmatprep.subr.mxu0 0.0
  %v3437 = vand.u32 %v149, 4294901760
  %v3438 = vsub.f32 %v149, %v3437
  %v3439 = vand.u32 %v3438, 4294901760
  %3440 = vmatpush2.msra.mxu0 %v3439
  %3441 = vmatprep.subr.mxu0 0.0
  %v3442 = vand.u32 %v148, 4294901760
  %v3443 = vsub.f32 %v148, %v3442
  %v3444 = vand.u32 %v3443, 4294901760
  %3445 = vmatpush2.msra.mxu0 %v3444
  %3446 = vmatprep.subr.mxu0 0.0
  %v3447 = vand.u32 %v147, 4294901760
  %v3448 = vsub.f32 %v147, %v3447
  %v3449 = vand.u32 %v3448, 4294901760
  %3450 = vmatpush2.msra.mxu0 %v3449
  %3451 = vmatprep.subr.mxu0 0.0
  %v3452 = vand.u32 %v146, 4294901760
  %v3453 = vsub.f32 %v146, %v3452
  %v3454 = vand.u32 %v3453, 4294901760
  %3455 = vmatpush2.msra.mxu0 %v3454
  %3456 = vmatprep.subr.mxu0 0.0
  %v3457 = vand.u32 %v145, 4294901760
  %v3458 = vsub.f32 %v145, %v3457
  %v3459 = vand.u32 %v3458, 4294901760
  %3460 = vmatpush2.msra.mxu0 %v3459
  %3461 = vmatprep.subr.mxu0 0.0
  %v3462 = vand.u32 %v144, 4294901760
  %v3463 = vsub.f32 %v144, %v3462
  %v3464 = vand.u32 %v3463, 4294901760
  %3465 = vmatpush2.msra.mxu0 %v3464
  %3466 = vmatprep.subr.mxu0 0.0
  %v3467 = vand.u32 %v143, 4294901760
  %v3468 = vsub.f32 %v143, %v3467
  %v3469 = vand.u32 %v3468, 4294901760
  %3470 = vmatpush2.msra.mxu0 %v3469
  %3471 = vmatprep.subr.mxu0 0.0
  %v3472 = vand.u32 %v142, 4294901760
  %v3473 = vsub.f32 %v142, %v3472
  %v3474 = vand.u32 %v3473, 4294901760
  %3475 = vmatpush2.msra.mxu0 %v3474
  %3476 = vmatprep.subr.mxu0 0.0
  %v3477 = vand.u32 %v141, 4294901760
  %v3478 = vsub.f32 %v141, %v3477
  %v3479 = vand.u32 %v3478, 4294901760
  %3480 = vmatpush2.msra.mxu0 %v3479
  %3481 = vmatprep.subr.mxu0 0.0
  %v3482 = vand.u32 %v140, 4294901760
  %v3483 = vsub.f32 %v140, %v3482
  %v3484 = vand.u32 %v3483, 4294901760
  %3485 = vmatpush2.msra.mxu0 %v3484
  %3486 = vmatprep.subr.mxu0 0.0
  %v3487 = vand.u32 %v139, 4294901760
  %v3488 = vsub.f32 %v139, %v3487
  %v3489 = vand.u32 %v3488, 4294901760
  %3490 = vmatpush2.msra.mxu0 %v3489
  %3491 = vmatprep.subr.mxu0 0.0
  %v3492 = vand.u32 %v138, 4294901760
  %v3493 = vsub.f32 %v138, %v3492
  %v3494 = vand.u32 %v3493, 4294901760
  %3495 = vmatpush2.msra.mxu0 %v3494
  %3496 = vmatprep.subr.mxu0 0.0
  %v3497 = vand.u32 %v137, 4294901760
  %v3498 = vsub.f32 %v137, %v3497
  %v3499 = vand.u32 %v3498, 4294901760
  %3500 = vmatpush2.msra.mxu0 %v3499
  %3501 = vmatprep.subr.mxu0 0.0
  %v3502 = vand.u32 %v136, 4294901760
  %v3503 = vsub.f32 %v136, %v3502
  %v3504 = vand.u32 %v3503, 4294901760
  %3505 = vmatpush2.msra.mxu0 %v3504
  %v3506 = vand.u32 %v22, 4294901760
  %3507 = vmatprep.mubr.f32.mxu0 %v3506
  %v3508 = vand.u32 %v21, 4294901760
  %3509 = vmatmul.mubr.f32.gmra.mxu0 %v3508
  %v3510 = vpop.f32.mrf.mxu0
  %v3511 = vadd.f32 %v3343, %v3510
  %v3512 = vpop.f32.mrf.mxu0
  %3513 = vdwg.mxu0
  %3514 = vmatprep.subr.mxu0 0.0
  %v3515 = vand.u32 %v135, 4294901760
  %3516 = vmatpush1.msra.mxu0 %v3515
  %3517 = vmatprep.subr.mxu0 0.0
  %v3518 = vand.u32 %v134, 4294901760
  %3519 = vmatpush1.msra.mxu0 %v3518
  %3520 = vmatprep.subr.mxu0 0.0
  %v3521 = vand.u32 %v133, 4294901760
  %3522 = vmatpush1.msra.mxu0 %v3521
  %3523 = vmatprep.subr.mxu0 0.0
  %v3524 = vand.u32 %v132, 4294901760
  %3525 = vmatpush1.msra.mxu0 %v3524
  %3526 = vmatprep.subr.mxu0 0.0
  %v3527 = vand.u32 %v131, 4294901760
  %3528 = vmatpush1.msra.mxu0 %v3527
  %3529 = vmatprep.subr.mxu0 0.0
  %v3530 = vand.u32 %v130, 4294901760
  %3531 = vmatpush1.msra.mxu0 %v3530
  %3532 = vmatprep.subr.mxu0 0.0
  %v3533 = vand.u32 %v129, 4294901760
  %3534 = vmatpush1.msra.mxu0 %v3533
  %3535 = vmatprep.subr.mxu0 0.0
  %v3536 = vand.u32 %v128, 4294901760
  %3537 = vmatpush1.msra.mxu0 %v3536
  %3538 = vmatprep.subr.mxu0 0.0
  %v3539 = vand.u32 %v127, 4294901760
  %3540 = vmatpush1.msra.mxu0 %v3539
  %3541 = vmatprep.subr.mxu0 0.0
  %v3542 = vand.u32 %v126, 4294901760
  %3543 = vmatpush1.msra.mxu0 %v3542
  %3544 = vmatprep.subr.mxu0 0.0
  %v3545 = vand.u32 %v125, 4294901760
  %3546 = vmatpush1.msra.mxu0 %v3545
  %3547 = vmatprep.subr.mxu0 0.0
  %v3548 = vand.u32 %v124, 4294901760
  %3549 = vmatpush1.msra.mxu0 %v3548
  %3550 = vmatprep.subr.mxu0 0.0
  %v3551 = vand.u32 %v123, 4294901760
  %3552 = vmatpush1.msra.mxu0 %v3551
  %3553 = vmatprep.subr.mxu0 0.0
  %v3554 = vand.u32 %v122, 4294901760
  %3555 = vmatpush1.msra.mxu0 %v3554
  %3556 = vmatprep.subr.mxu0 0.0
  %v3557 = vand.u32 %v121, 4294901760
  %3558 = vmatpush1.msra.mxu0 %v3557
  %3559 = vmatprep.subr.mxu0 0.0
  %v3560 = vand.u32 %v120, 4294901760
  %3561 = vmatpush1.msra.mxu0 %v3560
  %3562 = vmatprep.subr.mxu0 0.0
  %v3563 = vand.u32 %v151, 4294901760
  %3564 = vmatpush2.msra.mxu0 %v3563
  %3565 = vmatprep.subr.mxu0 0.0
  %v3566 = vand.u32 %v150, 4294901760
  %3567 = vmatpush2.msra.mxu0 %v3566
  %3568 = vmatprep.subr.mxu0 0.0
  %v3569 = vand.u32 %v149, 4294901760
  %3570 = vmatpush2.msra.mxu0 %v3569
  %3571 = vmatprep.subr.mxu0 0.0
  %v3572 = vand.u32 %v148, 4294901760
  %3573 = vmatpush2.msra.mxu0 %v3572
  %3574 = vmatprep.subr.mxu0 0.0
  %v3575 = vand.u32 %v147, 4294901760
  %3576 = vmatpush2.msra.mxu0 %v3575
  %3577 = vmatprep.subr.mxu0 0.0
  %v3578 = vand.u32 %v146, 4294901760
  %3579 = vmatpush2.msra.mxu0 %v3578
  %3580 = vmatprep.subr.mxu0 0.0
  %v3581 = vand.u32 %v145, 4294901760
  %3582 = vmatpush2.msra.mxu0 %v3581
  %3583 = vmatprep.subr.mxu0 0.0
  %v3584 = vand.u32 %v144, 4294901760
  %3585 = vmatpush2.msra.mxu0 %v3584
  %3586 = vmatprep.subr.mxu0 0.0
  %v3587 = vand.u32 %v143, 4294901760
  %3588 = vmatpush2.msra.mxu0 %v3587
  %3589 = vmatprep.subr.mxu0 0.0
  %v3590 = vand.u32 %v142, 4294901760
  %3591 = vmatpush2.msra.mxu0 %v3590
  %3592 = vmatprep.subr.mxu0 0.0
  %v3593 = vand.u32 %v141, 4294901760
  %3594 = vmatpush2.msra.mxu0 %v3593
  %3595 = vmatprep.subr.mxu0 0.0
  %v3596 = vand.u32 %v140, 4294901760
  %3597 = vmatpush2.msra.mxu0 %v3596
  %3598 = vmatprep.subr.mxu0 0.0
  %v3599 = vand.u32 %v139, 4294901760
  %3600 = vmatpush2.msra.mxu0 %v3599
  %3601 = vmatprep.subr.mxu0 0.0
  %v3602 = vand.u32 %v138, 4294901760
  %3603 = vmatpush2.msra.mxu0 %v3602
  %3604 = vmatprep.subr.mxu0 0.0
  %v3605 = vand.u32 %v137, 4294901760
  %3606 = vmatpush2.msra.mxu0 %v3605
  %3607 = vmatprep.subr.mxu0 0.0
  %v3608 = vand.u32 %v136, 4294901760
  %3609 = vmatpush2.msra.mxu0 %v3608
  %v3610 = vand.u32 %v22, 4294901760
  %3611 = vmatprep.mubr.f32.mxu0 %v3610
  %v3612 = vand.u32 %v21, 4294901760
  %3613 = vmatmul.mubr.f32.gmra.mxu0 %v3612
  %v3614 = vpop.f32.mrf.mxu0
  %v3615 = vadd.f32 %v3511, %v3614
  %v3616 = vpop.f32.mrf.mxu0
  %3617 = vdwg.mxu0
  %3618 = vmatprep.subr.mxu0 0.0
  %v3619 = vand.u32 %v167, 4294901760
  %3620 = vmatpush1.msra.mxu0 %v3619
  %3621 = vmatprep.subr.mxu0 0.0
  %v3622 = vand.u32 %v166, 4294901760
  %3623 = vmatpush1.msra.mxu0 %v3622
  %3624 = vmatprep.subr.mxu0 0.0
  %v3625 = vand.u32 %v165, 4294901760
  %3626 = vmatpush1.msra.mxu0 %v3625
  %3627 = vmatprep.subr.mxu0 0.0
  %v3628 = vand.u32 %v164, 4294901760
  %3629 = vmatpush1.msra.mxu0 %v3628
  %3630 = vmatprep.subr.mxu0 0.0
  %v3631 = vand.u32 %v163, 4294901760
  %3632 = vmatpush1.msra.mxu0 %v3631
  %3633 = vmatprep.subr.mxu0 0.0
  %v3634 = vand.u32 %v162, 4294901760
  %3635 = vmatpush1.msra.mxu0 %v3634
  %3636 = vmatprep.subr.mxu0 0.0
  %v3637 = vand.u32 %v161, 4294901760
  %3638 = vmatpush1.msra.mxu0 %v3637
  %3639 = vmatprep.subr.mxu0 0.0
  %v3640 = vand.u32 %v160, 4294901760
  %3641 = vmatpush1.msra.mxu0 %v3640
  %3642 = vmatprep.subr.mxu0 0.0
  %v3643 = vand.u32 %v159, 4294901760
  %3644 = vmatpush1.msra.mxu0 %v3643
  %3645 = vmatprep.subr.mxu0 0.0
  %v3646 = vand.u32 %v158, 4294901760
  %3647 = vmatpush1.msra.mxu0 %v3646
  %3648 = vmatprep.subr.mxu0 0.0
  %v3649 = vand.u32 %v157, 4294901760
  %3650 = vmatpush1.msra.mxu0 %v3649
  %3651 = vmatprep.subr.mxu0 0.0
  %v3652 = vand.u32 %v156, 4294901760
  %3653 = vmatpush1.msra.mxu0 %v3652
  %3654 = vmatprep.subr.mxu0 0.0
  %v3655 = vand.u32 %v155, 4294901760
  %3656 = vmatpush1.msra.mxu0 %v3655
  %3657 = vmatprep.subr.mxu0 0.0
  %v3658 = vand.u32 %v154, 4294901760
  %3659 = vmatpush1.msra.mxu0 %v3658
  %3660 = vmatprep.subr.mxu0 0.0
  %v3661 = vand.u32 %v153, 4294901760
  %3662 = vmatpush1.msra.mxu0 %v3661
  %3663 = vmatprep.subr.mxu0 0.0
  %v3664 = vand.u32 %v152, 4294901760
  %3665 = vmatpush1.msra.mxu0 %v3664
  %3666 = vmatprep.subr.mxu0 0.0
  %3667 = vmatpush2.msra.mxu0 0.0
  %3668 = vmatprep.subr.mxu0 0.0
  %3669 = vmatpush2.msra.mxu0 0.0
  %3670 = vmatprep.subr.mxu0 0.0
  %3671 = vmatpush2.msra.mxu0 0.0
  %3672 = vmatprep.subr.mxu0 0.0
  %3673 = vmatpush2.msra.mxu0 0.0
  %3674 = vmatprep.subr.mxu0 0.0
  %3675 = vmatpush2.msra.mxu0 0.0
  %3676 = vmatprep.subr.mxu0 0.0
  %3677 = vmatpush2.msra.mxu0 0.0
  %3678 = vmatprep.subr.mxu0 0.0
  %3679 = vmatpush2.msra.mxu0 0.0
  %3680 = vmatprep.subr.mxu0 0.0
  %3681 = vmatpush2.msra.mxu0 0.0
  %3682 = vmatprep.subr.mxu0 0.0
  %3683 = vmatpush2.msra.mxu0 0.0
  %3684 = vmatprep.subr.mxu0 0.0
  %3685 = vmatpush2.msra.mxu0 0.0
  %3686 = vmatprep.subr.mxu0 0.0
  %3687 = vmatpush2.msra.mxu0 0.0
  %3688 = vmatprep.subr.mxu0 0.0
  %3689 = vmatpush2.msra.mxu0 0.0
  %3690 = vmatprep.subr.mxu0 0.0
  %3691 = vmatpush2.msra.mxu0 0.0
  %3692 = vmatprep.subr.mxu0 0.0
  %3693 = vmatpush2.msra.mxu0 0.0
  %3694 = vmatprep.subr.mxu0 0.0
  %3695 = vmatpush2.msra.mxu0 0.0
  %3696 = vmatprep.subr.mxu0 0.0
  %3697 = vmatpush2.msra.mxu0 0.0
  %3698 = vmatprep.mubr.f32.mxu0 0.0
  %v3699 = vand.u32 %v23, 4294901760
  %v3700 = vsub.f32 %v23, %v3699
  %v3701 = vand.u32 %v3700, 4294901760
  %v3702 = vsub.f32 %v3700, %v3701
  %v3703 = vand.u32 %v3702, 4294901760
  %3704 = vmatmul.mubr.f32.gmra.mxu0 %v3703
  %v3705 = vpop.f32.mrf.mxu0
  %v3706 = vadd.f32 %v3615, %v3705
  %v3707 = vpop.f32.mrf.mxu0
  %3708 = vdwg.mxu0
  %3709 = vmatprep.subr.mxu0 0.0
  %v3710 = vand.u32 %v167, 4294901760
  %v3711 = vsub.f32 %v167, %v3710
  %v3712 = vand.u32 %v3711, 4294901760
  %v3713 = vsub.f32 %v3711, %v3712
  %v3714 = vand.u32 %v3713, 4294901760
  %3715 = vmatpush1.msra.mxu0 %v3714
  %3716 = vmatprep.subr.mxu0 0.0
  %v3717 = vand.u32 %v166, 4294901760
  %v3718 = vsub.f32 %v166, %v3717
  %v3719 = vand.u32 %v3718, 4294901760
  %v3720 = vsub.f32 %v3718, %v3719
  %v3721 = vand.u32 %v3720, 4294901760
  %3722 = vmatpush1.msra.mxu0 %v3721
  %3723 = vmatprep.subr.mxu0 0.0
  %v3724 = vand.u32 %v165, 4294901760
  %v3725 = vsub.f32 %v165, %v3724
  %v3726 = vand.u32 %v3725, 4294901760
  %v3727 = vsub.f32 %v3725, %v3726
  %v3728 = vand.u32 %v3727, 4294901760
  %3729 = vmatpush1.msra.mxu0 %v3728
  %3730 = vmatprep.subr.mxu0 0.0
  %v3731 = vand.u32 %v164, 4294901760
  %v3732 = vsub.f32 %v164, %v3731
  %v3733 = vand.u32 %v3732, 4294901760
  %v3734 = vsub.f32 %v3732, %v3733
  %v3735 = vand.u32 %v3734, 4294901760
  %3736 = vmatpush1.msra.mxu0 %v3735
  %3737 = vmatprep.subr.mxu0 0.0
  %v3738 = vand.u32 %v163, 4294901760
  %v3739 = vsub.f32 %v163, %v3738
  %v3740 = vand.u32 %v3739, 4294901760
  %v3741 = vsub.f32 %v3739, %v3740
  %v3742 = vand.u32 %v3741, 4294901760
  %3743 = vmatpush1.msra.mxu0 %v3742
  %3744 = vmatprep.subr.mxu0 0.0
  %v3745 = vand.u32 %v162, 4294901760
  %v3746 = vsub.f32 %v162, %v3745
  %v3747 = vand.u32 %v3746, 4294901760
  %v3748 = vsub.f32 %v3746, %v3747
  %v3749 = vand.u32 %v3748, 4294901760
  %3750 = vmatpush1.msra.mxu0 %v3749
  %3751 = vmatprep.subr.mxu0 0.0
  %v3752 = vand.u32 %v161, 4294901760
  %v3753 = vsub.f32 %v161, %v3752
  %v3754 = vand.u32 %v3753, 4294901760
  %v3755 = vsub.f32 %v3753, %v3754
  %v3756 = vand.u32 %v3755, 4294901760
  %3757 = vmatpush1.msra.mxu0 %v3756
  %3758 = vmatprep.subr.mxu0 0.0
  %v3759 = vand.u32 %v160, 4294901760
  %v3760 = vsub.f32 %v160, %v3759
  %v3761 = vand.u32 %v3760, 4294901760
  %v3762 = vsub.f32 %v3760, %v3761
  %v3763 = vand.u32 %v3762, 4294901760
  %3764 = vmatpush1.msra.mxu0 %v3763
  %3765 = vmatprep.subr.mxu0 0.0
  %v3766 = vand.u32 %v159, 4294901760
  %v3767 = vsub.f32 %v159, %v3766
  %v3768 = vand.u32 %v3767, 4294901760
  %v3769 = vsub.f32 %v3767, %v3768
  %v3770 = vand.u32 %v3769, 4294901760
  %3771 = vmatpush1.msra.mxu0 %v3770
  %3772 = vmatprep.subr.mxu0 0.0
  %v3773 = vand.u32 %v158, 4294901760
  %v3774 = vsub.f32 %v158, %v3773
  %v3775 = vand.u32 %v3774, 4294901760
  %v3776 = vsub.f32 %v3774, %v3775
  %v3777 = vand.u32 %v3776, 4294901760
  %3778 = vmatpush1.msra.mxu0 %v3777
  %3779 = vmatprep.subr.mxu0 0.0
  %v3780 = vand.u32 %v157, 4294901760
  %v3781 = vsub.f32 %v157, %v3780
  %v3782 = vand.u32 %v3781, 4294901760
  %v3783 = vsub.f32 %v3781, %v3782
  %v3784 = vand.u32 %v3783, 4294901760
  %3785 = vmatpush1.msra.mxu0 %v3784
  %3786 = vmatprep.subr.mxu0 0.0
  %v3787 = vand.u32 %v156, 4294901760
  %v3788 = vsub.f32 %v156, %v3787
  %v3789 = vand.u32 %v3788, 4294901760
  %v3790 = vsub.f32 %v3788, %v3789
  %v3791 = vand.u32 %v3790, 4294901760
  %3792 = vmatpush1.msra.mxu0 %v3791
  %3793 = vmatprep.subr.mxu0 0.0
  %v3794 = vand.u32 %v155, 4294901760
  %v3795 = vsub.f32 %v155, %v3794
  %v3796 = vand.u32 %v3795, 4294901760
  %v3797 = vsub.f32 %v3795, %v3796
  %v3798 = vand.u32 %v3797, 4294901760
  %3799 = vmatpush1.msra.mxu0 %v3798
  %3800 = vmatprep.subr.mxu0 0.0
  %v3801 = vand.u32 %v154, 4294901760
  %v3802 = vsub.f32 %v154, %v3801
  %v3803 = vand.u32 %v3802, 4294901760
  %v3804 = vsub.f32 %v3802, %v3803
  %v3805 = vand.u32 %v3804, 4294901760
  %3806 = vmatpush1.msra.mxu0 %v3805
  %3807 = vmatprep.subr.mxu0 0.0
  %v3808 = vand.u32 %v153, 4294901760
  %v3809 = vsub.f32 %v153, %v3808
  %v3810 = vand.u32 %v3809, 4294901760
  %v3811 = vsub.f32 %v3809, %v3810
  %v3812 = vand.u32 %v3811, 4294901760
  %3813 = vmatpush1.msra.mxu0 %v3812
  %3814 = vmatprep.subr.mxu0 0.0
  %v3815 = vand.u32 %v152, 4294901760
  %v3816 = vsub.f32 %v152, %v3815
  %v3817 = vand.u32 %v3816, 4294901760
  %v3818 = vsub.f32 %v3816, %v3817
  %v3819 = vand.u32 %v3818, 4294901760
  %3820 = vmatpush1.msra.mxu0 %v3819
  %3821 = vmatprep.subr.mxu0 0.0
  %3822 = vmatpush2.msra.mxu0 0.0
  %3823 = vmatprep.subr.mxu0 0.0
  %3824 = vmatpush2.msra.mxu0 0.0
  %3825 = vmatprep.subr.mxu0 0.0
  %3826 = vmatpush2.msra.mxu0 0.0
  %3827 = vmatprep.subr.mxu0 0.0
  %3828 = vmatpush2.msra.mxu0 0.0
  %3829 = vmatprep.subr.mxu0 0.0
  %3830 = vmatpush2.msra.mxu0 0.0
  %3831 = vmatprep.subr.mxu0 0.0
  %3832 = vmatpush2.msra.mxu0 0.0
  %3833 = vmatprep.subr.mxu0 0.0
  %3834 = vmatpush2.msra.mxu0 0.0
  %3835 = vmatprep.subr.mxu0 0.0
  %3836 = vmatpush2.msra.mxu0 0.0
  %3837 = vmatprep.subr.mxu0 0.0
  %3838 = vmatpush2.msra.mxu0 0.0
  %3839 = vmatprep.subr.mxu0 0.0
  %3840 = vmatpush2.msra.mxu0 0.0
  %3841 = vmatprep.subr.mxu0 0.0
  %3842 = vmatpush2.msra.mxu0 0.0
  %3843 = vmatprep.subr.mxu0 0.0
  %3844 = vmatpush2.msra.mxu0 0.0
  %3845 = vmatprep.subr.mxu0 0.0
  %3846 = vmatpush2.msra.mxu0 0.0
  %3847 = vmatprep.subr.mxu0 0.0
  %3848 = vmatpush2.msra.mxu0 0.0
  %3849 = vmatprep.subr.mxu0 0.0
  %3850 = vmatpush2.msra.mxu0 0.0
  %3851 = vmatprep.subr.mxu0 0.0
  %3852 = vmatpush2.msra.mxu0 0.0
  %3853 = vmatprep.mubr.f32.mxu0 0.0
  %v3854 = vand.u32 %v23, 4294901760
  %3855 = vmatmul.mubr.f32.gmra.mxu0 %v3854
  %v3856 = vpop.f32.mrf.mxu0
  %v3857 = vadd.f32 %v3706, %v3856
  %v3858 = vpop.f32.mrf.mxu0
  %3859 = vdwg.mxu0
  %3860 = vmatprep.subr.mxu0 0.0
  %v3861 = vand.u32 %v167, 4294901760
  %v3862 = vsub.f32 %v167, %v3861
  %3863 = vmatpush1.msra.mxu0 %v3862
  %3864 = vmatprep.subr.mxu0 0.0
  %v3865 = vand.u32 %v166, 4294901760
  %v3866 = vsub.f32 %v166, %v3865
  %3867 = vmatpush1.msra.mxu0 %v3866
  %3868 = vmatprep.subr.mxu0 0.0
  %v3869 = vand.u32 %v165, 4294901760
  %v3870 = vsub.f32 %v165, %v3869
  %3871 = vmatpush1.msra.mxu0 %v3870
  %3872 = vmatprep.subr.mxu0 0.0
  %v3873 = vand.u32 %v164, 4294901760
  %v3874 = vsub.f32 %v164, %v3873
  %3875 = vmatpush1.msra.mxu0 %v3874
  %3876 = vmatprep.subr.mxu0 0.0
  %v3877 = vand.u32 %v163, 4294901760
  %v3878 = vsub.f32 %v163, %v3877
  %3879 = vmatpush1.msra.mxu0 %v3878
  %3880 = vmatprep.subr.mxu0 0.0
  %v3881 = vand.u32 %v162, 4294901760
  %v3882 = vsub.f32 %v162, %v3881
  %3883 = vmatpush1.msra.mxu0 %v3882
  %3884 = vmatprep.subr.mxu0 0.0
  %v3885 = vand.u32 %v161, 4294901760
  %v3886 = vsub.f32 %v161, %v3885
  %3887 = vmatpush1.msra.mxu0 %v3886
  %3888 = vmatprep.subr.mxu0 0.0
  %v3889 = vand.u32 %v160, 4294901760
  %v3890 = vsub.f32 %v160, %v3889
  %3891 = vmatpush1.msra.mxu0 %v3890
  %3892 = vmatprep.subr.mxu0 0.0
  %v3893 = vand.u32 %v159, 4294901760
  %v3894 = vsub.f32 %v159, %v3893
  %3895 = vmatpush1.msra.mxu0 %v3894
  %3896 = vmatprep.subr.mxu0 0.0
  %v3897 = vand.u32 %v158, 4294901760
  %v3898 = vsub.f32 %v158, %v3897
  %3899 = vmatpush1.msra.mxu0 %v3898
  %3900 = vmatprep.subr.mxu0 0.0
  %v3901 = vand.u32 %v157, 4294901760
  %v3902 = vsub.f32 %v157, %v3901
  %3903 = vmatpush1.msra.mxu0 %v3902
  %3904 = vmatprep.subr.mxu0 0.0
  %v3905 = vand.u32 %v156, 4294901760
  %v3906 = vsub.f32 %v156, %v3905
  %3907 = vmatpush1.msra.mxu0 %v3906
  %3908 = vmatprep.subr.mxu0 0.0
  %v3909 = vand.u32 %v155, 4294901760
  %v3910 = vsub.f32 %v155, %v3909
  %3911 = vmatpush1.msra.mxu0 %v3910
  %3912 = vmatprep.subr.mxu0 0.0
  %v3913 = vand.u32 %v154, 4294901760
  %v3914 = vsub.f32 %v154, %v3913
  %3915 = vmatpush1.msra.mxu0 %v3914
  %3916 = vmatprep.subr.mxu0 0.0
  %v3917 = vand.u32 %v153, 4294901760
  %v3918 = vsub.f32 %v153, %v3917
  %3919 = vmatpush1.msra.mxu0 %v3918
  %3920 = vmatprep.subr.mxu0 0.0
  %v3921 = vand.u32 %v152, 4294901760
  %v3922 = vsub.f32 %v152, %v3921
  %3923 = vmatpush1.msra.mxu0 %v3922
  %3924 = vmatprep.subr.mxu0 0.0
  %3925 = vmatpush2.msra.mxu0 0.0
  %3926 = vmatprep.subr.mxu0 0.0
  %3927 = vmatpush2.msra.mxu0 0.0
  %3928 = vmatprep.subr.mxu0 0.0
  %3929 = vmatpush2.msra.mxu0 0.0
  %3930 = vmatprep.subr.mxu0 0.0
  %3931 = vmatpush2.msra.mxu0 0.0
  %3932 = vmatprep.subr.mxu0 0.0
  %3933 = vmatpush2.msra.mxu0 0.0
  %3934 = vmatprep.subr.mxu0 0.0
  %3935 = vmatpush2.msra.mxu0 0.0
  %3936 = vmatprep.subr.mxu0 0.0
  %3937 = vmatpush2.msra.mxu0 0.0
  %3938 = vmatprep.subr.mxu0 0.0
  %3939 = vmatpush2.msra.mxu0 0.0
  %3940 = vmatprep.subr.mxu0 0.0
  %3941 = vmatpush2.msra.mxu0 0.0
  %3942 = vmatprep.subr.mxu0 0.0
  %3943 = vmatpush2.msra.mxu0 0.0
  %3944 = vmatprep.subr.mxu0 0.0
  %3945 = vmatpush2.msra.mxu0 0.0
  %3946 = vmatprep.subr.mxu0 0.0
  %3947 = vmatpush2.msra.mxu0 0.0
  %3948 = vmatprep.subr.mxu0 0.0
  %3949 = vmatpush2.msra.mxu0 0.0
  %3950 = vmatprep.subr.mxu0 0.0
  %3951 = vmatpush2.msra.mxu0 0.0
  %3952 = vmatprep.subr.mxu0 0.0
  %3953 = vmatpush2.msra.mxu0 0.0
  %3954 = vmatprep.subr.mxu0 0.0
  %3955 = vmatpush2.msra.mxu0 0.0
  %3956 = vmatprep.mubr.f32.mxu0 0.0
  %v3957 = vand.u32 %v23, 4294901760
  %v3958 = vsub.f32 %v23, %v3957
  %3959 = vmatmul.mubr.f32.gmra.mxu0 %v3958
  %v3960 = vpop.f32.mrf.mxu0
  %v3961 = vadd.f32 %v3857, %v3960
  %v3962 = vpop.f32.mrf.mxu0
  %3963 = vdwg.mxu0
  %3964 = vmatprep.subr.mxu0 0.0
  %v3965 = vand.u32 %v167, 4294901760
  %3966 = vmatpush1.msra.mxu0 %v3965
  %3967 = vmatprep.subr.mxu0 0.0
  %v3968 = vand.u32 %v166, 4294901760
  %3969 = vmatpush1.msra.mxu0 %v3968
  %3970 = vmatprep.subr.mxu0 0.0
  %v3971 = vand.u32 %v165, 4294901760
  %3972 = vmatpush1.msra.mxu0 %v3971
  %3973 = vmatprep.subr.mxu0 0.0
  %v3974 = vand.u32 %v164, 4294901760
  %3975 = vmatpush1.msra.mxu0 %v3974
  %3976 = vmatprep.subr.mxu0 0.0
  %v3977 = vand.u32 %v163, 4294901760
  %3978 = vmatpush1.msra.mxu0 %v3977
  %3979 = vmatprep.subr.mxu0 0.0
  %v3980 = vand.u32 %v162, 4294901760
  %3981 = vmatpush1.msra.mxu0 %v3980
  %3982 = vmatprep.subr.mxu0 0.0
  %v3983 = vand.u32 %v161, 4294901760
  %3984 = vmatpush1.msra.mxu0 %v3983
  %3985 = vmatprep.subr.mxu0 0.0
  %v3986 = vand.u32 %v160, 4294901760
  %3987 = vmatpush1.msra.mxu0 %v3986
  %3988 = vmatprep.subr.mxu0 0.0
  %v3989 = vand.u32 %v159, 4294901760
  %3990 = vmatpush1.msra.mxu0 %v3989
  %3991 = vmatprep.subr.mxu0 0.0
  %v3992 = vand.u32 %v158, 4294901760
  %3993 = vmatpush1.msra.mxu0 %v3992
  %3994 = vmatprep.subr.mxu0 0.0
  %v3995 = vand.u32 %v157, 4294901760
  %3996 = vmatpush1.msra.mxu0 %v3995
  %3997 = vmatprep.subr.mxu0 0.0
  %v3998 = vand.u32 %v156, 4294901760
  %3999 = vmatpush1.msra.mxu0 %v3998
  %4000 = vmatprep.subr.mxu0 0.0
  %v4001 = vand.u32 %v155, 4294901760
  %4002 = vmatpush1.msra.mxu0 %v4001
  %4003 = vmatprep.subr.mxu0 0.0
  %v4004 = vand.u32 %v154, 4294901760
  %4005 = vmatpush1.msra.mxu0 %v4004
  %4006 = vmatprep.subr.mxu0 0.0
  %v4007 = vand.u32 %v153, 4294901760
  %4008 = vmatpush1.msra.mxu0 %v4007
  %4009 = vmatprep.subr.mxu0 0.0
  %v4010 = vand.u32 %v152, 4294901760
  %4011 = vmatpush1.msra.mxu0 %v4010
  %4012 = vmatprep.subr.mxu0 0.0
  %4013 = vmatpush2.msra.mxu0 0.0
  %4014 = vmatprep.subr.mxu0 0.0
  %4015 = vmatpush2.msra.mxu0 0.0
  %4016 = vmatprep.subr.mxu0 0.0
  %4017 = vmatpush2.msra.mxu0 0.0
  %4018 = vmatprep.subr.mxu0 0.0
  %4019 = vmatpush2.msra.mxu0 0.0
  %4020 = vmatprep.subr.mxu0 0.0
  %4021 = vmatpush2.msra.mxu0 0.0
  %4022 = vmatprep.subr.mxu0 0.0
  %4023 = vmatpush2.msra.mxu0 0.0
  %4024 = vmatprep.subr.mxu0 0.0
  %4025 = vmatpush2.msra.mxu0 0.0
  %4026 = vmatprep.subr.mxu0 0.0
  %4027 = vmatpush2.msra.mxu0 0.0
  %4028 = vmatprep.subr.mxu0 0.0
  %4029 = vmatpush2.msra.mxu0 0.0
  %4030 = vmatprep.subr.mxu0 0.0
  %4031 = vmatpush2.msra.mxu0 0.0
  %4032 = vmatprep.subr.mxu0 0.0
  %4033 = vmatpush2.msra.mxu0 0.0
  %4034 = vmatprep.subr.mxu0 0.0
  %4035 = vmatpush2.msra.mxu0 0.0
  %4036 = vmatprep.subr.mxu0 0.0
  %4037 = vmatpush2.msra.mxu0 0.0
  %4038 = vmatprep.subr.mxu0 0.0
  %4039 = vmatpush2.msra.mxu0 0.0
  %4040 = vmatprep.subr.mxu0 0.0
  %4041 = vmatpush2.msra.mxu0 0.0
  %4042 = vmatprep.subr.mxu0 0.0
  %4043 = vmatpush2.msra.mxu0 0.0
  %4044 = vmatprep.mubr.f32.mxu0 0.0
  %v4045 = vand.u32 %v23, 4294901760
  %v4046 = vsub.f32 %v23, %v4045
  %v4047 = vand.u32 %v4046, 4294901760
  %4048 = vmatmul.mubr.f32.gmra.mxu0 %v4047
  %v4049 = vpop.f32.mrf.mxu0
  %v4050 = vadd.f32 %v3961, %v4049
  %v4051 = vpop.f32.mrf.mxu0
  %4052 = vdwg.mxu0
  %4053 = vmatprep.subr.mxu0 0.0
  %v4054 = vand.u32 %v167, 4294901760
  %v4055 = vsub.f32 %v167, %v4054
  %v4056 = vand.u32 %v4055, 4294901760
  %4057 = vmatpush1.msra.mxu0 %v4056
  %4058 = vmatprep.subr.mxu0 0.0
  %v4059 = vand.u32 %v166, 4294901760
  %v4060 = vsub.f32 %v166, %v4059
  %v4061 = vand.u32 %v4060, 4294901760
  %4062 = vmatpush1.msra.mxu0 %v4061
  %4063 = vmatprep.subr.mxu0 0.0
  %v4064 = vand.u32 %v165, 4294901760
  %v4065 = vsub.f32 %v165, %v4064
  %v4066 = vand.u32 %v4065, 4294901760
  %4067 = vmatpush1.msra.mxu0 %v4066
  %4068 = vmatprep.subr.mxu0 0.0
  %v4069 = vand.u32 %v164, 4294901760
  %v4070 = vsub.f32 %v164, %v4069
  %v4071 = vand.u32 %v4070, 4294901760
  %4072 = vmatpush1.msra.mxu0 %v4071
  %4073 = vmatprep.subr.mxu0 0.0
  %v4074 = vand.u32 %v163, 4294901760
  %v4075 = vsub.f32 %v163, %v4074
  %v4076 = vand.u32 %v4075, 4294901760
  %4077 = vmatpush1.msra.mxu0 %v4076
  %4078 = vmatprep.subr.mxu0 0.0
  %v4079 = vand.u32 %v162, 4294901760
  %v4080 = vsub.f32 %v162, %v4079
  %v4081 = vand.u32 %v4080, 4294901760
  %4082 = vmatpush1.msra.mxu0 %v4081
  %4083 = vmatprep.subr.mxu0 0.0
  %v4084 = vand.u32 %v161, 4294901760
  %v4085 = vsub.f32 %v161, %v4084
  %v4086 = vand.u32 %v4085, 4294901760
  %4087 = vmatpush1.msra.mxu0 %v4086
  %4088 = vmatprep.subr.mxu0 0.0
  %v4089 = vand.u32 %v160, 4294901760
  %v4090 = vsub.f32 %v160, %v4089
  %v4091 = vand.u32 %v4090, 4294901760
  %4092 = vmatpush1.msra.mxu0 %v4091
  %4093 = vmatprep.subr.mxu0 0.0
  %v4094 = vand.u32 %v159, 4294901760
  %v4095 = vsub.f32 %v159, %v4094
  %v4096 = vand.u32 %v4095, 4294901760
  %4097 = vmatpush1.msra.mxu0 %v4096
  %4098 = vmatprep.subr.mxu0 0.0
  %v4099 = vand.u32 %v158, 4294901760
  %v4100 = vsub.f32 %v158, %v4099
  %v4101 = vand.u32 %v4100, 4294901760
  %4102 = vmatpush1.msra.mxu0 %v4101
  %4103 = vmatprep.subr.mxu0 0.0
  %v4104 = vand.u32 %v157, 4294901760
  %v4105 = vsub.f32 %v157, %v4104
  %v4106 = vand.u32 %v4105, 4294901760
  %4107 = vmatpush1.msra.mxu0 %v4106
  %4108 = vmatprep.subr.mxu0 0.0
  %v4109 = vand.u32 %v156, 4294901760
  %v4110 = vsub.f32 %v156, %v4109
  %v4111 = vand.u32 %v4110, 4294901760
  %4112 = vmatpush1.msra.mxu0 %v4111
  %4113 = vmatprep.subr.mxu0 0.0
  %v4114 = vand.u32 %v155, 4294901760
  %v4115 = vsub.f32 %v155, %v4114
  %v4116 = vand.u32 %v4115, 4294901760
  %4117 = vmatpush1.msra.mxu0 %v4116
  %4118 = vmatprep.subr.mxu0 0.0
  %v4119 = vand.u32 %v154, 4294901760
  %v4120 = vsub.f32 %v154, %v4119
  %v4121 = vand.u32 %v4120, 4294901760
  %4122 = vmatpush1.msra.mxu0 %v4121
  %4123 = vmatprep.subr.mxu0 0.0
  %v4124 = vand.u32 %v153, 4294901760
  %v4125 = vsub.f32 %v153, %v4124
  %v4126 = vand.u32 %v4125, 4294901760
  %4127 = vmatpush1.msra.mxu0 %v4126
  %4128 = vmatprep.subr.mxu0 0.0
  %v4129 = vand.u32 %v152, 4294901760
  %v4130 = vsub.f32 %v152, %v4129
  %v4131 = vand.u32 %v4130, 4294901760
  %4132 = vmatpush1.msra.mxu0 %v4131
  %4133 = vmatprep.subr.mxu0 0.0
  %4134 = vmatpush2.msra.mxu0 0.0
  %4135 = vmatprep.subr.mxu0 0.0
  %4136 = vmatpush2.msra.mxu0 0.0
  %4137 = vmatprep.subr.mxu0 0.0
  %4138 = vmatpush2.msra.mxu0 0.0
  %4139 = vmatprep.subr.mxu0 0.0
  %4140 = vmatpush2.msra.mxu0 0.0
  %4141 = vmatprep.subr.mxu0 0.0
  %4142 = vmatpush2.msra.mxu0 0.0
  %4143 = vmatprep.subr.mxu0 0.0
  %4144 = vmatpush2.msra.mxu0 0.0
  %4145 = vmatprep.subr.mxu0 0.0
  %4146 = vmatpush2.msra.mxu0 0.0
  %4147 = vmatprep.subr.mxu0 0.0
  %4148 = vmatpush2.msra.mxu0 0.0
  %4149 = vmatprep.subr.mxu0 0.0
  %4150 = vmatpush2.msra.mxu0 0.0
  %4151 = vmatprep.subr.mxu0 0.0
  %4152 = vmatpush2.msra.mxu0 0.0
  %4153 = vmatprep.subr.mxu0 0.0
  %4154 = vmatpush2.msra.mxu0 0.0
  %4155 = vmatprep.subr.mxu0 0.0
  %4156 = vmatpush2.msra.mxu0 0.0
  %4157 = vmatprep.subr.mxu0 0.0
  %4158 = vmatpush2.msra.mxu0 0.0
  %4159 = vmatprep.subr.mxu0 0.0
  %4160 = vmatpush2.msra.mxu0 0.0
  %4161 = vmatprep.subr.mxu0 0.0
  %4162 = vmatpush2.msra.mxu0 0.0
  %4163 = vmatprep.subr.mxu0 0.0
  %4164 = vmatpush2.msra.mxu0 0.0
  %4165 = vmatprep.mubr.f32.mxu0 0.0
  %v4166 = vand.u32 %v23, 4294901760
  %4167 = vmatmul.mubr.f32.gmra.mxu0 %v4166
  %v4168 = vpop.f32.mrf.mxu0
  %v4169 = vadd.f32 %v4050, %v4168
  %v4170 = vpop.f32.mrf.mxu0
  %4171 = vdwg.mxu0
  %4172 = vmatprep.subr.mxu0 0.0
  %v4173 = vand.u32 %v167, 4294901760
  %4174 = vmatpush1.msra.mxu0 %v4173
  %4175 = vmatprep.subr.mxu0 0.0
  %v4176 = vand.u32 %v166, 4294901760
  %4177 = vmatpush1.msra.mxu0 %v4176
  %4178 = vmatprep.subr.mxu0 0.0
  %v4179 = vand.u32 %v165, 4294901760
  %4180 = vmatpush1.msra.mxu0 %v4179
  %4181 = vmatprep.subr.mxu0 0.0
  %v4182 = vand.u32 %v164, 4294901760
  %4183 = vmatpush1.msra.mxu0 %v4182
  %4184 = vmatprep.subr.mxu0 0.0
  %v4185 = vand.u32 %v163, 4294901760
  %4186 = vmatpush1.msra.mxu0 %v4185
  %4187 = vmatprep.subr.mxu0 0.0
  %v4188 = vand.u32 %v162, 4294901760
  %4189 = vmatpush1.msra.mxu0 %v4188
  %4190 = vmatprep.subr.mxu0 0.0
  %v4191 = vand.u32 %v161, 4294901760
  %4192 = vmatpush1.msra.mxu0 %v4191
  %4193 = vmatprep.subr.mxu0 0.0
  %v4194 = vand.u32 %v160, 4294901760
  %4195 = vmatpush1.msra.mxu0 %v4194
  %4196 = vmatprep.subr.mxu0 0.0
  %v4197 = vand.u32 %v159, 4294901760
  %4198 = vmatpush1.msra.mxu0 %v4197
  %4199 = vmatprep.subr.mxu0 0.0
  %v4200 = vand.u32 %v158, 4294901760
  %4201 = vmatpush1.msra.mxu0 %v4200
  %4202 = vmatprep.subr.mxu0 0.0
  %v4203 = vand.u32 %v157, 4294901760
  %4204 = vmatpush1.msra.mxu0 %v4203
  %4205 = vmatprep.subr.mxu0 0.0
  %v4206 = vand.u32 %v156, 4294901760
  %4207 = vmatpush1.msra.mxu0 %v4206
  %4208 = vmatprep.subr.mxu0 0.0
  %v4209 = vand.u32 %v155, 4294901760
  %4210 = vmatpush1.msra.mxu0 %v4209
  %4211 = vmatprep.subr.mxu0 0.0
  %v4212 = vand.u32 %v154, 4294901760
  %4213 = vmatpush1.msra.mxu0 %v4212
  %4214 = vmatprep.subr.mxu0 0.0
  %v4215 = vand.u32 %v153, 4294901760
  %4216 = vmatpush1.msra.mxu0 %v4215
  %4217 = vmatprep.subr.mxu0 0.0
  %v4218 = vand.u32 %v152, 4294901760
  %4219 = vmatpush1.msra.mxu0 %v4218
  %4220 = vmatprep.subr.mxu0 0.0
  %4221 = vmatpush2.msra.mxu0 0.0
  %4222 = vmatprep.subr.mxu0 0.0
  %4223 = vmatpush2.msra.mxu0 0.0
  %4224 = vmatprep.subr.mxu0 0.0
  %4225 = vmatpush2.msra.mxu0 0.0
  %4226 = vmatprep.subr.mxu0 0.0
  %4227 = vmatpush2.msra.mxu0 0.0
  %4228 = vmatprep.subr.mxu0 0.0
  %4229 = vmatpush2.msra.mxu0 0.0
  %4230 = vmatprep.subr.mxu0 0.0
  %4231 = vmatpush2.msra.mxu0 0.0
  %4232 = vmatprep.subr.mxu0 0.0
  %4233 = vmatpush2.msra.mxu0 0.0
  %4234 = vmatprep.subr.mxu0 0.0
  %4235 = vmatpush2.msra.mxu0 0.0
  %4236 = vmatprep.subr.mxu0 0.0
  %4237 = vmatpush2.msra.mxu0 0.0
  %4238 = vmatprep.subr.mxu0 0.0
  %4239 = vmatpush2.msra.mxu0 0.0
  %4240 = vmatprep.subr.mxu0 0.0
  %4241 = vmatpush2.msra.mxu0 0.0
  %4242 = vmatprep.subr.mxu0 0.0
  %4243 = vmatpush2.msra.mxu0 0.0
  %4244 = vmatprep.subr.mxu0 0.0
  %4245 = vmatpush2.msra.mxu0 0.0
  %4246 = vmatprep.subr.mxu0 0.0
  %4247 = vmatpush2.msra.mxu0 0.0
  %4248 = vmatprep.subr.mxu0 0.0
  %4249 = vmatpush2.msra.mxu0 0.0
  %4250 = vmatprep.subr.mxu0 0.0
  %4251 = vmatpush2.msra.mxu0 0.0
  %4252 = vmatprep.mubr.f32.mxu0 0.0
  %v4253 = vand.u32 %v23, 4294901760
  %4254 = vmatmul.mubr.f32.gmra.mxu0 %v4253
  %v4255 = vpop.f32.mrf.mxu0
  %v4256 = vadd.f32 %v4169, %v4255
  %v4257 = vpop.f32.mrf.mxu0
  %4258 = vdwg.mxu0
  %v4259 = vsub.f32 0.0, %v4256
  %v4260 = vmul.f32 %v4259, 1.442695
  %v4261 = vpow.pop %v4260
  %v4262 = vadd.f32 %v4261, 1.0
  %v4263 = vrcp.pop %v4262
  %4264 = vst [vmem:[%s3] sm:$0xff] %v4263
  // Predicated region
  $region14: #{snc_forward.1} parent=0 // pred_check
    _
  $region15: #{snc_forward.1} parent=0 // pred_check_branch
    %4266 = sbr.rel (0) target = $region17
  $region16: #{snc_forward.1} parent=0 // pred_region
    _
  $region17: #{snc_forward.1} parent=0 // pred_fallthru
    _
  // Predicated region
  $region18: #{snc_forward.1} parent=0 // pred_check
    _
  $region19: #{snc_forward.1} parent=0 // pred_check_branch
    %4268 = sbr.rel (0) target = $region21
  $region20: #{snc_forward.1} parent=0 // pred_region
    _
  $region21: #{snc_forward.1} parent=0 // pred_fallthru
    _

</llo_original>
